<compile_context>
chip_gen: v7x
topology: tpu7x:2x2x1
jax: 0.10.0
libtpu: 0.0.40
codegen_flags: <defaults>
</compile_context>

<pallas_src>
import math

import jax
import jax.numpy as jnp
from jax.experimental import pallas as pl
from jax.experimental.pallas import tpu as pltpu

# ---------------- model hyper-parameters (small, forward-consistent) --------
BATCH = 8
INPUT_DIM = 32
TIME_DIM = 128          # default in the PyTorch module
HIDDEN_DIM = 256        # scaled-down hidden_dim (PyTorch default is 512)
HEAD_DIM = HIDDEN_DIM // 2
N_RES_BLOCKS = 4
LN_EPS = 1e-5
OUT_PAD = 128           # lane-dense output slab width (== HEAD_DIM here)
MAX_BATCH_TILE = 128


def _round_up(v, m):
    return ((v + m - 1) // m) * m


# ---------------- math helpers (shared by kernel and references) -------------
def _gelu(x):
    # exact GELU (erf form) — matches PyTorch nn.GELU() default
    return 0.5 * x * (1.0 + jax.lax.erf(x * (1.0 / math.sqrt(2.0))))


def _norm(x):
    # LayerNorm normalization only (affine handled by fold / explicit mul+add)
    mu = jnp.mean(x, axis=-1, keepdims=True)
    xc = x - mu
    var = jnp.mean(xc * xc, axis=-1, keepdims=True)
    return xc * jax.lax.rsqrt(var + LN_EPS)


def _bf16_dot(x, w):
    # bf16 MXU matmul with f32 accumulation (w is already bf16)
    return jnp.dot(x.astype(jnp.bfloat16), w, preferred_element_type=jnp.float32)


# ---------------- the Pallas kernel ------------------------------------------
def denoise_kernel(x_ref, t_ref, emb_ref, wt1_ref, win_ref, fixw_ref, fixv_ref,
                   resw1_ref, resw2_ref, resv_ref, wo1_ref, wo2_ref, headv_ref,
                   out_ref, h_scr, te_scr):
    r = pl.program_id(1)

    # ---- prologue (once per batch tile): time MLP + input layer ----
    @pl.when(r == 0)
    def _prologue():
        fv = fixv_ref[...]                                           # (6, H) f32
        # sinusoidal time embedding: sin(t*f + phase), phase = [0 | pi/2]
        temb0 = jnp.sin(t_ref[...] * emb_ref[0:1, :] + emb_ref[1:2, :])
        # time MLP (LN affines folded into the following Linear)
        y = _norm(_gelu(_bf16_dot(temb0, wt1_ref[...]) + fv[0:1, :]))
        te_scr[...] = _norm(_gelu(_bf16_dot(y, fixw_ref[0]) + fv[1:2, :]))
        # input layer (LN affine kept: feeds the residual adds)
        h = _norm(_gelu(_bf16_dot(x_ref[...], win_ref[...]) + fv[2:3, :]))
        h_scr[...] = h * fv[3:4, :] + fv[4:5, :]

    # ---- residual block r (weights streamed per grid step) ----
    rv = resv_ref[0]                                                 # (4, H) f32
    h = h_scr[...]
    a = _norm(_gelu(_bf16_dot(h, resw1_ref[0]) + rv[0:1, :]))        # LN1 affine folded
    hr = _norm(_gelu(_bf16_dot(a, resw2_ref[0]) + rv[1:2, :]))
    h_scr[...] = h + (hr * rv[2:3, :] + rv[3:4, :])                  # LN2 affine kept

    # ---- epilogue (last residual step): fusion + output head ----
    @pl.when(r == pl.num_programs(1) - 1)
    def _epilogue():
        fv = fixv_ref[...]
        hv = headv_ref[...]                                          # (2, HEAD) f32
        # fusion of [h, t_emb]: split matmul, no lane concat / relayout
        y = (_bf16_dot(h_scr[...], fixw_ref[1]) +
             _bf16_dot(te_scr[...], fixw_ref[2]) + fv[5:6, :])
        y = _norm(_gelu(y))                                          # fusion LN (affine folded)
        o = _norm(_gelu(_bf16_dot(y, wo1_ref[...]) + hv[0:1, :]))    # head LN (affine folded)
        out = _bf16_dot(o, wo2_ref[...]) + hv[1:2, :]                # lane-dense padded head
        out_ref[...] = out.astype(out_ref.dtype)


# ---------------- raw (PyTorch-style, f32) parameters ------------------------
def make_params(key):
    H, H2, T, IN, N = HIDDEN_DIM, HEAD_DIM, TIME_DIM, INPUT_DIM, N_RES_BLOCKS
    ks = iter(jax.random.split(key, 40))

    def w(*s): return 0.02 * jax.random.normal(next(ks), s, jnp.float32)
    def b(*s): return 0.02 * jax.random.normal(next(ks), s, jnp.float32)
    def g(*s): return 1.0 + 0.1 * jax.random.normal(next(ks), s, jnp.float32)

    return dict(
        wt1=w(T, H), bt1=b(H), gt1=g(H), bet1=b(H),
        wt2=w(H, H), bt2=b(H), gt2=g(H), bet2=b(H),
        win=w(IN, H), bin=b(H), gin=g(H), bein=b(H),
        rw1=w(N, H, H), rb1=b(N, H), rg1=g(N, H), rbe1=b(N, H),
        rw2=w(N, H, H), rb2=b(N, H), rg2=g(N, H), rbe2=b(N, H),
        wf=w(2 * H, H), bf=b(H), gf=g(H), bef=b(H),
        wo1=w(H, H2), bo1=b(H2), go1=g(H2), beo1=b(H2),
        wo2=w(H2, IN), bo2=b(IN),
    )


# ---------------- offline preparation: fold, split, pad, pack, cast ----------
def prepare_params(p):
    H, H2, IN = HIDDEN_DIM, HEAD_DIM, INPUT_DIM
    assert H2 == OUT_PAD, "head_v stacking assumes hidden//2 == OUT_PAD"
    bf16 = jnp.bfloat16

    def fold_w(gamma, w):        # (gamma*norm+beta) @ W  ==  norm @ (diag(gamma)@W) + beta@W
        return gamma[:, None] * w

    def fold_b(beta, w, bias):
        return bias + beta @ w

    # folds: LN affines that feed straight into a Linear
    wt2f = fold_w(p["gt1"], p["wt2"]); bt2f = fold_b(p["bet1"], p["wt2"], p["bt2"])
    wf_h = p["wf"][:H]
    wf_t = fold_w(p["gt2"], p["wf"][H:]); bff = fold_b(p["bet2"], p["wf"][H:], p["bf"])
    rw2f = p["rg1"][:, :, None] * p["rw2"]
    rb2f = p["rb2"] + jnp.einsum("nh,nhk->nk", p["rbe1"], p["rw2"])
    wo1f = fold_w(p["gf"], p["wo1"]); bo1f = fold_b(p["bef"], p["wo1"], p["bo1"])
    wo2f = fold_w(p["go1"], p["wo2"]); bo2f = fold_b(p["beo1"], p["wo2"], p["bo2"])

    # lane-dense output head (zero-padded to OUT_PAD lanes)
    wo2p = jnp.zeros((H2, OUT_PAD), jnp.float32).at[:, :IN].set(wo2f)
    bo2p = jnp.zeros((OUT_PAD,), jnp.float32).at[:IN].set(bo2f)

    # sinusoidal-embedding constants: sin(t*f + phase), phase = [0 | pi/2]
    half = TIME_DIM // 2
    scale = math.log(10000.0) / (half - 1)
    freqs = jnp.exp(-scale * jnp.arange(half, dtype=jnp.float32))
    freqs2 = jnp.concatenate([freqs, freqs])
    phase = jnp.concatenate([jnp.zeros((half,), jnp.float32),
                             jnp.full((half,), math.pi / 2, jnp.float32)])

    return dict(
        emb_c=jnp.stack([freqs2, phase]),                                # (2, T)  f32
        wt1=p["wt1"].astype(bf16),                                       # (T, H)  bf16
        win=p["win"].astype(bf16),                                       # (IN, H) bf16
        fix_w=jnp.stack([wt2f, wf_h, wf_t]).astype(bf16),                # (3, H, H) bf16
        fix_v=jnp.stack([p["bt1"], bt2f, p["bin"], p["gin"],
                         p["bein"], bff]),                               # (6, H)  f32
        res_w1=p["rw1"].astype(bf16),                                    # (N, H, H) bf16
        res_w2=rw2f.astype(bf16),                                        # (N, H, H) bf16
        res_v=jnp.stack([p["rb1"], rb2f, p["rg2"], p["rbe2"]], axis=1),  # (N, 4, H) f32
        wo1=wo1f.astype(bf16),                                           # (H, H2) bf16
        wo2=wo2p.astype(bf16),                                           # (H2, OUT_PAD) bf16
        head_v=jnp.stack([bo1f, bo2p]),                                  # (2, H2) f32
    )


# ---------------- wrapper ----------------------------------------------------
@jax.jit
def denoise_forward(x, timestep, prep):
    B = x.shape[0]
    bt = min(MAX_BATCH_TILE, _round_up(max(B, 16), 16))   # batch tile (>=16 rows)
    b_pad = _round_up(B, bt)
    t2d = timestep.astype(jnp.float32).reshape(-1, 1)
    if b_pad != B:
        x = jnp.pad(x, ((0, b_pad - B), (0, 0)))
        t2d = jnp.pad(t2d, ((0, b_pad - B), (0, 0)))

    H, H2, T, IN, N = HIDDEN_DIM, HEAD_DIM, TIME_DIM, INPUT_DIM, N_RES_BLOCKS

    out = pl.pallas_call(
        denoise_kernel,
        out_shape=jax.ShapeDtypeStruct((b_pad, OUT_PAD), jnp.float32),
        grid_spec=pltpu.PrefetchScalarGridSpec(
            num_scalar_prefetch=0,
            grid=(b_pad // bt, N),
            in_specs=[
                pl.BlockSpec((bt, IN), lambda b, r: (b, 0)),         # x
                pl.BlockSpec((bt, 1), lambda b, r: (b, 0)),          # timestep
                pl.BlockSpec((2, T), lambda b, r: (0, 0)),           # emb consts (freq, phase)
                pl.BlockSpec((T, H), lambda b, r: (0, 0)),           # wt1
                pl.BlockSpec((IN, H), lambda b, r: (0, 0)),          # win
                pl.BlockSpec((3, H, H), lambda b, r: (0, 0, 0)),     # [wt2', wf_h, wf_t']
                pl.BlockSpec((6, H), lambda b, r: (0, 0)),           # stacked fixed vectors
                pl.BlockSpec((1, H, H), lambda b, r: (r, 0, 0)),     # res_w1[r]  (streamed)
                pl.BlockSpec((1, H, H), lambda b, r: (r, 0, 0)),     # res_w2'[r] (streamed)
                pl.BlockSpec((1, 4, H), lambda b, r: (r, 0, 0)),     # res vectors[r]
                pl.BlockSpec((H, H2), lambda b, r: (0, 0)),          # wo1'
                pl.BlockSpec((H2, OUT_PAD), lambda b, r: (0, 0)),    # wo2' (lane-padded)
                pl.BlockSpec((2, H2), lambda b, r: (0, 0)),          # [bo1', bo2']
            ],
            out_specs=pl.BlockSpec((bt, OUT_PAD), lambda b, r: (b, 0)),
            scratch_shapes=[pltpu.VMEM((bt, H), jnp.float32),        # h carried across r
                            pltpu.VMEM((bt, H), jnp.float32)],       # t_emb carried across r
        ),
        compiler_params=pltpu.CompilerParams(
            dimension_semantics=("parallel", "arbitrary"),
            vmem_limit_bytes=16 << 20),
    )(x, t2d, prep["emb_c"], prep["wt1"], prep["win"], prep["fix_w"],
      prep["fix_v"], prep["res_w1"], prep["res_w2"], prep["res_v"],
      prep["wo1"], prep["wo2"], prep["head_v"])

    return out[:B, :INPUT_DIM]


# ---------------- references -------------------------------------------------
def denoise_reference_f32(x, timestep, p):
    """PyTorch-equivalent forward in plain f32 JAX (un-folded params)."""
    half = TIME_DIM // 2
    scale = math.log(10000.0) / (half - 1)
    freqs = jnp.exp(-scale * jnp.arange(half, dtype=jnp.float32))
    a = timestep[:, None].astype(jnp.float32) * freqs[None, :]
    t_emb = jnp.concatenate([jnp.sin(a), jnp.cos(a)], axis=-1)

    def ln(v, g, b):
        mu = jnp.mean(v, -1, keepdims=True)
        var = jnp.mean((v - mu) ** 2, -1, keepdims=True)
        return (v - mu) * jax.lax.rsqrt(var + LN_EPS) * g + b

    def lgl(v, w, bias, g, be):
        return ln(_gelu(v @ w + bias), g, be)

    t_emb = lgl(t_emb, p["wt1"], p["bt1"], p["gt1"], p["bet1"])
    t_emb = lgl(t_emb, p["wt2"], p["bt2"], p["gt2"], p["bet2"])
    h = lgl(x, p["win"], p["bin"], p["gin"], p["bein"])
    for i in range(N_RES_BLOCKS):
        hr = lgl(h, p["rw1"][i], p["rb1"][i], p["rg1"][i], p["rbe1"][i])
        hr = lgl(hr, p["rw2"][i], p["rb2"][i], p["rg2"][i], p["rbe2"][i])
        h = h + hr
    hc = jnp.concatenate([h, t_emb], axis=-1)
    hf = lgl(hc, p["wf"], p["bf"], p["gf"], p["bef"])
    o = lgl(hf, p["wo1"], p["bo1"], p["go1"], p["beo1"])
    return o @ p["wo2"] + p["bo2"]


def denoise_reference_prepared(x, timestep, prep):
    """Pure-JAX mirror of the exact kernel math (folded bf16 params)."""
    t2d = timestep.astype(jnp.float32).reshape(-1, 1)
    fv = prep["fix_v"]
    temb0 = jnp.sin(t2d * prep["emb_c"][0:1] + prep["emb_c"][1:2])
    y = _norm(_gelu(_bf16_dot(temb0, prep["wt1"]) + fv[0:1]))
    te = _norm(_gelu(_bf16_dot(y, prep["fix_w"][0]) + fv[1:2]))
    h = _norm(_gelu(_bf16_dot(x, prep["win"]) + fv[2:3])) * fv[3:4] + fv[4:5]
    for i in range(N_RES_BLOCKS):
        rv = prep["res_v"][i]
        a = _norm(_gelu(_bf16_dot(h, prep["res_w1"][i]) + rv[0:1]))
        hr = _norm(_gelu(_bf16_dot(a, prep["res_w2"][i]) + rv[1:2]))
        h = h + (hr * rv[2:3] + rv[3:4])
    y = _norm(_gelu(_bf16_dot(h, prep["fix_w"][1]) +
                    _bf16_dot(te, prep["fix_w"][2]) + fv[5:6]))
    o = _norm(_gelu(_bf16_dot(y, prep["wo1"]) + prep["head_v"][0:1]))
    out = _bf16_dot(o, prep["wo2"]) + prep["head_v"][1:2]
    return out[:, :INPUT_DIM]


# ---------------- main --------------------------------------------------------
if __name__ == "__main__":
    key = jax.random.PRNGKey(0)
    kx, kt, kp = jax.random.split(key, 3)

    x = jax.random.normal(kx, (BATCH, INPUT_DIM), dtype=jnp.float32)
    timestep = jax.random.randint(kt, (BATCH,), 0, 1000).astype(jnp.float32)

    raw = make_params(kp)
    prep = prepare_params(raw)

    out = jax.block_until_ready(denoise_forward(x, timestep, prep))
    assert out.shape == (BATCH, INPUT_DIM)
    assert bool(jnp.all(jnp.isfinite(out)))

    # exact-math check: same folded bf16 params, same op order as the kernel
    ref_bf = denoise_reference_prepared(x, timestep, prep)
    assert jnp.allclose(out, ref_bf, atol=2e-3, rtol=2e-3), "mismatch vs prepared-math reference"

    # semantic check vs un-folded f32 PyTorch-equivalent forward (bf16-weight tolerance)
    ref_f32 = denoise_reference_f32(x, timestep, raw)
    assert jnp.allclose(out, ref_f32, atol=5e-2, rtol=5e-2), "mismatch vs f32 reference"

    print("KERNEL_OK")
</pallas_src>

<mosaic_0001>
module attributes {stable_mosaic.version = 11 : i64} {
  func.func @denoise_kernel(%arg0: i32, %arg1: i32, %arg2: memref<16x32xf32, #tpu.memory_space<vmem>>, %arg3: memref<16x1xf32, #tpu.memory_space<vmem>>, %arg4: memref<2x128xf32, #tpu.memory_space<vmem>>, %arg5: memref<128x256xbf16, #tpu.memory_space<vmem>>, %arg6: memref<32x256xbf16, #tpu.memory_space<vmem>>, %arg7: memref<3x256x256xbf16, #tpu.memory_space<vmem>>, %arg8: memref<6x256xf32, #tpu.memory_space<vmem>>, %arg9: memref<1x256x256xbf16, #tpu.memory_space<vmem>>, %arg10: memref<1x256x256xbf16, #tpu.memory_space<vmem>>, %arg11: memref<1x4x256xf32, #tpu.memory_space<vmem>>, %arg12: memref<256x128xbf16, #tpu.memory_space<vmem>>, %arg13: memref<128x128xbf16, #tpu.memory_space<vmem>>, %arg14: memref<2x128xf32, #tpu.memory_space<vmem>>, %arg15: memref<16x128xf32, #tpu.memory_space<vmem>>, %arg16: memref<16x256xf32, #tpu.memory_space<vmem>>, %arg17: memref<16x256xf32, #tpu.memory_space<vmem>>) attributes {dimension_semantics = [#tpu.dimension_semantics<parallel>, #tpu.dimension_semantics<arbitrary>], iteration_bounds = array<i64: 1, 4>, scalar_prefetch = 0 : i64, scratch_operands = 2 : i64, tpu.core_type = #tpu.core_type<tc>, window_params = [{transform_indices = @transform_0, window_bounds = array<i64: 16, 32>}, {transform_indices = @transform_1, window_bounds = array<i64: 16, 1>}, {pipeline_mode = #tpu.pipeline_mode<synchronous>, transform_indices = @transform_2, window_bounds = array<i64: 2, 128>}, {pipeline_mode = #tpu.pipeline_mode<synchronous>, transform_indices = @transform_3, window_bounds = array<i64: 128, 256>}, {pipeline_mode = #tpu.pipeline_mode<synchronous>, transform_indices = @transform_4, window_bounds = array<i64: 32, 256>}, {pipeline_mode = #tpu.pipeline_mode<synchronous>, transform_indices = @transform_5, window_bounds = array<i64: 3, 256, 256>}, {pipeline_mode = #tpu.pipeline_mode<synchronous>, transform_indices = @transform_6, window_bounds = array<i64: 6, 256>}, {transform_indices = @transform_7, window_bounds = array<i64: 1, 256, 256>}, {transform_indices = @transform_8, window_bounds = array<i64: 1, 256, 256>}, {transform_indices = @transform_9, window_bounds = array<i64: 1, 4, 256>}, {pipeline_mode = #tpu.pipeline_mode<synchronous>, transform_indices = @transform_10, window_bounds = array<i64: 256, 128>}, {pipeline_mode = #tpu.pipeline_mode<synchronous>, transform_indices = @transform_11, window_bounds = array<i64: 128, 128>}, {pipeline_mode = #tpu.pipeline_mode<synchronous>, transform_indices = @transform_12, window_bounds = array<i64: 2, 128>}, {transform_indices = @transform_13, window_bounds = array<i64: 16, 128>}]} {
    %c0_i32 = arith.constant 0 : i32
    %0 = arith.cmpi eq, %arg1, %c0_i32 : i32
    %1 = arith.extui %0 : i1 to i32
    %c0_i32_0 = arith.constant 0 : i32
    %2 = arith.cmpi ne, %1, %c0_i32_0 : i32
    scf.if %2 {
      %c0_31 = arith.constant 0 : index
      %c0_32 = arith.constant 0 : index
      %79 = vector.load %arg8[%c0_31, %c0_32] : memref<6x256xf32, #tpu.memory_space<vmem>>, vector<6x256xf32>
      %c0_33 = arith.constant 0 : index
      %c0_34 = arith.constant 0 : index
      %80 = vector.load %arg3[%c0_33, %c0_34] : memref<16x1xf32, #tpu.memory_space<vmem>>, vector<16x1xf32>
      %c0_35 = arith.constant 0 : index
      %c0_36 = arith.constant 0 : index
      %81 = vector.load %arg4[%c0_35, %c0_36] : memref<2x128xf32, #tpu.memory_space<vmem>>, vector<1x128xf32>
      %82 = vector.broadcast %80 : vector<16x1xf32> to vector<16x128xf32>
      %83 = vector.broadcast %81 : vector<1x128xf32> to vector<16x128xf32>
      %84 = arith.mulf %82, %83 : vector<16x128xf32>
      %c1 = arith.constant 1 : index
      %c0_37 = arith.constant 0 : index
      %85 = vector.load %arg4[%c1, %c0_37] : memref<2x128xf32, #tpu.memory_space<vmem>>, vector<1x128xf32>
      %86 = vector.broadcast %85 : vector<1x128xf32> to vector<16x128xf32>
      %87 = arith.addf %84, %86 : vector<16x128xf32>
      %88 = math.sin %87 : vector<16x128xf32>
      %c0_38 = arith.constant 0 : index
      %c0_39 = arith.constant 0 : index
      %89 = vector.load %arg5[%c0_38, %c0_39] : memref<128x256xbf16, #tpu.memory_space<vmem>>, vector<128x256xbf16>
      %90 = arith.truncf %88 : vector<16x128xf32> to vector<16x128xbf16>
      %cst_40 = arith.constant dense<0.000000e+00> : vector<16x256xf32>
      %91 = tpu.matmul %90, %89, %cst_40 {dimension_numbers = #tpu.dot_dimension_numbers<[1], [0], [0], [1], [0, 0, 1, 1], [], []>} : vector<16x128xbf16>, vector<128x256xbf16>, vector<16x256xf32> -> vector<16x256xf32>
      %92 = vector.extract_strided_slice %79 {offsets = [0, 0], sizes = [1, 256], strides = [1, 1]} : vector<6x256xf32> to vector<1x256xf32>
      %93 = vector.broadcast %92 : vector<1x256xf32> to vector<16x256xf32>
      %94 = arith.addf %91, %93 : vector<16x256xf32>
      %cst_41 = arith.constant 5.000000e-01 : f32
      %95 = vector.broadcast %cst_41 : f32 to vector<16x256xf32>
      %96 = arith.mulf %95, %94 : vector<16x256xf32>
      %cst_42 = arith.constant 0.707106769 : f32
      %97 = vector.broadcast %cst_42 : f32 to vector<16x256xf32>
      %98 = arith.mulf %94, %97 : vector<16x256xf32>
      %99 = math.erf %98 : vector<16x256xf32>
      %cst_43 = arith.constant 1.000000e+00 : f32
      %100 = vector.broadcast %cst_43 : f32 to vector<16x256xf32>
      %101 = arith.addf %100, %99 : vector<16x256xf32>
      %102 = arith.mulf %96, %101 : vector<16x256xf32>
      %cst_44 = arith.constant dense<0.000000e+00> : vector<16xf32>
      %103 = vector.multi_reduction <add>, %102, %cst_44 [1] : vector<16x256xf32> to vector<16xf32>
      %104 = vector.shape_cast %103 : vector<16xf32> to vector<16x1xf32>
      %cst_45 = arith.constant 2.560000e+02 : f32
      %105 = vector.broadcast %cst_45 : f32 to vector<16x1xf32>
      %106 = arith.divf %104, %105 : vector<16x1xf32>
      %107 = vector.broadcast %106 : vector<16x1xf32> to vector<16x256xf32>
      %108 = arith.subf %102, %107 : vector<16x256xf32>
      %109 = arith.mulf %108, %108 : vector<16x256xf32>
      %cst_46 = arith.constant dense<0.000000e+00> : vector<16xf32>
      %110 = vector.multi_reduction <add>, %109, %cst_46 [1] : vector<16x256xf32> to vector<16xf32>
      %111 = vector.shape_cast %110 : vector<16xf32> to vector<16x1xf32>
      %cst_47 = arith.constant 2.560000e+02 : f32
      %112 = vector.broadcast %cst_47 : f32 to vector<16x1xf32>
      %113 = arith.divf %111, %112 : vector<16x1xf32>
      %cst_48 = arith.constant 9.99999974E-6 : f32
      %114 = vector.broadcast %cst_48 : f32 to vector<16x1xf32>
      %115 = arith.addf %113, %114 : vector<16x1xf32>
      %116 = math.rsqrt %115 : vector<16x1xf32>
      %117 = vector.broadcast %116 : vector<16x1xf32> to vector<16x256xf32>
      %118 = arith.mulf %108, %117 : vector<16x256xf32>
      %c0_49 = arith.constant 0 : index
      %c0_50 = arith.constant 0 : index
      %c0_51 = arith.constant 0 : index
      %119 = vector.load %arg7[%c0_49, %c0_50, %c0_51] : memref<3x256x256xbf16, #tpu.memory_space<vmem>>, vector<1x256x256xbf16>
      %120 = vector.shape_cast %119 : vector<1x256x256xbf16> to vector<256x256xbf16>
      %121 = arith.truncf %118 : vector<16x256xf32> to vector<16x256xbf16>
      %cst_52 = arith.constant dense<0.000000e+00> : vector<16x256xf32>
      %122 = tpu.matmul %121, %120, %cst_52 {dimension_numbers = #tpu.dot_dimension_numbers<[1], [0], [0], [1], [0, 0, 1, 1], [], []>} : vector<16x256xbf16>, vector<256x256xbf16>, vector<16x256xf32> -> vector<16x256xf32>
      %123 = vector.extract_strided_slice %79 {offsets = [1, 0], sizes = [1, 256], strides = [1, 1]} : vector<6x256xf32> to vector<1x256xf32>
      %124 = vector.broadcast %123 : vector<1x256xf32> to vector<16x256xf32>
      %125 = arith.addf %122, %124 : vector<16x256xf32>
      %cst_53 = arith.constant 5.000000e-01 : f32
      %126 = vector.broadcast %cst_53 : f32 to vector<16x256xf32>
      %127 = arith.mulf %126, %125 : vector<16x256xf32>
      %cst_54 = arith.constant 0.707106769 : f32
      %128 = vector.broadcast %cst_54 : f32 to vector<16x256xf32>
      %129 = arith.mulf %125, %128 : vector<16x256xf32>
      %130 = math.erf %129 : vector<16x256xf32>
      %cst_55 = arith.constant 1.000000e+00 : f32
      %131 = vector.broadcast %cst_55 : f32 to vector<16x256xf32>
      %132 = arith.addf %131, %130 : vector<16x256xf32>
      %133 = arith.mulf %127, %132 : vector<16x256xf32>
      %cst_56 = arith.constant dense<0.000000e+00> : vector<16xf32>
      %134 = vector.multi_reduction <add>, %133, %cst_56 [1] : vector<16x256xf32> to vector<16xf32>
      %135 = vector.shape_cast %134 : vector<16xf32> to vector<16x1xf32>
      %cst_57 = arith.constant 2.560000e+02 : f32
      %136 = vector.broadcast %cst_57 : f32 to vector<16x1xf32>
      %137 = arith.divf %135, %136 : vector<16x1xf32>
      %138 = vector.broadcast %137 : vector<16x1xf32> to vector<16x256xf32>
      %139 = arith.subf %133, %138 : vector<16x256xf32>
      %140 = arith.mulf %139, %139 : vector<16x256xf32>
      %cst_58 = arith.constant dense<0.000000e+00> : vector<16xf32>
      %141 = vector.multi_reduction <add>, %140, %cst_58 [1] : vector<16x256xf32> to vector<16xf32>
      %142 = vector.shape_cast %141 : vector<16xf32> to vector<16x1xf32>
      %cst_59 = arith.constant 2.560000e+02 : f32
      %143 = vector.broadcast %cst_59 : f32 to vector<16x1xf32>
      %144 = arith.divf %142, %143 : vector<16x1xf32>
      %cst_60 = arith.constant 9.99999974E-6 : f32
      %145 = vector.broadcast %cst_60 : f32 to vector<16x1xf32>
      %146 = arith.addf %144, %145 : vector<16x1xf32>
      %147 = math.rsqrt %146 : vector<16x1xf32>
      %148 = vector.broadcast %147 : vector<16x1xf32> to vector<16x256xf32>
      %149 = arith.mulf %139, %148 : vector<16x256xf32>
      %c0_61 = arith.constant 0 : index
      %c0_62 = arith.constant 0 : index
      %150 = vector.load %arg17[%c0_61, %c0_62] : memref<16x256xf32, #tpu.memory_space<vmem>>, vector<16x256xf32>
      tpu.vector_store %arg17[%c0_61, %c0_62], %149 {strides = array<i32>} : memref<16x256xf32, #tpu.memory_space<vmem>>, vector<16x256xf32>,
      %c0_63 = arith.constant 0 : index
      %c0_64 = arith.constant 0 : index
      %151 = vector.load %arg2[%c0_63, %c0_64] : memref<16x32xf32, #tpu.memory_space<vmem>>, vector<16x32xf32>
      %c0_65 = arith.constant 0 : index
      %c0_66 = arith.constant 0 : index
      %152 = vector.load %arg6[%c0_65, %c0_66] : memref<32x256xbf16, #tpu.memory_space<vmem>>, vector<32x256xbf16>
      %153 = arith.truncf %151 : vector<16x32xf32> to vector<16x32xbf16>
      %cst_67 = arith.constant dense<0.000000e+00> : vector<16x256xf32>
      %154 = tpu.matmul %153, %152, %cst_67 {dimension_numbers = #tpu.dot_dimension_numbers<[1], [0], [0], [1], [0, 0, 1, 1], [], []>} : vector<16x32xbf16>, vector<32x256xbf16>, vector<16x256xf32> -> vector<16x256xf32>
      %155 = vector.extract_strided_slice %79 {offsets = [2, 0], sizes = [1, 256], strides = [1, 1]} : vector<6x256xf32> to vector<1x256xf32>
      %156 = vector.broadcast %155 : vector<1x256xf32> to vector<16x256xf32>
      %157 = arith.addf %154, %156 : vector<16x256xf32>
      %cst_68 = arith.constant 5.000000e-01 : f32
      %158 = vector.broadcast %cst_68 : f32 to vector<16x256xf32>
      %159 = arith.mulf %158, %157 : vector<16x256xf32>
      %cst_69 = arith.constant 0.707106769 : f32
      %160 = vector.broadcast %cst_69 : f32 to vector<16x256xf32>
      %161 = arith.mulf %157, %160 : vector<16x256xf32>
      %162 = math.erf %161 : vector<16x256xf32>
      %cst_70 = arith.constant 1.000000e+00 : f32
      %163 = vector.broadcast %cst_70 : f32 to vector<16x256xf32>
      %164 = arith.addf %163, %162 : vector<16x256xf32>
      %165 = arith.mulf %159, %164 : vector<16x256xf32>
      %cst_71 = arith.constant dense<0.000000e+00> : vector<16xf32>
      %166 = vector.multi_reduction <add>, %165, %cst_71 [1] : vector<16x256xf32> to vector<16xf32>
      %167 = vector.shape_cast %166 : vector<16xf32> to vector<16x1xf32>
      %cst_72 = arith.constant 2.560000e+02 : f32
      %168 = vector.broadcast %cst_72 : f32 to vector<16x1xf32>
      %169 = arith.divf %167, %168 : vector<16x1xf32>
      %170 = vector.broadcast %169 : vector<16x1xf32> to vector<16x256xf32>
      %171 = arith.subf %165, %170 : vector<16x256xf32>
      %172 = arith.mulf %171, %171 : vector<16x256xf32>
      %cst_73 = arith.constant dense<0.000000e+00> : vector<16xf32>
      %173 = vector.multi_reduction <add>, %172, %cst_73 [1] : vector<16x256xf32> to vector<16xf32>
      %174 = vector.shape_cast %173 : vector<16xf32> to vector<16x1xf32>
      %cst_74 = arith.constant 2.560000e+02 : f32
      %175 = vector.broadcast %cst_74 : f32 to vector<16x1xf32>
      %176 = arith.divf %174, %175 : vector<16x1xf32>
      %cst_75 = arith.constant 9.99999974E-6 : f32
      %177 = vector.broadcast %cst_75 : f32 to vector<16x1xf32>
      %178 = arith.addf %176, %177 : vector<16x1xf32>
      %179 = math.rsqrt %178 : vector<16x1xf32>
      %180 = vector.broadcast %179 : vector<16x1xf32> to vector<16x256xf32>
      %181 = arith.mulf %171, %180 : vector<16x256xf32>
      %182 = vector.extract_strided_slice %79 {offsets = [3, 0], sizes = [1, 256], strides = [1, 1]} : vector<6x256xf32> to vector<1x256xf32>
      %183 = vector.broadcast %182 : vector<1x256xf32> to vector<16x256xf32>
      %184 = arith.mulf %181, %183 : vector<16x256xf32>
      %185 = vector.extract_strided_slice %79 {offsets = [4, 0], sizes = [1, 256], strides = [1, 1]} : vector<6x256xf32> to vector<1x256xf32>
      %186 = vector.broadcast %185 : vector<1x256xf32> to vector<16x256xf32>
      %187 = arith.addf %184, %186 : vector<16x256xf32>
      %c0_76 = arith.constant 0 : index
      %c0_77 = arith.constant 0 : index
      %188 = vector.load %arg16[%c0_76, %c0_77] : memref<16x256xf32, #tpu.memory_space<vmem>>, vector<16x256xf32>
      tpu.vector_store %arg16[%c0_76, %c0_77], %187 {strides = array<i32>} : memref<16x256xf32, #tpu.memory_space<vmem>>, vector<16x256xf32>,
    } else {
    }
    %c0 = arith.constant 0 : index
    %c0_1 = arith.constant 0 : index
    %c0_2 = arith.constant 0 : index
    %3 = vector.load %arg11[%c0, %c0_1, %c0_2] : memref<1x4x256xf32, #tpu.memory_space<vmem>>, vector<1x4x256xf32>
    %4 = vector.shape_cast %3 : vector<1x4x256xf32> to vector<4x256xf32>
    %c0_3 = arith.constant 0 : index
    %c0_4 = arith.constant 0 : index
    %5 = vector.load %arg16[%c0_3, %c0_4] : memref<16x256xf32, #tpu.memory_space<vmem>>, vector<16x256xf32>
    %c0_5 = arith.constant 0 : index
    %c0_6 = arith.constant 0 : index
    %c0_7 = arith.constant 0 : index
    %6 = vector.load %arg9[%c0_5, %c0_6, %c0_7] : memref<1x256x256xbf16, #tpu.memory_space<vmem>>, vector<1x256x256xbf16>
    %7 = vector.shape_cast %6 : vector<1x256x256xbf16> to vector<256x256xbf16>
    %8 = arith.truncf %5 : vector<16x256xf32> to vector<16x256xbf16>
    %cst = arith.constant dense<0.000000e+00> : vector<16x256xf32>
    %9 = tpu.matmul %8, %7, %cst {dimension_numbers = #tpu.dot_dimension_numbers<[1], [0], [0], [1], [0, 0, 1, 1], [], []>} : vector<16x256xbf16>, vector<256x256xbf16>, vector<16x256xf32> -> vector<16x256xf32>
    %10 = vector.extract_strided_slice %4 {offsets = [0, 0], sizes = [1, 256], strides = [1, 1]} : vector<4x256xf32> to vector<1x256xf32>
    %11 = vector.broadcast %10 : vector<1x256xf32> to vector<16x256xf32>
    %12 = arith.addf %9, %11 : vector<16x256xf32>
    %cst_8 = arith.constant 5.000000e-01 : f32
    %13 = vector.broadcast %cst_8 : f32 to vector<16x256xf32>
    %14 = arith.mulf %13, %12 : vector<16x256xf32>
    %cst_9 = arith.constant 0.707106769 : f32
    %15 = vector.broadcast %cst_9 : f32 to vector<16x256xf32>
    %16 = arith.mulf %12, %15 : vector<16x256xf32>
    %17 = math.erf %16 : vector<16x256xf32>
    %cst_10 = arith.constant 1.000000e+00 : f32
    %18 = vector.broadcast %cst_10 : f32 to vector<16x256xf32>
    %19 = arith.addf %18, %17 : vector<16x256xf32>
    %20 = arith.mulf %14, %19 : vector<16x256xf32>
    %cst_11 = arith.constant dense<0.000000e+00> : vector<16xf32>
    %21 = vector.multi_reduction <add>, %20, %cst_11 [1] : vector<16x256xf32> to vector<16xf32>
    %22 = vector.shape_cast %21 : vector<16xf32> to vector<16x1xf32>
    %cst_12 = arith.constant 2.560000e+02 : f32
    %23 = vector.broadcast %cst_12 : f32 to vector<16x1xf32>
    %24 = arith.divf %22, %23 : vector<16x1xf32>
    %25 = vector.broadcast %24 : vector<16x1xf32> to vector<16x256xf32>
    %26 = arith.subf %20, %25 : vector<16x256xf32>
    %27 = arith.mulf %26, %26 : vector<16x256xf32>
    %cst_13 = arith.constant dense<0.000000e+00> : vector<16xf32>
    %28 = vector.multi_reduction <add>, %27, %cst_13 [1] : vector<16x256xf32> to vector<16xf32>
    %29 = vector.shape_cast %28 : vector<16xf32> to vector<16x1xf32>
    %cst_14 = arith.constant 2.560000e+02 : f32
    %30 = vector.broadcast %cst_14 : f32 to vector<16x1xf32>
    %31 = arith.divf %29, %30 : vector<16x1xf32>
    %cst_15 = arith.constant 9.99999974E-6 : f32
    %32 = vector.broadcast %cst_15 : f32 to vector<16x1xf32>
    %33 = arith.addf %31, %32 : vector<16x1xf32>
    %34 = math.rsqrt %33 : vector<16x1xf32>
    %35 = vector.broadcast %34 : vector<16x1xf32> to vector<16x256xf32>
    %36 = arith.mulf %26, %35 : vector<16x256xf32>
    %c0_16 = arith.constant 0 : index
    %c0_17 = arith.constant 0 : index
    %c0_18 = arith.constant 0 : index
    %37 = vector.load %arg10[%c0_16, %c0_17, %c0_18] : memref<1x256x256xbf16, #tpu.memory_space<vmem>>, vector<1x256x256xbf16>
    %38 = vector.shape_cast %37 : vector<1x256x256xbf16> to vector<256x256xbf16>
    %39 = arith.truncf %36 : vector<16x256xf32> to vector<16x256xbf16>
    %cst_19 = arith.constant dense<0.000000e+00> : vector<16x256xf32>
    %40 = tpu.matmul %39, %38, %cst_19 {dimension_numbers = #tpu.dot_dimension_numbers<[1], [0], [0], [1], [0, 0, 1, 1], [], []>} : vector<16x256xbf16>, vector<256x256xbf16>, vector<16x256xf32> -> vector<16x256xf32>
    %41 = vector.extract_strided_slice %4 {offsets = [1, 0], sizes = [1, 256], strides = [1, 1]} : vector<4x256xf32> to vector<1x256xf32>
    %42 = vector.broadcast %41 : vector<1x256xf32> to vector<16x256xf32>
    %43 = arith.addf %40, %42 : vector<16x256xf32>
    %cst_20 = arith.constant 5.000000e-01 : f32
    %44 = vector.broadcast %cst_20 : f32 to vector<16x256xf32>
    %45 = arith.mulf %44, %43 : vector<16x256xf32>
    %cst_21 = arith.constant 0.707106769 : f32
    %46 = vector.broadcast %cst_21 : f32 to vector<16x256xf32>
    %47 = arith.mulf %43, %46 : vector<16x256xf32>
    %48 = math.erf %47 : vector<16x256xf32>
    %cst_22 = arith.constant 1.000000e+00 : f32
    %49 = vector.broadcast %cst_22 : f32 to vector<16x256xf32>
    %50 = arith.addf %49, %48 : vector<16x256xf32>
    %51 = arith.mulf %45, %50 : vector<16x256xf32>
    %cst_23 = arith.constant dense<0.000000e+00> : vector<16xf32>
    %52 = vector.multi_reduction <add>, %51, %cst_23 [1] : vector<16x256xf32> to vector<16xf32>
    %53 = vector.shape_cast %52 : vector<16xf32> to vector<16x1xf32>
    %cst_24 = arith.constant 2.560000e+02 : f32
    %54 = vector.broadcast %cst_24 : f32 to vector<16x1xf32>
    %55 = arith.divf %53, %54 : vector<16x1xf32>
    %56 = vector.broadcast %55 : vector<16x1xf32> to vector<16x256xf32>
    %57 = arith.subf %51, %56 : vector<16x256xf32>
    %58 = arith.mulf %57, %57 : vector<16x256xf32>
    %cst_25 = arith.constant dense<0.000000e+00> : vector<16xf32>
    %59 = vector.multi_reduction <add>, %58, %cst_25 [1] : vector<16x256xf32> to vector<16xf32>
    %60 = vector.shape_cast %59 : vector<16xf32> to vector<16x1xf32>
    %cst_26 = arith.constant 2.560000e+02 : f32
    %61 = vector.broadcast %cst_26 : f32 to vector<16x1xf32>
    %62 = arith.divf %60, %61 : vector<16x1xf32>
    %cst_27 = arith.constant 9.99999974E-6 : f32
    %63 = vector.broadcast %cst_27 : f32 to vector<16x1xf32>
    %64 = arith.addf %62, %63 : vector<16x1xf32>
    %65 = math.rsqrt %64 : vector<16x1xf32>
    %66 = vector.broadcast %65 : vector<16x1xf32> to vector<16x256xf32>
    %67 = arith.mulf %57, %66 : vector<16x256xf32>
    %68 = vector.extract_strided_slice %4 {offsets = [2, 0], sizes = [1, 256], strides = [1, 1]} : vector<4x256xf32> to vector<1x256xf32>
    %69 = vector.broadcast %68 : vector<1x256xf32> to vector<16x256xf32>
    %70 = arith.mulf %67, %69 : vector<16x256xf32>
    %71 = vector.extract_strided_slice %4 {offsets = [3, 0], sizes = [1, 256], strides = [1, 1]} : vector<4x256xf32> to vector<1x256xf32>
    %72 = vector.broadcast %71 : vector<1x256xf32> to vector<16x256xf32>
    %73 = arith.addf %70, %72 : vector<16x256xf32>
    %74 = arith.addf %5, %73 : vector<16x256xf32>
    %c0_28 = arith.constant 0 : index
    %c0_29 = arith.constant 0 : index
    %75 = vector.load %arg16[%c0_28, %c0_29] : memref<16x256xf32, #tpu.memory_space<vmem>>, vector<16x256xf32>
    tpu.vector_store %arg16[%c0_28, %c0_29], %74 {strides = array<i32>} : memref<16x256xf32, #tpu.memory_space<vmem>>, vector<16x256xf32>,
    %c3_i32 = arith.constant 3 : i32
    %76 = arith.cmpi eq, %arg1, %c3_i32 : i32
    %77 = arith.extui %76 : i1 to i32
    %c0_i32_30 = arith.constant 0 : i32
    %78 = arith.cmpi ne, %77, %c0_i32_30 : i32
    scf.if %78 {
      %c0_31 = arith.constant 0 : index
      %c0_32 = arith.constant 0 : index
      %79 = vector.load %arg8[%c0_31, %c0_32] : memref<6x256xf32, #tpu.memory_space<vmem>>, vector<6x256xf32>
      %c0_33 = arith.constant 0 : index
      %c0_34 = arith.constant 0 : index
      %80 = vector.load %arg14[%c0_33, %c0_34] : memref<2x128xf32, #tpu.memory_space<vmem>>, vector<2x128xf32>
      %c0_35 = arith.constant 0 : index
      %c0_36 = arith.constant 0 : index
      %81 = vector.load %arg16[%c0_35, %c0_36] : memref<16x256xf32, #tpu.memory_space<vmem>>, vector<16x256xf32>
      %c1 = arith.constant 1 : index
      %c0_37 = arith.constant 0 : index
      %c0_38 = arith.constant 0 : index
      %82 = vector.load %arg7[%c1, %c0_37, %c0_38] : memref<3x256x256xbf16, #tpu.memory_space<vmem>>, vector<1x256x256xbf16>
      %83 = vector.shape_cast %82 : vector<1x256x256xbf16> to vector<256x256xbf16>
      %84 = arith.truncf %81 : vector<16x256xf32> to vector<16x256xbf16>
      %cst_39 = arith.constant dense<0.000000e+00> : vector<16x256xf32>
      %85 = tpu.matmul %84, %83, %cst_39 {dimension_numbers = #tpu.dot_dimension_numbers<[1], [0], [0], [1], [0, 0, 1, 1], [], []>} : vector<16x256xbf16>, vector<256x256xbf16>, vector<16x256xf32> -> vector<16x256xf32>
      %c0_40 = arith.constant 0 : index
      %c0_41 = arith.constant 0 : index
      %86 = vector.load %arg17[%c0_40, %c0_41] : memref<16x256xf32, #tpu.memory_space<vmem>>, vector<16x256xf32>
      %c2 = arith.constant 2 : index
      %c0_42 = arith.constant 0 : index
      %c0_43 = arith.constant 0 : index
      %87 = vector.load %arg7[%c2, %c0_42, %c0_43] : memref<3x256x256xbf16, #tpu.memory_space<vmem>>, vector<1x256x256xbf16>
      %88 = vector.shape_cast %87 : vector<1x256x256xbf16> to vector<256x256xbf16>
      %89 = arith.truncf %86 : vector<16x256xf32> to vector<16x256xbf16>
      %cst_44 = arith.constant dense<0.000000e+00> : vector<16x256xf32>
      %90 = tpu.matmul %89, %88, %cst_44 {dimension_numbers = #tpu.dot_dimension_numbers<[1], [0], [0], [1], [0, 0, 1, 1], [], []>} : vector<16x256xbf16>, vector<256x256xbf16>, vector<16x256xf32> -> vector<16x256xf32>
      %91 = arith.addf %85, %90 : vector<16x256xf32>
      %92 = vector.extract_strided_slice %79 {offsets = [5, 0], sizes = [1, 256], strides = [1, 1]} : vector<6x256xf32> to vector<1x256xf32>
      %93 = vector.broadcast %92 : vector<1x256xf32> to vector<16x256xf32>
      %94 = arith.addf %91, %93 : vector<16x256xf32>
      %cst_45 = arith.constant 5.000000e-01 : f32
      %95 = vector.broadcast %cst_45 : f32 to vector<16x256xf32>
      %96 = arith.mulf %95, %94 : vector<16x256xf32>
      %cst_46 = arith.constant 0.707106769 : f32
      %97 = vector.broadcast %cst_46 : f32 to vector<16x256xf32>
      %98 = arith.mulf %94, %97 : vector<16x256xf32>
      %99 = math.erf %98 : vector<16x256xf32>
      %cst_47 = arith.constant 1.000000e+00 : f32
      %100 = vector.broadcast %cst_47 : f32 to vector<16x256xf32>
      %101 = arith.addf %100, %99 : vector<16x256xf32>
      %102 = arith.mulf %96, %101 : vector<16x256xf32>
      %cst_48 = arith.constant dense<0.000000e+00> : vector<16xf32>
      %103 = vector.multi_reduction <add>, %102, %cst_48 [1] : vector<16x256xf32> to vector<16xf32>
      %104 = vector.shape_cast %103 : vector<16xf32> to vector<16x1xf32>
      %cst_49 = arith.constant 2.560000e+02 : f32
      %105 = vector.broadcast %cst_49 : f32 to vector<16x1xf32>
      %106 = arith.divf %104, %105 : vector<16x1xf32>
      %107 = vector.broadcast %106 : vector<16x1xf32> to vector<16x256xf32>
      %108 = arith.subf %102, %107 : vector<16x256xf32>
      %109 = arith.mulf %108, %108 : vector<16x256xf32>
      %cst_50 = arith.constant dense<0.000000e+00> : vector<16xf32>
      %110 = vector.multi_reduction <add>, %109, %cst_50 [1] : vector<16x256xf32> to vector<16xf32>
      %111 = vector.shape_cast %110 : vector<16xf32> to vector<16x1xf32>
      %cst_51 = arith.constant 2.560000e+02 : f32
      %112 = vector.broadcast %cst_51 : f32 to vector<16x1xf32>
      %113 = arith.divf %111, %112 : vector<16x1xf32>
      %cst_52 = arith.constant 9.99999974E-6 : f32
      %114 = vector.broadcast %cst_52 : f32 to vector<16x1xf32>
      %115 = arith.addf %113, %114 : vector<16x1xf32>
      %116 = math.rsqrt %115 : vector<16x1xf32>
      %117 = vector.broadcast %116 : vector<16x1xf32> to vector<16x256xf32>
      %118 = arith.mulf %108, %117 : vector<16x256xf32>
      %c0_53 = arith.constant 0 : index
      %c0_54 = arith.constant 0 : index
      %119 = vector.load %arg12[%c0_53, %c0_54] : memref<256x128xbf16, #tpu.memory_space<vmem>>, vector<256x128xbf16>
      %120 = arith.truncf %118 : vector<16x256xf32> to vector<16x256xbf16>
      %cst_55 = arith.constant dense<0.000000e+00> : vector<16x128xf32>
      %121 = tpu.matmul %120, %119, %cst_55 {dimension_numbers = #tpu.dot_dimension_numbers<[1], [0], [0], [1], [0, 0, 1, 1], [], []>} : vector<16x256xbf16>, vector<256x128xbf16>, vector<16x128xf32> -> vector<16x128xf32>
      %122 = vector.extract_strided_slice %80 {offsets = [0, 0], sizes = [1, 128], strides = [1, 1]} : vector<2x128xf32> to vector<1x128xf32>
      %123 = vector.broadcast %122 : vector<1x128xf32> to vector<16x128xf32>
      %124 = arith.addf %121, %123 : vector<16x128xf32>
      %cst_56 = arith.constant 5.000000e-01 : f32
      %125 = vector.broadcast %cst_56 : f32 to vector<16x128xf32>
      %126 = arith.mulf %125, %124 : vector<16x128xf32>
      %cst_57 = arith.constant 0.707106769 : f32
      %127 = vector.broadcast %cst_57 : f32 to vector<16x128xf32>
      %128 = arith.mulf %124, %127 : vector<16x128xf32>
      %129 = math.erf %128 : vector<16x128xf32>
      %cst_58 = arith.constant 1.000000e+00 : f32
      %130 = vector.broadcast %cst_58 : f32 to vector<16x128xf32>
      %131 = arith.addf %130, %129 : vector<16x128xf32>
      %132 = arith.mulf %126, %131 : vector<16x128xf32>
      %cst_59 = arith.constant dense<0.000000e+00> : vector<16xf32>
      %133 = vector.multi_reduction <add>, %132, %cst_59 [1] : vector<16x128xf32> to vector<16xf32>
      %134 = vector.shape_cast %133 : vector<16xf32> to vector<16x1xf32>
      %cst_60 = arith.constant 1.280000e+02 : f32
      %135 = vector.broadcast %cst_60 : f32 to vector<16x1xf32>
      %136 = arith.divf %134, %135 : vector<16x1xf32>
      %137 = vector.broadcast %136 : vector<16x1xf32> to vector<16x128xf32>
      %138 = arith.subf %132, %137 : vector<16x128xf32>
      %139 = arith.mulf %138, %138 : vector<16x128xf32>
      %cst_61 = arith.constant dense<0.000000e+00> : vector<16xf32>
      %140 = vector.multi_reduction <add>, %139, %cst_61 [1] : vector<16x128xf32> to vector<16xf32>
      %141 = vector.shape_cast %140 : vector<16xf32> to vector<16x1xf32>
      %cst_62 = arith.constant 1.280000e+02 : f32
      %142 = vector.broadcast %cst_62 : f32 to vector<16x1xf32>
      %143 = arith.divf %141, %142 : vector<16x1xf32>
      %cst_63 = arith.constant 9.99999974E-6 : f32
      %144 = vector.broadcast %cst_63 : f32 to vector<16x1xf32>
      %145 = arith.addf %143, %144 : vector<16x1xf32>
      %146 = math.rsqrt %145 : vector<16x1xf32>
      %147 = vector.broadcast %146 : vector<16x1xf32> to vector<16x128xf32>
      %148 = arith.mulf %138, %147 : vector<16x128xf32>
      %c0_64 = arith.constant 0 : index
      %c0_65 = arith.constant 0 : index
      %149 = vector.load %arg13[%c0_64, %c0_65] : memref<128x128xbf16, #tpu.memory_space<vmem>>, vector<128x128xbf16>
      %150 = arith.truncf %148 : vector<16x128xf32> to vector<16x128xbf16>
      %cst_66 = arith.constant dense<0.000000e+00> : vector<16x128xf32>
      %151 = tpu.matmul %150, %149, %cst_66 {dimension_numbers = #tpu.dot_dimension_numbers<[1], [0], [0], [1], [0, 0, 1, 1], [], []>} : vector<16x128xbf16>, vector<128x128xbf16>, vector<16x128xf32> -> vector<16x128xf32>
      %152 = vector.extract_strided_slice %80 {offsets = [1, 0], sizes = [1, 128], strides = [1, 1]} : vector<2x128xf32> to vector<1x128xf32>
      %153 = vector.broadcast %152 : vector<1x128xf32> to vector<16x128xf32>
      %154 = arith.addf %151, %153 : vector<16x128xf32>
      %c0_67 = arith.constant 0 : index
      %c0_68 = arith.constant 0 : index
      %155 = vector.load %arg15[%c0_67, %c0_68] : memref<16x128xf32, #tpu.memory_space<vmem>>, vector<16x128xf32>
      tpu.vector_store %arg15[%c0_67, %c0_68], %154 {strides = array<i32>} : memref<16x128xf32, #tpu.memory_space<vmem>>, vector<16x128xf32>,
    } else {
    }
    return
  }
  func.func @transform_0(%arg0: i32, %arg1: i32) -> (i32, i32) {
    %c0_i32 = arith.constant 0 : i32
    %c0_i32_0 = arith.constant 0 : i32
    return %arg0, %c0_i32 : i32, i32
  }
  func.func @transform_1(%arg0: i32, %arg1: i32) -> (i32, i32) {
    %c0_i32 = arith.constant 0 : i32
    %c0_i32_0 = arith.constant 0 : i32
    return %arg0, %c0_i32 : i32, i32
  }
  func.func @transform_2(%arg0: i32, %arg1: i32) -> (i32, i32) {
    %c0_i32 = arith.constant 0 : i32
    %c0_i32_0 = arith.constant 0 : i32
    %c0_i32_1 = arith.constant 0 : i32
    return %c0_i32, %c0_i32_0 : i32, i32
  }
  func.func @transform_3(%arg0: i32, %arg1: i32) -> (i32, i32) {
    %c0_i32 = arith.constant 0 : i32
    %c0_i32_0 = arith.constant 0 : i32
    %c0_i32_1 = arith.constant 0 : i32
    return %c0_i32, %c0_i32_0 : i32, i32
  }
  func.func @transform_4(%arg0: i32, %arg1: i32) -> (i32, i32) {
    %c0_i32 = arith.constant 0 : i32
    %c0_i32_0 = arith.constant 0 : i32
    %c0_i32_1 = arith.constant 0 : i32
    return %c0_i32, %c0_i32_0 : i32, i32
  }
  func.func @transform_5(%arg0: i32, %arg1: i32) -> (i32, i32, i32) {
    %c0_i32 = arith.constant 0 : i32
    %c0_i32_0 = arith.constant 0 : i32
    %c0_i32_1 = arith.constant 0 : i32
    %c0_i32_2 = arith.constant 0 : i32
    return %c0_i32, %c0_i32_0, %c0_i32_1 : i32, i32, i32
  }
  func.func @transform_6(%arg0: i32, %arg1: i32) -> (i32, i32) {
    %c0_i32 = arith.constant 0 : i32
    %c0_i32_0 = arith.constant 0 : i32
    %c0_i32_1 = arith.constant 0 : i32
    return %c0_i32, %c0_i32_0 : i32, i32
  }
  func.func @transform_7(%arg0: i32, %arg1: i32) -> (i32, i32, i32) {
    %c0_i32 = arith.constant 0 : i32
    %c0_i32_0 = arith.constant 0 : i32
    %c0_i32_1 = arith.constant 0 : i32
    return %arg1, %c0_i32, %c0_i32_0 : i32, i32, i32
  }
  func.func @transform_8(%arg0: i32, %arg1: i32) -> (i32, i32, i32) {
    %c0_i32 = arith.constant 0 : i32
    %c0_i32_0 = arith.constant 0 : i32
    %c0_i32_1 = arith.constant 0 : i32
    return %arg1, %c0_i32, %c0_i32_0 : i32, i32, i32
  }
  func.func @transform_9(%arg0: i32, %arg1: i32) -> (i32, i32, i32) {
    %c0_i32 = arith.constant 0 : i32
    %c0_i32_0 = arith.constant 0 : i32
    %c0_i32_1 = arith.constant 0 : i32
    return %arg1, %c0_i32, %c0_i32_0 : i32, i32, i32
  }
  func.func @transform_10(%arg0: i32, %arg1: i32) -> (i32, i32) {
    %c0_i32 = arith.constant 0 : i32
    %c0_i32_0 = arith.constant 0 : i32
    %c0_i32_1 = arith.constant 0 : i32
    return %c0_i32, %c0_i32_0 : i32, i32
  }
  func.func @transform_11(%arg0: i32, %arg1: i32) -> (i32, i32) {
    %c0_i32 = arith.constant 0 : i32
    %c0_i32_0 = arith.constant 0 : i32
    %c0_i32_1 = arith.constant 0 : i32
    return %c0_i32, %c0_i32_0 : i32, i32
  }
  func.func @transform_12(%arg0: i32, %arg1: i32) -> (i32, i32) {
    %c0_i32 = arith.constant 0 : i32
    %c0_i32_0 = arith.constant 0 : i32
    %c0_i32_1 = arith.constant 0 : i32
    return %c0_i32, %c0_i32_0 : i32, i32
  }
  func.func @transform_13(%arg0: i32, %arg1: i32) -> (i32, i32) {
    %c0_i32 = arith.constant 0 : i32
    %c0_i32_0 = arith.constant 0 : i32
    return %arg0, %c0_i32 : i32, i32
  }
}

</mosaic_0001>

<llo_original>
// kernel: denoise_forward.1
$region0: #{denoise_forward.1}
  #allocation0 [shape = 'u32[]', space=smem, size = 0x4, offset = 0x4, fixed_abs, tag = 'smem constant byte address 0x4 - core index']
  #allocation1 [shape = 'u32[144,128]{1,0:T(1,128)}', space=vmem, size = 0x12000, scoped, tag = 'internal scratch']
  #allocation2 [shape = 'f32[16,256]{1,0:T(8,128)}', space=vmem, size = 0x4000, scoped, tag = 'scratch operand']
  #allocation3 [shape = 'f32[16,256]{1,0:T(8,128)}', space=vmem, size = 0x4000, scoped, tag = 'scratch operand']
  %s0 = inlined_call_operand.vmem [shape: f32[16,32], index: 0, kind: input, shape index: {}]
  %s1 = inlined_call_operand.vmem [shape: f32[16,1], index: 1, kind: input, shape index: {}]
  %s2 = inlined_call_operand.vmem [shape: f32[2,128], index: 2, kind: input, shape index: {}]
  %s3 = inlined_call_operand.hbm [shape: bf16[128,256], index: 3, kind: input, shape index: {}]
  %s4 = inlined_call_operand.vmem [shape: bf16[32,256], index: 4, kind: input, shape index: {}]
  %s5 = inlined_call_operand.hbm [shape: bf16[3,256,256], index: 5, kind: input, shape index: {}]
  %s6 = inlined_call_operand.hbm [shape: f32[6,256], index: 6, kind: input, shape index: {}]
  %s7 = inlined_call_operand.hbm [shape: bf16[4,256,256], index: 7, kind: input, shape index: {}]
  %s8 = inlined_call_operand.hbm [shape: bf16[4,256,256], index: 8, kind: input, shape index: {}]
  %s9 = inlined_call_operand.hbm [shape: f32[4,4,256], index: 9, kind: input, shape index: {}]
  %s10 = inlined_call_operand.hbm [shape: bf16[256,128], index: 10, kind: input, shape index: {}]
  %s11 = inlined_call_operand.vmem [shape: bf16[128,128], index: 11, kind: input, shape index: {}]
  %s12 = inlined_call_operand.vmem [shape: f32[2,128], index: 12, kind: input, shape index: {}]
  %s13 = inlined_call_operand.vmem [shape: f32[16,128], index: 13, kind: output, shape index: {}]
  %s14 = sld [smem:[#allocation0]]
  $region121: #{denoise_forward.1} parent=0
    _
  %s16 = ssub.s32 1, %s14
  %s17 = scalar_select 0, %s16, %s14
  $region1: #{denoise_forward.1} parent=0
    #allocation4 [shape = 'u8[65536]{0}', space=vmem, size = 0x10000, scoped, tag = 'input window, operand 3, single buffered']
    #allocation5 [shape = 's32[2]{0}', space=sflag, size = 0x8, scoped, tag = 'scoped memory for denoise_forward.1']
    #allocation6 [shape = 'u8[393216]{0}', space=vmem, size = 0x60000, scoped, tag = 'input window, operand 5, single buffered']
    #allocation7 [shape = 's32[1]{0}', space=sflag, size = 0x4, scoped, tag = 'scoped memory for denoise_forward.1']
    #allocation8 [shape = 'u8[8192]{0}', space=vmem, size = 0x2000, scoped, tag = 'input window, operand 6, single buffered']
    #allocation9 [shape = 'u8[262144]{0}', space=vmem, size = 0x40000, scoped, tag = 'input window, operand 7']
    #allocation10 [shape = 's32[2]{0}', space=sflag, size = 0x8, scoped, tag = 'scoped memory for denoise_forward.1']
    #allocation11 [shape = 'u8[262144]{0}', space=vmem, size = 0x40000, scoped, tag = 'input window, operand 8']
    #allocation12 [shape = 'u8[8192]{0}', space=vmem, size = 0x2000, scoped, tag = 'input window, operand 9']
    #allocation13 [shape = 's32[2]{0}', space=sflag, size = 0x8, scoped, tag = 'scoped memory for denoise_forward.1']
    #allocation14 [shape = 'u8[65536]{0}', space=vmem, size = 0x10000, scoped, tag = 'input window, operand 10, single buffered']
    %18 = vsyncpa [#allocation5], 0
    %19 = vsyncpa [#allocation7], 0
    %20 = vsyncpa [#allocation10], 0
    %s21 = scalar_lea.sflag [#allocation10], 1
    %22 = vsyncpa %s21, 0
    %23 = vsyncpa [#allocation13], 0
    %s24 = scalar_lea.sflag [#allocation13], 1
    %25 = vsyncpa %s24, 0
    loop: start=0, step=1, limit=6
    $region2: #{denoise_forward.1} parent=1 // loop_pre_header
      _
    $region3: #{denoise_forward.1} parent=1 // loop_header
      %s27 = sphi 0, %s31
      %p28 = scmp.ge.s32.totalorder %s27, 6
      %s34 = sphi 0, %s46
      %s35 = sphi 0, %s42
      %s36 = sphi 0, %s34
      %s37 = sphi 0, %s35
      %s38 = sphi 0, %s36
      %s39 = sphi 0, %s37
      %s49 = sphi 0, %s51
      %s52 = sphi 0, %s49
      %s53 = sphi 0, %s52
      %s69 = sphi 0, %s53
      %s75 = sphi 0, %s77
      %s78 = sphi 0, %s75
      %s79 = sphi 0, %s78
      %s95 = sphi 0, %s79
      %s99 = sphi 0, %s99
      %s101 = sphi 0, %s99
      %s102 = sphi 0, %s101
      %s116 = sphi 0, %s102
      %s120 = sphi 0, %s120
      %s122 = sphi 0, %s120
      %s123 = sphi 0, %s122
      %s137 = sphi 0, %s123
      %s141 = sphi 0, %s141
      %s143 = sphi 0, %s141
      %s144 = sphi 0, %s143
      %s158 = sphi 0, %s144
      %s162 = sphi 0, %s162
      %s164 = sphi 0, %s162
      %s165 = sphi 0, %s164
      %s179 = sphi 0, %s165
      %s183 = sphi 0, %s183
      %s185 = sphi 0, %s183
      %s186 = sphi 0, %s185
      %s200 = sphi 0, %s186
      %s206 = sphi 0, %s208
      %s209 = sphi 0, %s206
      %s210 = sphi 0, %s209
      %s226 = sphi 0, %s210
      %s232 = sphi 0, %s234
      %s235 = sphi 0, %s232
      %s236 = sphi 0, %s235
      %s252 = sphi 0, %s236
      %s258 = sphi 0, %s260
      %s261 = sphi 0, %s258
      %s262 = sphi 0, %s261
      %s278 = sphi 0, %s262
      %s282 = sphi 0, %s282
      %s284 = sphi 0, %s282
      %s285 = sphi 0, %s284
      %s299 = sphi 0, %s285
      %s303 = sphi 0, %s303
      %s305 = sphi 0, %s303
      %s306 = sphi 0, %s305
      %s320 = sphi 0, %s306
      %s324 = sphi 0, %s324
      %s326 = sphi 0, %s324
      %s327 = sphi 0, %s326
      %s341 = sphi 0, %s327
      %s347 = sphi 0, %s349
      %s350 = sphi 0, %s347
      %s351 = sphi 0, %s350
      %s367 = sphi 0, %s351
    $region4: #{denoise_forward.1} parent=1 // loop_header_branch
      %30 = sbr.rel (%p28) target = $region8
    $region5: #{denoise_forward.1} parent=1 // loop_body
      %s32 = ssub.s32 %s27, 1
      %s33 = ssub.s32 %s27, 2
      %s40 = sadd.s32 1, %s35
      %p41 = scmp.ge.s32.totalorder %s40, 4
      %s42 = scalar_select %p41, 0, %s40
      %s43 = sadd.s32 1, %s34
      %s44 = scalar_select %p41, %s43, %s34
      %p45 = scmp.ge.s32.totalorder %s44, 1
      %s46 = scalar_select %p45, 0, %s44
      %s47 = ssub.s32 %s34, %s46
      %p48 = scmp.eq.s32.totalorder %s47, 0
      %s50 = sadd.s32 %s49, 1
      %s51 = scalar_select %p48, %s49, %s50
      %p54 = pneg %p48
      %p55 = scmp.eq.s32.totalorder %s27, 3
      %p56 = por %p54, %p55
      %p57 = scmp.ne.s32.totalorder %s49, %s52
      %p58 = scmp.eq.s32.totalorder %s27, 0
      %p59 = por %p57, %p58
      %p60 = scmp.ne.s32.totalorder %s49, %s52
      %p61 = scmp.eq.s32.totalorder %s32, 3
      %p62 = por %p60, %p61
      %p63 = scmp.ne.s32.totalorder %s52, %s53
      %p64 = scmp.eq.s32.totalorder %s32, 0
      %p65 = por %p63, %p64
      %p66 = scmp.ne.s32.totalorder %s52, %s53
      %p67 = scmp.eq.s32.totalorder %s33, 3
      %p68 = por %p66, %p67
      %p70 = scmp.ne.s32.totalorder %s53, %s69
      %p71 = scmp.eq.s32.totalorder %s33, 0
      %p72 = por %p70, %p71
      %s73 = ssub.s32 %s34, %s46
      %p74 = scmp.eq.s32.totalorder %s73, 0
      %s76 = sadd.s32 %s75, 1
      %s77 = scalar_select %p74, %s75, %s76
      %p80 = pneg %p74
      %p81 = scmp.eq.s32.totalorder %s27, 3
      %p82 = por %p80, %p81
      %p83 = scmp.ne.s32.totalorder %s75, %s78
      %p84 = scmp.eq.s32.totalorder %s27, 0
      %p85 = por %p83, %p84
      %p86 = scmp.ne.s32.totalorder %s75, %s78
      %p87 = scmp.eq.s32.totalorder %s32, 3
      %p88 = por %p86, %p87
      %p89 = scmp.ne.s32.totalorder %s78, %s79
      %p90 = scmp.eq.s32.totalorder %s32, 0
      %p91 = por %p89, %p90
      %p92 = scmp.ne.s32.totalorder %s78, %s79
      %p93 = scmp.eq.s32.totalorder %s33, 3
      %p94 = por %p92, %p93
      %p96 = scmp.ne.s32.totalorder %s79, %s95
      %p97 = scmp.eq.s32.totalorder %s33, 0
      %p98 = por %p96, %p97
      %s100 = sadd.s32 %s99, 1
      %p103 = scmp.eq.s32.totalorder %s27, 3
      %p104 = scmp.ne.s32.totalorder %s99, %s101
      %p105 = scmp.eq.s32.totalorder %s27, 0
      %p106 = por %p104, %p105
      %p107 = scmp.ne.s32.totalorder %s99, %s101
      %p108 = scmp.eq.s32.totalorder %s32, 3
      %p109 = por %p107, %p108
      %p110 = scmp.ne.s32.totalorder %s101, %s102
      %p111 = scmp.eq.s32.totalorder %s32, 0
      %p112 = por %p110, %p111
      %p113 = scmp.ne.s32.totalorder %s101, %s102
      %p114 = scmp.eq.s32.totalorder %s33, 3
      %p115 = por %p113, %p114
      %p117 = scmp.ne.s32.totalorder %s102, %s116
      %p118 = scmp.eq.s32.totalorder %s33, 0
      %p119 = por %p117, %p118
      %s121 = sadd.s32 %s120, 1
      %p124 = scmp.eq.s32.totalorder %s27, 3
      %p125 = scmp.ne.s32.totalorder %s120, %s122
      %p126 = scmp.eq.s32.totalorder %s27, 0
      %p127 = por %p125, %p126
      %p128 = scmp.ne.s32.totalorder %s120, %s122
      %p129 = scmp.eq.s32.totalorder %s32, 3
      %p130 = por %p128, %p129
      %p131 = scmp.ne.s32.totalorder %s122, %s123
      %p132 = scmp.eq.s32.totalorder %s32, 0
      %p133 = por %p131, %p132
      %p134 = scmp.ne.s32.totalorder %s122, %s123
      %p135 = scmp.eq.s32.totalorder %s33, 3
      %p136 = por %p134, %p135
      %p138 = scmp.ne.s32.totalorder %s123, %s137
      %p139 = scmp.eq.s32.totalorder %s33, 0
      %p140 = por %p138, %p139
      %s142 = sadd.s32 %s141, 1
      %p145 = scmp.eq.s32.totalorder %s27, 3
      %p146 = scmp.ne.s32.totalorder %s141, %s143
      %p147 = scmp.eq.s32.totalorder %s27, 0
      %p148 = por %p146, %p147
      %p149 = scmp.ne.s32.totalorder %s141, %s143
      %p150 = scmp.eq.s32.totalorder %s32, 3
      %p151 = por %p149, %p150
      %p152 = scmp.ne.s32.totalorder %s143, %s144
      %p153 = scmp.eq.s32.totalorder %s32, 0
      %p154 = por %p152, %p153
      %p155 = scmp.ne.s32.totalorder %s143, %s144
      %p156 = scmp.eq.s32.totalorder %s33, 3
      %p157 = por %p155, %p156
      %p159 = scmp.ne.s32.totalorder %s144, %s158
      %p160 = scmp.eq.s32.totalorder %s33, 0
      %p161 = por %p159, %p160
      %s163 = sadd.s32 %s162, 1
      %p166 = scmp.eq.s32.totalorder %s27, 3
      %p167 = scmp.ne.s32.totalorder %s162, %s164
      %p168 = scmp.eq.s32.totalorder %s27, 0
      %p169 = por %p167, %p168
      %p170 = scmp.ne.s32.totalorder %s162, %s164
      %p171 = scmp.eq.s32.totalorder %s32, 3
      %p172 = por %p170, %p171
      %p173 = scmp.ne.s32.totalorder %s164, %s165
      %p174 = scmp.eq.s32.totalorder %s32, 0
      %p175 = por %p173, %p174
      %p176 = scmp.ne.s32.totalorder %s164, %s165
      %p177 = scmp.eq.s32.totalorder %s33, 3
      %p178 = por %p176, %p177
      %p180 = scmp.ne.s32.totalorder %s165, %s179
      %p181 = scmp.eq.s32.totalorder %s33, 0
      %p182 = por %p180, %p181
      %s184 = sadd.s32 %s183, 1
      %p187 = scmp.eq.s32.totalorder %s27, 3
      %p188 = scmp.ne.s32.totalorder %s183, %s185
      %p189 = scmp.eq.s32.totalorder %s27, 0
      %p190 = por %p188, %p189
      %p191 = scmp.ne.s32.totalorder %s183, %s185
      %p192 = scmp.eq.s32.totalorder %s32, 3
      %p193 = por %p191, %p192
      %p194 = scmp.ne.s32.totalorder %s185, %s186
      %p195 = scmp.eq.s32.totalorder %s32, 0
      %p196 = por %p194, %p195
      %p197 = scmp.ne.s32.totalorder %s185, %s186
      %p198 = scmp.eq.s32.totalorder %s33, 3
      %p199 = por %p197, %p198
      %p201 = scmp.ne.s32.totalorder %s186, %s200
      %p202 = scmp.eq.s32.totalorder %s33, 0
      %p203 = por %p201, %p202
      %s204 = ssub.s32 %s35, %s42
      %p205 = scmp.eq.s32.totalorder %s204, 0
      %s207 = sadd.s32 %s206, 1
      %s208 = scalar_select %p205, %s206, %s207
      %p211 = pneg %p205
      %p212 = scmp.eq.s32.totalorder %s27, 3
      %p213 = por %p211, %p212
      %p214 = scmp.ne.s32.totalorder %s206, %s209
      %p215 = scmp.eq.s32.totalorder %s27, 0
      %p216 = por %p214, %p215
      %p217 = scmp.ne.s32.totalorder %s206, %s209
      %p218 = scmp.eq.s32.totalorder %s32, 3
      %p219 = por %p217, %p218
      %p220 = scmp.ne.s32.totalorder %s209, %s210
      %p221 = scmp.eq.s32.totalorder %s32, 0
      %p222 = por %p220, %p221
      %p223 = scmp.ne.s32.totalorder %s209, %s210
      %p224 = scmp.eq.s32.totalorder %s33, 3
      %p225 = por %p223, %p224
      %p227 = scmp.ne.s32.totalorder %s210, %s226
      %p228 = scmp.eq.s32.totalorder %s33, 0
      %p229 = por %p227, %p228
      %s230 = ssub.s32 %s35, %s42
      %p231 = scmp.eq.s32.totalorder %s230, 0
      %s233 = sadd.s32 %s232, 1
      %s234 = scalar_select %p231, %s232, %s233
      %p237 = pneg %p231
      %p238 = scmp.eq.s32.totalorder %s27, 3
      %p239 = por %p237, %p238
      %p240 = scmp.ne.s32.totalorder %s232, %s235
      %p241 = scmp.eq.s32.totalorder %s27, 0
      %p242 = por %p240, %p241
      %p243 = scmp.ne.s32.totalorder %s232, %s235
      %p244 = scmp.eq.s32.totalorder %s32, 3
      %p245 = por %p243, %p244
      %p246 = scmp.ne.s32.totalorder %s235, %s236
      %p247 = scmp.eq.s32.totalorder %s32, 0
      %p248 = por %p246, %p247
      %p249 = scmp.ne.s32.totalorder %s235, %s236
      %p250 = scmp.eq.s32.totalorder %s33, 3
      %p251 = por %p249, %p250
      %p253 = scmp.ne.s32.totalorder %s236, %s252
      %p254 = scmp.eq.s32.totalorder %s33, 0
      %p255 = por %p253, %p254
      %s256 = ssub.s32 %s35, %s42
      %p257 = scmp.eq.s32.totalorder %s256, 0
      %s259 = sadd.s32 %s258, 1
      %s260 = scalar_select %p257, %s258, %s259
      %p263 = pneg %p257
      %p264 = scmp.eq.s32.totalorder %s27, 3
      %p265 = por %p263, %p264
      %p266 = scmp.ne.s32.totalorder %s258, %s261
      %p267 = scmp.eq.s32.totalorder %s27, 0
      %p268 = por %p266, %p267
      %p269 = scmp.ne.s32.totalorder %s258, %s261
      %p270 = scmp.eq.s32.totalorder %s32, 3
      %p271 = por %p269, %p270
      %p272 = scmp.ne.s32.totalorder %s261, %s262
      %p273 = scmp.eq.s32.totalorder %s32, 0
      %p274 = por %p272, %p273
      %p275 = scmp.ne.s32.totalorder %s261, %s262
      %p276 = scmp.eq.s32.totalorder %s33, 3
      %p277 = por %p275, %p276
      %p279 = scmp.ne.s32.totalorder %s262, %s278
      %p280 = scmp.eq.s32.totalorder %s33, 0
      %p281 = por %p279, %p280
      %s283 = sadd.s32 %s282, 1
      %p286 = scmp.eq.s32.totalorder %s27, 3
      %p287 = scmp.ne.s32.totalorder %s282, %s284
      %p288 = scmp.eq.s32.totalorder %s27, 0
      %p289 = por %p287, %p288
      %p290 = scmp.ne.s32.totalorder %s282, %s284
      %p291 = scmp.eq.s32.totalorder %s32, 3
      %p292 = por %p290, %p291
      %p293 = scmp.ne.s32.totalorder %s284, %s285
      %p294 = scmp.eq.s32.totalorder %s32, 0
      %p295 = por %p293, %p294
      %p296 = scmp.ne.s32.totalorder %s284, %s285
      %p297 = scmp.eq.s32.totalorder %s33, 3
      %p298 = por %p296, %p297
      %p300 = scmp.ne.s32.totalorder %s285, %s299
      %p301 = scmp.eq.s32.totalorder %s33, 0
      %p302 = por %p300, %p301
      %s304 = sadd.s32 %s303, 1
      %p307 = scmp.eq.s32.totalorder %s27, 3
      %p308 = scmp.ne.s32.totalorder %s303, %s305
      %p309 = scmp.eq.s32.totalorder %s27, 0
      %p310 = por %p308, %p309
      %p311 = scmp.ne.s32.totalorder %s303, %s305
      %p312 = scmp.eq.s32.totalorder %s32, 3
      %p313 = por %p311, %p312
      %p314 = scmp.ne.s32.totalorder %s305, %s306
      %p315 = scmp.eq.s32.totalorder %s32, 0
      %p316 = por %p314, %p315
      %p317 = scmp.ne.s32.totalorder %s305, %s306
      %p318 = scmp.eq.s32.totalorder %s33, 3
      %p319 = por %p317, %p318
      %p321 = scmp.ne.s32.totalorder %s306, %s320
      %p322 = scmp.eq.s32.totalorder %s33, 0
      %p323 = por %p321, %p322
      %s325 = sadd.s32 %s324, 1
      %p328 = scmp.eq.s32.totalorder %s27, 3
      %p329 = scmp.ne.s32.totalorder %s324, %s326
      %p330 = scmp.eq.s32.totalorder %s27, 0
      %p331 = por %p329, %p330
      %p332 = scmp.ne.s32.totalorder %s324, %s326
      %p333 = scmp.eq.s32.totalorder %s32, 3
      %p334 = por %p332, %p333
      %p335 = scmp.ne.s32.totalorder %s326, %s327
      %p336 = scmp.eq.s32.totalorder %s32, 0
      %p337 = por %p335, %p336
      %p338 = scmp.ne.s32.totalorder %s326, %s327
      %p339 = scmp.eq.s32.totalorder %s33, 3
      %p340 = por %p338, %p339
      %p342 = scmp.ne.s32.totalorder %s327, %s341
      %p343 = scmp.eq.s32.totalorder %s33, 0
      %p344 = por %p342, %p343
      %s345 = ssub.s32 %s34, %s46
      %p346 = scmp.eq.s32.totalorder %s345, 0
      %s348 = sadd.s32 %s347, 1
      %s349 = scalar_select %p346, %s347, %s348
      %p352 = pneg %p346
      %p353 = scmp.eq.s32.totalorder %s27, 3
      %p354 = por %p352, %p353
      %p355 = scmp.ne.s32.totalorder %s347, %s350
      %p356 = scmp.eq.s32.totalorder %s27, 0
      %p357 = por %p355, %p356
      %p358 = scmp.ne.s32.totalorder %s347, %s350
      %p359 = scmp.eq.s32.totalorder %s32, 3
      %p360 = por %p358, %p359
      %p361 = scmp.ne.s32.totalorder %s350, %s351
      %p362 = scmp.eq.s32.totalorder %s32, 0
      %p363 = por %p361, %p362
      %p364 = scmp.ne.s32.totalorder %s350, %s351
      %p365 = scmp.eq.s32.totalorder %s33, 3
      %p366 = por %p364, %p365
      %p368 = scmp.ne.s32.totalorder %s351, %s367
      %p369 = scmp.eq.s32.totalorder %s33, 0
      %p370 = por %p368, %p369
      %p371 = scmp.le.s32.totalorder 1, %s27
      %p372 = scmp.lt.s32.totalorder %s27, 5
      %p373 = pnand %p371, %p372
      %p374 = pneg %p373
      // Predicated region
      $region9: #{denoise_forward.1} parent=5 // pred_check
        _
      $region10: #{denoise_forward.1} parent=5 // pred_check_branch
        %376 = sbr.rel (%p373) target = $region12
      $region11: #{denoise_forward.1} parent=5 // pred_region
        %s377 = ssub.s32 %s27, 1
        // Predicated region
        $region13: #{denoise_forward.1} parent=11 // pred_check
          %p378 = pneg %p65
        $region14: #{denoise_forward.1} parent=11 // pred_check_branch
          %380 = sbr.rel (%p378) target = $region16
        $region15: #{denoise_forward.1} parent=11 // pred_region
          %s381 = smul.u32 2, %s36
          %p382 = scmp.lt.s32.totalorder %s381, 1
          %s383 = scalar_select %p382, %s381, 1
          %s384 = smul.addr %s383, 8
          %s385 = scalar_lea.vmem %s0, %s384
          %s386 = smul.u32 2, %s36
        $region16: #{denoise_forward.1} parent=11 // pred_fallthru
          _
        // Predicated region
        $region17: #{denoise_forward.1} parent=11 // pred_check
          %p387 = pneg %p91
        $region18: #{denoise_forward.1} parent=11 // pred_check_branch
          %389 = sbr.rel (%p387) target = $region20
        $region19: #{denoise_forward.1} parent=11 // pred_region
          %s390 = smul.u32 2, %s36
          %p391 = scmp.lt.s32.totalorder %s390, 1
          %s392 = scalar_select %p391, %s390, 1
          %s393 = smul.addr %s392, 8
          %s394 = scalar_lea.vmem %s1, %s393
          %s395 = smul.u32 2, %s36
        $region20: #{denoise_forward.1} parent=11 // pred_fallthru
          _
        // Predicated region
        $region21: #{denoise_forward.1} parent=11 // pred_check
          %p396 = pneg %p112
        $region22: #{denoise_forward.1} parent=11 // pred_check_branch
          %398 = sbr.rel (%p396) target = $region24
        $region23: #{denoise_forward.1} parent=11 // pred_region
          _
        $region24: #{denoise_forward.1} parent=11 // pred_fallthru
          _
        // Predicated region
        $region25: #{denoise_forward.1} parent=11 // pred_check
          %p399 = pneg %p133
        $region26: #{denoise_forward.1} parent=11 // pred_check_branch
          %401 = sbr.rel (%p399) target = $region28
        $region27: #{denoise_forward.1} parent=11 // pred_region
          %s403 = ssub.s32 2048, 2048
          %404 = vsyncadd [#allocation5], %s403
          %s405 = sshll.u32 [#allocation4], 4
          %s406 = int_to_ptr.vmem [resolvable:$true] %s405
          %411 = dma.hbm_to_vmem [thread:$0]  %s3, 2048, %s406, [#allocation5], 128, 128, 8
        $region28: #{denoise_forward.1} parent=11 // pred_fallthru
          _
        // Predicated region
        $region29: #{denoise_forward.1} parent=11 // pred_check
          %p412 = pneg %p154
        $region30: #{denoise_forward.1} parent=11 // pred_check_branch
          %414 = sbr.rel (%p412) target = $region32
        $region31: #{denoise_forward.1} parent=11 // pred_region
          _
        $region32: #{denoise_forward.1} parent=11 // pred_fallthru
          _
        // Predicated region
        $region33: #{denoise_forward.1} parent=11 // pred_check
          %p415 = pneg %p175
        $region34: #{denoise_forward.1} parent=11 // pred_check_branch
          %417 = sbr.rel (%p415) target = $region36
        $region35: #{denoise_forward.1} parent=11 // pred_region
          %s419 = ssub.s32 12288, 12288
          %420 = vsyncadd [#allocation7], %s419
          %s421 = sshll.u32 [#allocation6], 4
          %s422 = int_to_ptr.vmem [resolvable:$true] %s421
          %427 = dma.hbm_to_vmem [thread:$0]  %s5, 12288, %s422, [#allocation7], 128, 128, 8
        $region36: #{denoise_forward.1} parent=11 // pred_fallthru
          _
        // Predicated region
        $region37: #{denoise_forward.1} parent=11 // pred_check
          %p428 = pneg %p196
        $region38: #{denoise_forward.1} parent=11 // pred_check_branch
          %430 = sbr.rel (%p428) target = $region40
        $region39: #{denoise_forward.1} parent=11 // pred_region
          %s432 = ssub.s32 256, 256
          %433 = vsyncadd [#allocation7], %s432
          %s435 = sshll.u32 [#allocation8], 4
          %s436 = int_to_ptr.vmem [resolvable:$true] %s435
          %438 = dma.hbm_to_vmem [thread:$0]  %s6, 256, %s436, [#allocation7]
        $region40: #{denoise_forward.1} parent=11 // pred_fallthru
          _
        // Predicated region
        $region41: #{denoise_forward.1} parent=11 // pred_check
          %p439 = pneg %p295
        $region42: #{denoise_forward.1} parent=11 // pred_check_branch
          %441 = sbr.rel (%p439) target = $region44
        $region43: #{denoise_forward.1} parent=11 // pred_region
          %s443 = ssub.s32 2048, 2048
          %444 = vsyncadd [#allocation13], %s443
          %s445 = sshll.u32 [#allocation14], 4
          %s446 = int_to_ptr.vmem [resolvable:$true] %s445
          %451 = dma.hbm_to_vmem [thread:$0]  %s10, 2048, %s446, [#allocation13], 64, 64, 4
        $region44: #{denoise_forward.1} parent=11 // pred_fallthru
          _
        // Predicated region
        $region45: #{denoise_forward.1} parent=11 // pred_check
          %p452 = pneg %p316
        $region46: #{denoise_forward.1} parent=11 // pred_check_branch
          %454 = sbr.rel (%p452) target = $region48
        $region47: #{denoise_forward.1} parent=11 // pred_region
          _
        $region48: #{denoise_forward.1} parent=11 // pred_fallthru
          _
        // Predicated region
        $region49: #{denoise_forward.1} parent=11 // pred_check
          %p455 = pneg %p337
        $region50: #{denoise_forward.1} parent=11 // pred_check_branch
          %457 = sbr.rel (%p455) target = $region52
        $region51: #{denoise_forward.1} parent=11 // pred_region
          _
        $region52: #{denoise_forward.1} parent=11 // pred_fallthru
          _
      $region12: #{denoise_forward.1} parent=5 // pred_fallthru
        _
      %p458 = scmp.lt.s32.totalorder %s27, 4
      // Predicated region
      $region53: #{denoise_forward.1} parent=5 // pred_check
        %p459 = pneg %p458
      $region54: #{denoise_forward.1} parent=5 // pred_check_branch
        %461 = sbr.rel (%p459) target = $region56
      $region55: #{denoise_forward.1} parent=5 // pred_region
        // Predicated region
        $region57: #{denoise_forward.1} parent=55 // pred_check
          %p462 = pneg %p216
        $region58: #{denoise_forward.1} parent=55 // pred_check_branch
          %464 = sbr.rel (%p462) target = $region60
        $region59: #{denoise_forward.1} parent=55 // pred_region
          %s465 = sand.u32 %s27, 1
          %s466 = scalar_lea.sflag [#allocation10], %s465
          %s467 = sand.u32 %s206, 1
          %s468 = smul.addr %s467, 256
          %s469 = scalar_lea.vmem [#allocation9], %s468
          %s471 = ssub.s32 4096, 4096
          %472 = vsyncadd %s466, %s471
          %s473 = smul.addr %s35, 64
          %s474 = smul.addr %s473, 64
          %s475 = scalar_lea.hbm %s7, %s474
          %s476 = sshll.u32 %s469, 4
          %s477 = int_to_ptr.vmem [resolvable:$true] %s476
          %482 = dma.hbm_to_vmem [thread:$0]  %s475, 4096, %s477, %s466, 128, 128, 8
        $region60: #{denoise_forward.1} parent=55 // pred_fallthru
          _
        // Predicated region
        $region61: #{denoise_forward.1} parent=55 // pred_check
          %p483 = pneg %p242
        $region62: #{denoise_forward.1} parent=55 // pred_check_branch
          %485 = sbr.rel (%p483) target = $region64
        $region63: #{denoise_forward.1} parent=55 // pred_region
          %s486 = sand.u32 %s27, 1
          %s487 = scalar_lea.sflag [#allocation10], %s486
          %s488 = sand.u32 %s232, 1
          %s489 = smul.addr %s488, 256
          %s490 = scalar_lea.vmem [#allocation11], %s489
          %s492 = ssub.s32 4096, 4096
          %493 = vsyncadd %s487, %s492
          %s494 = smul.addr %s35, 64
          %s495 = smul.addr %s494, 64
          %s496 = scalar_lea.hbm %s8, %s495
          %s497 = sshll.u32 %s490, 4
          %s498 = int_to_ptr.vmem [resolvable:$true] %s497
          %503 = dma.hbm_to_vmem [thread:$0]  %s496, 4096, %s498, %s487, 128, 128, 8
        $region64: #{denoise_forward.1} parent=55 // pred_fallthru
          _
        // Predicated region
        $region65: #{denoise_forward.1} parent=55 // pred_check
          %p504 = pneg %p268
        $region66: #{denoise_forward.1} parent=55 // pred_check_branch
          %506 = sbr.rel (%p504) target = $region68
        $region67: #{denoise_forward.1} parent=55 // pred_region
          %s507 = sand.u32 %s27, 1
          %s508 = scalar_lea.sflag [#allocation13], %s507
          %s509 = sand.u32 %s258, 1
          %s510 = smul.addr %s509, 8
          %s511 = scalar_lea.vmem [#allocation12], %s510
          %s513 = ssub.s32 128, 128
          %514 = vsyncadd %s508, %s513
          %s515 = smul.addr %s35, 2
          %s516 = smul.addr %s515, 64
          %s517 = scalar_lea.hbm %s9, %s516
          %s519 = sshll.u32 %s511, 4
          %s520 = int_to_ptr.vmem [resolvable:$true] %s519
          %522 = dma.hbm_to_vmem [thread:$0]  %s517, 128, %s520, %s508
        $region68: #{denoise_forward.1} parent=55 // pred_fallthru
          _
      $region56: #{denoise_forward.1} parent=5 // pred_fallthru
        _
      %p523 = scmp.le.s32.totalorder 1, %s27
      %p524 = scmp.lt.s32.totalorder %s27, 5
      %p525 = pnand %p523, %p524
      %p526 = pneg %p525
      // Predicated region
      $region69: #{denoise_forward.1} parent=5 // pred_check
        _
      $region70: #{denoise_forward.1} parent=5 // pred_check_branch
        %528 = sbr.rel (%p525) target = $region72
      $region71: #{denoise_forward.1} parent=5 // pred_region
        %s529 = ssub.s32 %s27, 1
        // Predicated region
        $region73: #{denoise_forward.1} parent=71 // pred_check
          %p530 = pneg %p133
        $region74: #{denoise_forward.1} parent=71 // pred_check_branch
          %532 = sbr.rel (%p530) target = $region76
        $region75: #{denoise_forward.1} parent=71 // pred_region
          %533 = dma.done [#allocation5], 2048
        $region76: #{denoise_forward.1} parent=71 // pred_fallthru
          _
        // Predicated region
        $region77: #{denoise_forward.1} parent=71 // pred_check
          %p534 = pneg %p175
        $region78: #{denoise_forward.1} parent=71 // pred_check_branch
          %536 = sbr.rel (%p534) target = $region80
        $region79: #{denoise_forward.1} parent=71 // pred_region
          %537 = dma.done [#allocation7], 12288
        $region80: #{denoise_forward.1} parent=71 // pred_fallthru
          _
        // Predicated region
        $region81: #{denoise_forward.1} parent=71 // pred_check
          %p538 = pneg %p196
        $region82: #{denoise_forward.1} parent=71 // pred_check_branch
          %540 = sbr.rel (%p538) target = $region84
        $region83: #{denoise_forward.1} parent=71 // pred_region
          %541 = dma.done [#allocation7], 256
        $region84: #{denoise_forward.1} parent=71 // pred_fallthru
          _
        %s542 = sand.u32 %s32, 1
        %s543 = scalar_lea.sflag [#allocation10], %s542
        %s544 = sand.u32 %s209, 1
        %s545 = smul.addr %s544, 256
        %s546 = scalar_lea.vmem [#allocation9], %s545
        // Predicated region
        $region85: #{denoise_forward.1} parent=71 // pred_check
          %p547 = pneg %p222
        $region86: #{denoise_forward.1} parent=71 // pred_check_branch
          %549 = sbr.rel (%p547) target = $region88
        $region87: #{denoise_forward.1} parent=71 // pred_region
          %550 = dma.done %s543, 4096
        $region88: #{denoise_forward.1} parent=71 // pred_fallthru
          _
        %s551 = sand.u32 %s32, 1
        %s552 = scalar_lea.sflag [#allocation10], %s551
        %s553 = sand.u32 %s235, 1
        %s554 = smul.addr %s553, 256
        %s555 = scalar_lea.vmem [#allocation11], %s554
        // Predicated region
        $region89: #{denoise_forward.1} parent=71 // pred_check
          %p556 = pneg %p248
        $region90: #{denoise_forward.1} parent=71 // pred_check_branch
          %558 = sbr.rel (%p556) target = $region92
        $region91: #{denoise_forward.1} parent=71 // pred_region
          %559 = dma.done %s552, 4096
        $region92: #{denoise_forward.1} parent=71 // pred_fallthru
          _
        %s560 = sand.u32 %s32, 1
        %s561 = scalar_lea.sflag [#allocation13], %s560
        %s562 = sand.u32 %s261, 1
        %s563 = smul.addr %s562, 8
        %s564 = scalar_lea.vmem [#allocation12], %s563
        // Predicated region
        $region93: #{denoise_forward.1} parent=71 // pred_check
          %p565 = pneg %p274
        $region94: #{denoise_forward.1} parent=71 // pred_check_branch
          %567 = sbr.rel (%p565) target = $region96
        $region95: #{denoise_forward.1} parent=71 // pred_region
          %568 = dma.done %s561, 128
        $region96: #{denoise_forward.1} parent=71 // pred_fallthru
          _
        // Predicated region
        $region97: #{denoise_forward.1} parent=71 // pred_check
          %p569 = pneg %p295
        $region98: #{denoise_forward.1} parent=71 // pred_check_branch
          %571 = sbr.rel (%p569) target = $region100
        $region99: #{denoise_forward.1} parent=71 // pred_region
          %572 = dma.done [#allocation13], 2048
        $region100: #{denoise_forward.1} parent=71 // pred_fallthru
          _
        %s573 = smul.u32 2, %s36
        %p574 = scmp.lt.s32.totalorder %s573, 1
        %s575 = scalar_select %p574, %s573, 1
        %s576 = smul.addr %s575, 8
        %s577 = scalar_lea.vmem %s0, %s576
        %p578 = pneg %p65
        %p579 = pneg %p62
        %s580 = smul.u32 2, %s36
        %p581 = scmp.lt.s32.totalorder %s580, 1
        %s582 = scalar_select %p581, %s580, 1
        %s583 = smul.addr %s582, 8
        %s584 = scalar_lea.vmem %s1, %s583
        %p585 = pneg %p91
        %p586 = pneg %p88
        %p587 = pneg %p112
        %p588 = pneg %p109
        %p589 = pneg %p133
        %p590 = pneg %p130
        %p591 = pneg %p154
        %p592 = pneg %p151
        %p593 = pneg %p175
        %p594 = pneg %p172
        %p595 = pneg %p196
        %p596 = pneg %p193
        %s597 = sand.u32 %s32, 1
        %s598 = scalar_lea.sflag [#allocation10], %s597
        %s599 = sand.u32 %s209, 1
        %s600 = smul.addr %s599, 256
        %s601 = scalar_lea.vmem [#allocation9], %s600
        %p602 = pneg %p222
        %p603 = pneg %p219
        %s604 = sand.u32 %s32, 1
        %s605 = scalar_lea.sflag [#allocation10], %s604
        %s606 = sand.u32 %s235, 1
        %s607 = smul.addr %s606, 256
        %s608 = scalar_lea.vmem [#allocation11], %s607
        %p609 = pneg %p248
        %p610 = pneg %p245
        %s611 = sand.u32 %s32, 1
        %s612 = scalar_lea.sflag [#allocation13], %s611
        %s613 = sand.u32 %s261, 1
        %s614 = smul.addr %s613, 8
        %s615 = scalar_lea.vmem [#allocation12], %s614
        %p616 = pneg %p274
        %p617 = pneg %p271
        %p618 = pneg %p295
        %p619 = pneg %p292
        %p620 = pneg %p316
        %p621 = pneg %p313
        %p622 = pneg %p337
        %p623 = pneg %p334
        %p624 = pneg %p363
        %p625 = pneg %p360
        %s626 = smul.u32 2, %s36
        %p627 = scmp.lt.s32.totalorder %s626, 1
        %s628 = scalar_select %p627, %s626, 1
        %s629 = smul.addr %s628, 8
        %s630 = scalar_lea.vmem %s13, %s629
        %s631 = smul.u32 2, %s36
        %p632 = scmp.lt.s32.totalorder %s631, 1
        %s633 = scalar_select %p632, %s631, 1
        %s634 = smul.addr %s633, 8
        %s635 = scalar_lea.vmem %s0, %s634
        %s636 = smul.u32 2, %s36
        %s637 = smul.u32 2, %s36
        %p638 = scmp.lt.s32.totalorder %s637, 1
        %s639 = scalar_select %p638, %s637, 1
        %s640 = smul.addr %s639, 8
        %s641 = scalar_lea.vmem %s1, %s640
        %s642 = smul.u32 2, %s36
        %s643 = smul.u32 2, %s36
        %p644 = scmp.lt.s32.totalorder %s643, 1
        %s645 = scalar_select %p644, %s643, 1
        %s646 = smul.addr %s645, 8
        %s647 = scalar_lea.vmem %s13, %s646
        %s648 = smul.u32 2, %s36
        %p650 = scmp.eq.s32.totalorder %s37, 0
        // Predicated region
        $region101: #{denoise_forward.1} parent=71 // pred_check
          %p651 = pneg %p650
        $region102: #{denoise_forward.1} parent=71 // pred_check_branch
          %653 = sbr.rel (%p651) target = $region104
        $region103: #{denoise_forward.1} parent=71 // pred_region
          %v654 = vld [vmem:[#allocation8] sm:$0x3f]
          %v655 = vld [vmem:[#allocation8 + $0x8] sm:$0x3f]
          %v656 = vld [vmem:[%s641] sm:$0xff]
          %v657 = vld [vmem:[%s641 + $0x8] sm:$0xff]
          %v658 = vld [vmem:[%s2] sm:$0x1]
          %660 = vset.pattern.permute.xlu0 0
          %661 = vperm.xlu0 %660, %v656
          %v662 = vpop.permute.xlu0 %661
          %665 = vset.pattern.permute.xlu0 0
          %666 = vperm.xlu0 %665, %v657
          %v667 = vpop.permute.xlu0 %666
          %v669 = vlaneseq
          %v670 = vshrl.u32 %v669, 7
          %v671 = vsub.s32 0, %v670
          %v672 = vrot.slane %v658, %v671
          %v673 = vmul.f32 %v662, %v672
          %v674 = vmul.f32 %v667, %v672
          %v675 = vld [vmem:[%s2 + $0x1] sm:$0x1]
          %v676 = vlaneseq
          %v677 = vshrl.u32 %v676, 7
          %v678 = vsub.s32 0, %v677
          %v679 = vrot.slane %v675, %v678
          %v680 = vadd.f32 %v673, %v679
          %v681 = vadd.f32 %v674, %v679
          %v682 = vand.u32 2147483647, %v680
          %vm683 = vcmp.le.f32.partialorder %v682, 0.7853982
          %vm684 = vcmp.lt.s32.totalorder %v680, 0
          %v685 = vand.u32 %v680, 2139095040
          %v686 = vshrl.u32 %v685, 23
          %v687 = vsub.s32 %v686, 127
          %v688 = vand.u32 2147483647, %v680
          %v689 = vand.u32 %v688, 8388607
          %v690 = vor.u32 %v689, 8388608
          %v691 = vsub.s32 0, %v690
          %v692 = vadd.s32 %v687, 1
          %vm693 = vcmp.gt.s32.totalorder %v692, 0
          %v694 = vsel %vm693, %v692, 0
          %v695 = vshrl.u32 %v694, 5
          %v696 = vand.u32 %v694, 31
          %v697 = vsub.s32 32, %v696
          %v698 = vshrl.u32 683565275, %v697
          %v699 = vshll.u32 683565275, %v696
          %v700 = vshrl.u32 2475754826, %v697
          %v701 = vor.u32 %v699, %v700
          %v702 = vshll.u32 2475754826, %v696
          %v703 = vshrl.u32 2131351028, %v697
          %v704 = vor.u32 %v702, %v703
          %v705 = vshll.u32 2131351028, %v696
          %v706 = vshrl.u32 2102212464, %v697
          %v707 = vor.u32 %v705, %v706
          %v708 = vshll.u32 2102212464, %v696
          %v709 = vshrl.u32 920167782, %v697
          %v710 = vor.u32 %v708, %v709
          %v711 = vshll.u32 920167782, %v696
          %v712 = vshrl.u32 1326507024, %v697
          %v713 = vor.u32 %v711, %v712
          %vm714 = vcmp.lt.s32.totalorder %v695, 1
          %vm715 = vcmp.lt.s32.totalorder %v695, 2
          %vm716 = vcmp.lt.s32.totalorder %v695, 3
          %vm717 = vcmp.lt.s32.totalorder %v695, 4
          %v718 = vsel %vm714, %v698, %v701
          %v719 = vsel %vm717, %v707, 2102212464
          %v720 = vsel %vm716, %v704, %v719
          %v721 = vsel %vm715, %v718, %v720
          %v722 = vsel %vm714, %v701, %v704
          %v723 = vsel %vm717, %v710, 920167782
          %v724 = vsel %vm716, %v707, %v723
          %v725 = vsel %vm715, %v722, %v724
          %v726 = vsel %vm714, %v704, %v707
          %v727 = vsel %vm717, %v713, 1326507024
          %v728 = vsel %vm716, %v710, %v727
          %v729 = vsel %vm715, %v726, %v728
          %v730 = vshll.u32 %v690, 8
          %v731 = vmul.u32.u64.compose %v730, %v729
          %v732 = vextract.low.u32 %v731
          %v733 = vextract.high.u32 %v731
          %v734 = vmul.u32.u64.compose %v730, %v725
          %v735 = vextract.low.u32 %v734
          %v736 = vextract.high.u32 %v734
          %v737 = vmul.u32 %v730, %v721
          %v738 = vadd.s32 %v733, %v735
          %vm739 = vc.u32 %v733, %v735
          %v740 = vadd.s32 %v736, 1
          %v741 = vsel %vm739, %v740, %v736
          %v742 = vadd.s32 %v737, %v741
          %v743 = vadd.s32 %v742, 536870912
          %v744 = vshrl.u32 %v743, 30
          %v745 = vshll.u32 %v744, 30
          %v746 = vsub.s32 %v742, %v745
          %vm747 = vcmp.lt.s32.totalorder %v746, 0
          %v748 = vsub.s32 0, %v746
          %v749 = vsel %vm747, %v748, %v746
          %v750 = vclz %v749
          %v751 = vsub.s32 %v750, 2
          %vm752 = vcmp.gt.s32.totalorder 0, %v751
          %v753 = vsel %vm752, 0, %v751
          %v754 = vsub.s32 32, %v753
          %v755 = vshll.u32 %v746, %v753
          %v756 = vshrl.u32 %v738, %v754
          %v757 = vor.u32 %v755, %v756
          %v758 = vsub.s32 4294967266, %v753
          %v759 = vadd.s32 %v758, 127
          %v760 = vshll.u32 %v759, 23
          %v761 = vor.u32 4788187, %v760
          %v762 = vand.u32 2147483647, %v761
          %v764 = vcvt.s32.f32 %v757
          %v765 = vmul.f32 %v764, %v762
          %v766 = vxor.u32 %v765, 2147483648
          %v767 = vsel %vm684, %v766, %v765
          %v768 = vsub.s32 4, %v744
          %v769 = vsel %vm684, %v768, %v744
          %v770 = vsel %vm683, %v680, %v767
          %v771 = vsel %vm683, 0, %v769
          %v772 = vcosq.f32.pop %v770
          %v773 = vsinq.f32.pop %v770
          %vm774 = vweird.f32 %v680
          %v775 = vadd.s32 %v771, 3
          %v776 = vand.u32 %v775, 3
          %vm777 = vcmp.lt.s32.totalorder %v776, 2
          %vm778 = vcmp.eq.s32.totalorder %v776, 0
          %v779 = vxor.u32 %v773, 2147483648
          %v780 = vsel %vm778, %v772, %v779
          %vm781 = vcmp.eq.s32.totalorder %v776, 2
          %v782 = vxor.u32 %v772, 2147483648
          %v783 = vsel %vm781, %v782, %v773
          %v784 = vsel %vm777, %v780, %v783
          %v785 = vsel %vm774, nan, %v784
          %v786 = vand.u32 2147483647, %v681
          %vm787 = vcmp.le.f32.partialorder %v786, 0.7853982
          %vm788 = vcmp.lt.s32.totalorder %v681, 0
          %v789 = vand.u32 %v681, 2139095040
          %v790 = vshrl.u32 %v789, 23
          %v791 = vsub.s32 %v790, 127
          %v792 = vand.u32 2147483647, %v681
          %v793 = vand.u32 %v792, 8388607
          %v794 = vor.u32 %v793, 8388608
          %v795 = vsub.s32 0, %v794
          %v796 = vadd.s32 %v791, 1
          %vm797 = vcmp.gt.s32.totalorder %v796, 0
          %v798 = vsel %vm797, %v796, 0
          %v799 = vshrl.u32 %v798, 5
          %v800 = vand.u32 %v798, 31
          %v801 = vsub.s32 32, %v800
          %v802 = vshrl.u32 683565275, %v801
          %v803 = vshll.u32 683565275, %v800
          %v804 = vshrl.u32 2475754826, %v801
          %v805 = vor.u32 %v803, %v804
          %v806 = vshll.u32 2475754826, %v800
          %v807 = vshrl.u32 2131351028, %v801
          %v808 = vor.u32 %v806, %v807
          %v809 = vshll.u32 2131351028, %v800
          %v810 = vshrl.u32 2102212464, %v801
          %v811 = vor.u32 %v809, %v810
          %v812 = vshll.u32 2102212464, %v800
          %v813 = vshrl.u32 920167782, %v801
          %v814 = vor.u32 %v812, %v813
          %v815 = vshll.u32 920167782, %v800
          %v816 = vshrl.u32 1326507024, %v801
          %v817 = vor.u32 %v815, %v816
          %vm818 = vcmp.lt.s32.totalorder %v799, 1
          %vm819 = vcmp.lt.s32.totalorder %v799, 2
          %vm820 = vcmp.lt.s32.totalorder %v799, 3
          %vm821 = vcmp.lt.s32.totalorder %v799, 4
          %v822 = vsel %vm818, %v802, %v805
          %v823 = vsel %vm821, %v811, 2102212464
          %v824 = vsel %vm820, %v808, %v823
          %v825 = vsel %vm819, %v822, %v824
          %v826 = vsel %vm818, %v805, %v808
          %v827 = vsel %vm821, %v814, 920167782
          %v828 = vsel %vm820, %v811, %v827
          %v829 = vsel %vm819, %v826, %v828
          %v830 = vsel %vm818, %v808, %v811
          %v831 = vsel %vm821, %v817, 1326507024
          %v832 = vsel %vm820, %v814, %v831
          %v833 = vsel %vm819, %v830, %v832
          %v834 = vshll.u32 %v794, 8
          %v835 = vmul.u32.u64.compose %v834, %v833
          %v836 = vextract.low.u32 %v835
          %v837 = vextract.high.u32 %v835
          %v838 = vmul.u32.u64.compose %v834, %v829
          %v839 = vextract.low.u32 %v838
          %v840 = vextract.high.u32 %v838
          %v841 = vmul.u32 %v834, %v825
          %v842 = vadd.s32 %v837, %v839
          %vm843 = vc.u32 %v837, %v839
          %v844 = vadd.s32 %v840, 1
          %v845 = vsel %vm843, %v844, %v840
          %v846 = vadd.s32 %v841, %v845
          %v847 = vadd.s32 %v846, 536870912
          %v848 = vshrl.u32 %v847, 30
          %v849 = vshll.u32 %v848, 30
          %v850 = vsub.s32 %v846, %v849
          %vm851 = vcmp.lt.s32.totalorder %v850, 0
          %v852 = vsub.s32 0, %v850
          %v853 = vsel %vm851, %v852, %v850
          %v854 = vclz %v853
          %v855 = vsub.s32 %v854, 2
          %vm856 = vcmp.gt.s32.totalorder 0, %v855
          %v857 = vsel %vm856, 0, %v855
          %v858 = vsub.s32 32, %v857
          %v859 = vshll.u32 %v850, %v857
          %v860 = vshrl.u32 %v842, %v858
          %v861 = vor.u32 %v859, %v860
          %v862 = vsub.s32 4294967266, %v857
          %v863 = vadd.s32 %v862, 127
          %v864 = vshll.u32 %v863, 23
          %v865 = vor.u32 4788187, %v864
          %v866 = vand.u32 2147483647, %v865
          %v868 = vcvt.s32.f32 %v861
          %v869 = vmul.f32 %v868, %v866
          %v870 = vxor.u32 %v869, 2147483648
          %v871 = vsel %vm788, %v870, %v869
          %v872 = vsub.s32 4, %v848
          %v873 = vsel %vm788, %v872, %v848
          %v874 = vsel %vm787, %v681, %v871
          %v875 = vsel %vm787, 0, %v873
          %v876 = vcosq.f32.pop %v874
          %v877 = vsinq.f32.pop %v874
          %vm878 = vweird.f32 %v681
          %v879 = vadd.s32 %v875, 3
          %v880 = vand.u32 %v879, 3
          %vm881 = vcmp.lt.s32.totalorder %v880, 2
          %vm882 = vcmp.eq.s32.totalorder %v880, 0
          %v883 = vxor.u32 %v877, 2147483648
          %v884 = vsel %vm882, %v876, %v883
          %vm885 = vcmp.eq.s32.totalorder %v880, 2
          %v886 = vxor.u32 %v876, 2147483648
          %v887 = vsel %vm885, %v886, %v877
          %v888 = vsel %vm881, %v884, %v887
          %v889 = vsel %vm878, nan, %v888
          %v890 = vld [vmem:[#allocation4] sm:$0xff]
          %v891 = vld [vmem:[#allocation4 + $0x8] sm:$0xff]
          %v892 = vld [vmem:[#allocation4 + $0x10] sm:$0xff]
          %v893 = vld [vmem:[#allocation4 + $0x18] sm:$0xff]
          %v894 = vld [vmem:[#allocation4 + $0x20] sm:$0xff]
          %v895 = vld [vmem:[#allocation4 + $0x28] sm:$0xff]
          %v896 = vld [vmem:[#allocation4 + $0x30] sm:$0xff]
          %v897 = vld [vmem:[#allocation4 + $0x38] sm:$0xff]
          %v898 = vld [vmem:[#allocation4 + $0x40] sm:$0xff]
          %v899 = vld [vmem:[#allocation4 + $0x48] sm:$0xff]
          %v900 = vld [vmem:[#allocation4 + $0x50] sm:$0xff]
          %v901 = vld [vmem:[#allocation4 + $0x58] sm:$0xff]
          %v902 = vld [vmem:[#allocation4 + $0x60] sm:$0xff]
          %v903 = vld [vmem:[#allocation4 + $0x68] sm:$0xff]
          %v904 = vld [vmem:[#allocation4 + $0x70] sm:$0xff]
          %v905 = vld [vmem:[#allocation4 + $0x78] sm:$0xff]
          %v906 = vpack.c.bf16 %v889, %v785
          %v907 = vlaneseq
          %v908 = vshrl.u32 %v907, 7
          %v909 = vsub.s32 0, %v908
          %v910 = vrot.slane %v654, %v909
          %v911 = vlaneseq
          %v912 = vshrl.u32 %v911, 7
          %v913 = vsub.s32 0, %v912
          %v914 = vrot.slane %v655, %v913
          %v931 = vunpack.c.l.b16 %v890
          %v932 = vunpack.c.h.b16 %v890
          %v933 = vunpack.c.l.b16 %v891
          %v934 = vunpack.c.h.b16 %v891
          %v935 = vunpack.c.l.b16 %v892
          %v936 = vunpack.c.h.b16 %v892
          %v937 = vunpack.c.l.b16 %v893
          %v938 = vunpack.c.h.b16 %v893
          %v939 = vunpack.c.l.b16 %v894
          %v940 = vunpack.c.h.b16 %v894
          %v941 = vunpack.c.l.b16 %v895
          %v942 = vunpack.c.h.b16 %v895
          %v943 = vunpack.c.l.b16 %v896
          %v944 = vunpack.c.h.b16 %v896
          %v945 = vunpack.c.l.b16 %v897
          %v946 = vunpack.c.h.b16 %v897
          %v947 = vunpack.c.l.b16 %v898
          %v948 = vunpack.c.h.b16 %v898
          %v949 = vunpack.c.l.b16 %v899
          %v950 = vunpack.c.h.b16 %v899
          %v951 = vunpack.c.l.b16 %v900
          %v952 = vunpack.c.h.b16 %v900
          %v953 = vunpack.c.l.b16 %v901
          %v954 = vunpack.c.h.b16 %v901
          %v955 = vunpack.c.l.b16 %v902
          %v956 = vunpack.c.h.b16 %v902
          %v957 = vunpack.c.l.b16 %v903
          %v958 = vunpack.c.h.b16 %v903
          %v959 = vunpack.c.l.b16 %v904
          %v960 = vunpack.c.h.b16 %v904
          %v961 = vunpack.c.l.b16 %v905
          %v962 = vunpack.c.h.b16 %v905
          %v963 = vpack.c.b16 %v933, %v931
          %v964 = vpack.c.b16 %v934, %v932
          %v965 = vpack.c.b16 %v937, %v935
          %v966 = vpack.c.b16 %v938, %v936
          %v967 = vpack.c.b16 %v941, %v939
          %v968 = vpack.c.b16 %v942, %v940
          %v969 = vpack.c.b16 %v945, %v943
          %v970 = vpack.c.b16 %v946, %v944
          %v971 = vpack.c.b16 %v949, %v947
          %v972 = vpack.c.b16 %v950, %v948
          %v973 = vpack.c.b16 %v953, %v951
          %v974 = vpack.c.b16 %v954, %v952
          %v975 = vpack.c.b16 %v957, %v955
          %v976 = vpack.c.b16 %v958, %v956
          %v977 = vpack.c.b16 %v961, %v959
          %v978 = vpack.c.b16 %v962, %v960
          %995 = vmatprep.subr.bf16.mxu0 %v964
          %996 = vmatpush1.bf16.msra.mxu0 %v963
          %997 = vmatprep.subr.bf16.mxu0 %v966
          %998 = vmatpush1.bf16.msra.mxu0 %v965
          %999 = vmatprep.subr.bf16.mxu0 %v968
          %1000 = vmatpush1.bf16.msra.mxu0 %v967
          %1001 = vmatprep.subr.bf16.mxu0 %v970
          %1002 = vmatpush1.bf16.msra.mxu0 %v969
          %1003 = vmatprep.subr.bf16.mxu0 %v972
          %1004 = vmatpush1.bf16.msra.mxu0 %v971
          %1005 = vmatprep.subr.bf16.mxu0 %v974
          %1006 = vmatpush1.bf16.msra.mxu0 %v973
          %1007 = vmatprep.subr.bf16.mxu0 %v976
          %1008 = vmatpush1.bf16.msra.mxu0 %v975
          %1009 = vmatprep.subr.bf16.mxu0 %v978
          %1010 = vmatpush1.bf16.msra.mxu0 %v977
          %1011 = vmatprep.subr.bf16.mxu0 0
          %1012 = vmatpush1.bf16.msra.mxu0 0
          %1013 = vmatprep.subr.bf16.mxu0 0
          %1014 = vmatpush1.bf16.msra.mxu0 0
          %1015 = vmatprep.subr.bf16.mxu0 0
          %1016 = vmatpush1.bf16.msra.mxu0 0
          %1017 = vmatprep.subr.bf16.mxu0 0
          %1018 = vmatpush1.bf16.msra.mxu0 0
          %1019 = vmatprep.subr.bf16.mxu0 0
          %1020 = vmatpush1.bf16.msra.mxu0 0
          %1021 = vmatprep.subr.bf16.mxu0 0
          %1022 = vmatpush1.bf16.msra.mxu0 0
          %1023 = vmatprep.subr.bf16.mxu0 0
          %1024 = vmatpush1.bf16.msra.mxu0 0
          %1025 = vmatprep.subr.bf16.mxu0 0
          %1026 = vmatpush1.bf16.msra.mxu0 0
          %1027 = vmatprep.mubr.bf16.mxu0 0
          %1028 = vmatmul.mubr.bf16.gmra.mrb[0].mxu0 %v906
          %v1029 = vpop.f32.mrb[0].mxu0
          %v1030 = vadd.f32 %v910, %v1029
          %v1031 = vpop.f32.mrb[0].mxu0
          %v1032 = vadd.f32 %v914, %v1031
          %v1033 = vpop.f32.mrb[0].mxu0
          %v1034 = vadd.f32 %v910, %v1033
          %v1035 = vpop.f32.mrb[0].mxu0
          %v1036 = vadd.f32 %v914, %v1035
          %1037 = vdwg.mxu0
          %v1038 = vmul.f32 %v1030, 0.5
          %v1039 = vmul.f32 %v1032, 0.5
          %v1040 = vmul.f32 %v1034, 0.5
          %v1041 = vmul.f32 %v1036, 0.5
          %v1042 = vmul.f32 %v1030, 0.70710677
          %v1043 = vmul.f32 %v1032, 0.70710677
          %v1044 = vmul.f32 %v1034, 0.70710677
          %v1045 = vmul.f32 %v1036, 0.70710677
          %v1046 = verf.f32.pop %v1042
          %v1047 = verf.f32.pop %v1043
          %v1048 = verf.f32.pop %v1044
          %v1049 = verf.f32.pop %v1045
          %v1050 = vadd.f32 %v1046, 1.0
          %v1051 = vadd.f32 %v1047, 1.0
          %v1052 = vadd.f32 %v1048, 1.0
          %v1053 = vadd.f32 %v1049, 1.0
          %v1054 = vmul.f32 %v1038, %v1050
          %v1055 = vmul.f32 %v1039, %v1051
          %v1056 = vmul.f32 %v1040, %v1052
          %v1057 = vmul.f32 %v1041, %v1053
          %v1058 = vadd.f32 %v1054, %v1055
          %1059 = vadd.xlane.f32.xlu0 %v1058
          %v1060 = vpop.xlane.xlu0 %1059
          %v1061 = vadd.f32 %v1056, %v1057
          %1062 = vadd.xlane.f32.xlu0 %v1061
          %v1063 = vpop.xlane.xlu0 %1062
          %v1064 = vrcp.pop 256.0
          %v1065 = vmul.f32 %v1060, %v1064
          %v1066 = vmul.f32 %v1063, %v1064
          %v1067 = vsub.f32 %v1054, %v1065
          %v1068 = vsub.f32 %v1055, %v1065
          %v1069 = vsub.f32 %v1056, %v1066
          %v1070 = vsub.f32 %v1057, %v1066
          %v1071 = vmul.f32 %v1067, %v1067
          %v1072 = vmul.f32 %v1068, %v1068
          %v1073 = vmul.f32 %v1069, %v1069
          %v1074 = vmul.f32 %v1070, %v1070
          %v1075 = vadd.f32 %v1071, %v1072
          %1076 = vadd.xlane.f32.xlu0 %v1075
          %v1077 = vpop.xlane.xlu0 %1076
          %v1078 = vadd.f32 %v1073, %v1074
          %1079 = vadd.xlane.f32.xlu0 %v1078
          %v1080 = vpop.xlane.xlu0 %1079
          %v1081 = vmul.f32 %v1077, %v1064
          %v1082 = vmul.f32 %v1080, %v1064
          %v1083 = vadd.f32 %v1081, 1e-05
          %v1084 = vadd.f32 %v1082, 1e-05
          %v1085 = vrsqrt.pop %v1083
          %v1086 = vrsqrt.pop %v1084
          %v1087 = vmul.f32 %v1067, %v1085
          %v1088 = vmul.f32 %v1068, %v1085
          %v1089 = vmul.f32 %v1069, %v1086
          %v1090 = vmul.f32 %v1070, %v1086
          %v1091 = vld [vmem:[#allocation6] sm:$0xff]
          %v1092 = vld [vmem:[#allocation6 + $0x8] sm:$0xff]
          %v1093 = vld [vmem:[#allocation6 + $0x10] sm:$0xff]
          %v1094 = vld [vmem:[#allocation6 + $0x18] sm:$0xff]
          %v1095 = vld [vmem:[#allocation6 + $0x20] sm:$0xff]
          %v1096 = vld [vmem:[#allocation6 + $0x28] sm:$0xff]
          %v1097 = vld [vmem:[#allocation6 + $0x30] sm:$0xff]
          %v1098 = vld [vmem:[#allocation6 + $0x38] sm:$0xff]
          %v1099 = vld [vmem:[#allocation6 + $0x40] sm:$0xff]
          %v1100 = vld [vmem:[#allocation6 + $0x48] sm:$0xff]
          %v1101 = vld [vmem:[#allocation6 + $0x50] sm:$0xff]
          %v1102 = vld [vmem:[#allocation6 + $0x58] sm:$0xff]
          %v1103 = vld [vmem:[#allocation6 + $0x60] sm:$0xff]
          %v1104 = vld [vmem:[#allocation6 + $0x68] sm:$0xff]
          %v1105 = vld [vmem:[#allocation6 + $0x70] sm:$0xff]
          %v1106 = vld [vmem:[#allocation6 + $0x78] sm:$0xff]
          %v1107 = vld [vmem:[#allocation6 + $0x80] sm:$0xff]
          %v1108 = vld [vmem:[#allocation6 + $0x88] sm:$0xff]
          %v1109 = vld [vmem:[#allocation6 + $0x90] sm:$0xff]
          %v1110 = vld [vmem:[#allocation6 + $0x98] sm:$0xff]
          %v1111 = vld [vmem:[#allocation6 + $0xa0] sm:$0xff]
          %v1112 = vld [vmem:[#allocation6 + $0xa8] sm:$0xff]
          %v1113 = vld [vmem:[#allocation6 + $0xb0] sm:$0xff]
          %v1114 = vld [vmem:[#allocation6 + $0xb8] sm:$0xff]
          %v1115 = vld [vmem:[#allocation6 + $0xc0] sm:$0xff]
          %v1116 = vld [vmem:[#allocation6 + $0xc8] sm:$0xff]
          %v1117 = vld [vmem:[#allocation6 + $0xd0] sm:$0xff]
          %v1118 = vld [vmem:[#allocation6 + $0xd8] sm:$0xff]
          %v1119 = vld [vmem:[#allocation6 + $0xe0] sm:$0xff]
          %v1120 = vld [vmem:[#allocation6 + $0xe8] sm:$0xff]
          %v1121 = vld [vmem:[#allocation6 + $0xf0] sm:$0xff]
          %v1122 = vld [vmem:[#allocation6 + $0xf8] sm:$0xff]
          %v1123 = vpack.c.bf16 %v1089, %v1087
          %v1124 = vpack.c.bf16 %v1090, %v1088
          %v1125 = vlaneseq
          %v1126 = vshrl.u32 %v1125, 7
          %v1127 = vsub.s32 1, %v1126
          %v1128 = vrot.slane %v654, %v1127
          %v1129 = vlaneseq
          %v1130 = vshrl.u32 %v1129, 7
          %v1131 = vsub.s32 1, %v1130
          %v1132 = vrot.slane %v655, %v1131
          %v1165 = vunpack.c.l.b16 %v1091
          %v1166 = vunpack.c.h.b16 %v1091
          %v1167 = vunpack.c.l.b16 %v1092
          %v1168 = vunpack.c.h.b16 %v1092
          %v1169 = vunpack.c.l.b16 %v1093
          %v1170 = vunpack.c.h.b16 %v1093
          %v1171 = vunpack.c.l.b16 %v1094
          %v1172 = vunpack.c.h.b16 %v1094
          %v1173 = vunpack.c.l.b16 %v1095
          %v1174 = vunpack.c.h.b16 %v1095
          %v1175 = vunpack.c.l.b16 %v1096
          %v1176 = vunpack.c.h.b16 %v1096
          %v1177 = vunpack.c.l.b16 %v1097
          %v1178 = vunpack.c.h.b16 %v1097
          %v1179 = vunpack.c.l.b16 %v1098
          %v1180 = vunpack.c.h.b16 %v1098
          %v1181 = vunpack.c.l.b16 %v1099
          %v1182 = vunpack.c.h.b16 %v1099
          %v1183 = vunpack.c.l.b16 %v1100
          %v1184 = vunpack.c.h.b16 %v1100
          %v1185 = vunpack.c.l.b16 %v1101
          %v1186 = vunpack.c.h.b16 %v1101
          %v1187 = vunpack.c.l.b16 %v1102
          %v1188 = vunpack.c.h.b16 %v1102
          %v1189 = vunpack.c.l.b16 %v1103
          %v1190 = vunpack.c.h.b16 %v1103
          %v1191 = vunpack.c.l.b16 %v1104
          %v1192 = vunpack.c.h.b16 %v1104
          %v1193 = vunpack.c.l.b16 %v1105
          %v1194 = vunpack.c.h.b16 %v1105
          %v1195 = vunpack.c.l.b16 %v1106
          %v1196 = vunpack.c.h.b16 %v1106
          %v1197 = vunpack.c.l.b16 %v1107
          %v1198 = vunpack.c.h.b16 %v1107
          %v1199 = vunpack.c.l.b16 %v1108
          %v1200 = vunpack.c.h.b16 %v1108
          %v1201 = vunpack.c.l.b16 %v1109
          %v1202 = vunpack.c.h.b16 %v1109
          %v1203 = vunpack.c.l.b16 %v1110
          %v1204 = vunpack.c.h.b16 %v1110
          %v1205 = vunpack.c.l.b16 %v1111
          %v1206 = vunpack.c.h.b16 %v1111
          %v1207 = vunpack.c.l.b16 %v1112
          %v1208 = vunpack.c.h.b16 %v1112
          %v1209 = vunpack.c.l.b16 %v1113
          %v1210 = vunpack.c.h.b16 %v1113
          %v1211 = vunpack.c.l.b16 %v1114
          %v1212 = vunpack.c.h.b16 %v1114
          %v1213 = vunpack.c.l.b16 %v1115
          %v1214 = vunpack.c.h.b16 %v1115
          %v1215 = vunpack.c.l.b16 %v1116
          %v1216 = vunpack.c.h.b16 %v1116
          %v1217 = vunpack.c.l.b16 %v1117
          %v1218 = vunpack.c.h.b16 %v1117
          %v1219 = vunpack.c.l.b16 %v1118
          %v1220 = vunpack.c.h.b16 %v1118
          %v1221 = vunpack.c.l.b16 %v1119
          %v1222 = vunpack.c.h.b16 %v1119
          %v1223 = vunpack.c.l.b16 %v1120
          %v1224 = vunpack.c.h.b16 %v1120
          %v1225 = vunpack.c.l.b16 %v1121
          %v1226 = vunpack.c.h.b16 %v1121
          %v1227 = vunpack.c.l.b16 %v1122
          %v1228 = vunpack.c.h.b16 %v1122
          %v1229 = vpack.c.b16 %v1167, %v1165
          %v1230 = vpack.c.b16 %v1168, %v1166
          %v1231 = vpack.c.b16 %v1171, %v1169
          %v1232 = vpack.c.b16 %v1172, %v1170
          %v1233 = vpack.c.b16 %v1175, %v1173
          %v1234 = vpack.c.b16 %v1176, %v1174
          %v1235 = vpack.c.b16 %v1179, %v1177
          %v1236 = vpack.c.b16 %v1180, %v1178
          %v1237 = vpack.c.b16 %v1183, %v1181
          %v1238 = vpack.c.b16 %v1184, %v1182
          %v1239 = vpack.c.b16 %v1187, %v1185
          %v1240 = vpack.c.b16 %v1188, %v1186
          %v1241 = vpack.c.b16 %v1191, %v1189
          %v1242 = vpack.c.b16 %v1192, %v1190
          %v1243 = vpack.c.b16 %v1195, %v1193
          %v1244 = vpack.c.b16 %v1196, %v1194
          %v1245 = vpack.c.b16 %v1199, %v1197
          %v1246 = vpack.c.b16 %v1200, %v1198
          %v1247 = vpack.c.b16 %v1203, %v1201
          %v1248 = vpack.c.b16 %v1204, %v1202
          %v1249 = vpack.c.b16 %v1207, %v1205
          %v1250 = vpack.c.b16 %v1208, %v1206
          %v1251 = vpack.c.b16 %v1211, %v1209
          %v1252 = vpack.c.b16 %v1212, %v1210
          %v1253 = vpack.c.b16 %v1215, %v1213
          %v1254 = vpack.c.b16 %v1216, %v1214
          %v1255 = vpack.c.b16 %v1219, %v1217
          %v1256 = vpack.c.b16 %v1220, %v1218
          %v1257 = vpack.c.b16 %v1223, %v1221
          %v1258 = vpack.c.b16 %v1224, %v1222
          %v1259 = vpack.c.b16 %v1227, %v1225
          %v1260 = vpack.c.b16 %v1228, %v1226
          %1293 = vmatprep.subr.bf16.mxu0 %v1230
          %1294 = vmatpush1.bf16.msra.mxu0 %v1229
          %1295 = vmatprep.subr.bf16.mxu0 %v1232
          %1296 = vmatpush1.bf16.msra.mxu0 %v1231
          %1297 = vmatprep.subr.bf16.mxu0 %v1234
          %1298 = vmatpush1.bf16.msra.mxu0 %v1233
          %1299 = vmatprep.subr.bf16.mxu0 %v1236
          %1300 = vmatpush1.bf16.msra.mxu0 %v1235
          %1301 = vmatprep.subr.bf16.mxu0 %v1238
          %1302 = vmatpush1.bf16.msra.mxu0 %v1237
          %1303 = vmatprep.subr.bf16.mxu0 %v1240
          %1304 = vmatpush1.bf16.msra.mxu0 %v1239
          %1305 = vmatprep.subr.bf16.mxu0 %v1242
          %1306 = vmatpush1.bf16.msra.mxu0 %v1241
          %1307 = vmatprep.subr.bf16.mxu0 %v1244
          %1308 = vmatpush1.bf16.msra.mxu0 %v1243
          %1309 = vmatprep.subr.bf16.mxu0 %v1246
          %1310 = vmatpush1.bf16.msra.mxu0 %v1245
          %1311 = vmatprep.subr.bf16.mxu0 %v1248
          %1312 = vmatpush1.bf16.msra.mxu0 %v1247
          %1313 = vmatprep.subr.bf16.mxu0 %v1250
          %1314 = vmatpush1.bf16.msra.mxu0 %v1249
          %1315 = vmatprep.subr.bf16.mxu0 %v1252
          %1316 = vmatpush1.bf16.msra.mxu0 %v1251
          %1317 = vmatprep.subr.bf16.mxu0 %v1254
          %1318 = vmatpush1.bf16.msra.mxu0 %v1253
          %1319 = vmatprep.subr.bf16.mxu0 %v1256
          %1320 = vmatpush1.bf16.msra.mxu0 %v1255
          %1321 = vmatprep.subr.bf16.mxu0 %v1258
          %1322 = vmatpush1.bf16.msra.mxu0 %v1257
          %1323 = vmatprep.subr.bf16.mxu0 %v1260
          %1324 = vmatpush1.bf16.msra.mxu0 %v1259
          %1325 = vmatprep.mubr.bf16.mxu0 %v1124
          %1326 = vmatmul.mubr.bf16.gmra.mrb[0].mxu0 %v1123
          %v1327 = vpop.f32.mrb[0].mxu0
          %v1328 = vadd.f32 %v1128, %v1327
          %v1329 = vpop.f32.mrb[0].mxu0
          %v1330 = vadd.f32 %v1132, %v1329
          %v1331 = vpop.f32.mrb[0].mxu0
          %v1332 = vadd.f32 %v1128, %v1331
          %v1333 = vpop.f32.mrb[0].mxu0
          %v1334 = vadd.f32 %v1132, %v1333
          %1335 = vdwg.mxu0
          %v1336 = vmul.f32 %v1328, 0.5
          %v1337 = vmul.f32 %v1330, 0.5
          %v1338 = vmul.f32 %v1332, 0.5
          %v1339 = vmul.f32 %v1334, 0.5
          %v1340 = vmul.f32 %v1328, 0.70710677
          %v1341 = vmul.f32 %v1330, 0.70710677
          %v1342 = vmul.f32 %v1332, 0.70710677
          %v1343 = vmul.f32 %v1334, 0.70710677
          %v1344 = verf.f32.pop %v1340
          %v1345 = verf.f32.pop %v1341
          %v1346 = verf.f32.pop %v1342
          %v1347 = verf.f32.pop %v1343
          %v1348 = vadd.f32 %v1344, 1.0
          %v1349 = vadd.f32 %v1345, 1.0
          %v1350 = vadd.f32 %v1346, 1.0
          %v1351 = vadd.f32 %v1347, 1.0
          %v1352 = vmul.f32 %v1336, %v1348
          %v1353 = vmul.f32 %v1337, %v1349
          %v1354 = vmul.f32 %v1338, %v1350
          %v1355 = vmul.f32 %v1339, %v1351
          %v1356 = vadd.f32 %v1352, %v1353
          %1357 = vadd.xlane.f32.xlu0 %v1356
          %v1358 = vpop.xlane.xlu0 %1357
          %v1359 = vadd.f32 %v1354, %v1355
          %1360 = vadd.xlane.f32.xlu0 %v1359
          %v1361 = vpop.xlane.xlu0 %1360
          %v1362 = vmul.f32 %v1358, %v1064
          %v1363 = vmul.f32 %v1361, %v1064
          %v1364 = vsub.f32 %v1352, %v1362
          %v1365 = vsub.f32 %v1353, %v1362
          %v1366 = vsub.f32 %v1354, %v1363
          %v1367 = vsub.f32 %v1355, %v1363
          %v1368 = vmul.f32 %v1364, %v1364
          %v1369 = vmul.f32 %v1365, %v1365
          %v1370 = vmul.f32 %v1366, %v1366
          %v1371 = vmul.f32 %v1367, %v1367
          %v1372 = vadd.f32 %v1368, %v1369
          %1373 = vadd.xlane.f32.xlu0 %v1372
          %v1374 = vpop.xlane.xlu0 %1373
          %v1375 = vadd.f32 %v1370, %v1371
          %1376 = vadd.xlane.f32.xlu0 %v1375
          %v1377 = vpop.xlane.xlu0 %1376
          %v1378 = vmul.f32 %v1374, %v1064
          %v1379 = vmul.f32 %v1377, %v1064
          %v1380 = vadd.f32 %v1378, 1e-05
          %v1381 = vadd.f32 %v1379, 1e-05
          %v1382 = vrsqrt.pop %v1380
          %v1383 = vrsqrt.pop %v1381
          %v1384 = vmul.f32 %v1364, %v1382
          %v1385 = vmul.f32 %v1365, %v1382
          %v1386 = vmul.f32 %v1366, %v1383
          %v1387 = vmul.f32 %v1367, %v1383
          %1388 = vst [vmem:[#allocation3] sm:$0xff] %v1384
          %1389 = vst [vmem:[#allocation3 + $0x8] sm:$0xff] %v1385
          %1390 = vst [vmem:[#allocation3 + $0x10] sm:$0xff] %v1386
          %1391 = vst [vmem:[#allocation3 + $0x18] sm:$0xff] %v1387
          %v1392 = vld [vmem:[%s635] sm:$0xff]
          %v1393 = vld [vmem:[%s635 + $0x8] sm:$0xff]
          %v1394 = vld [vmem:[%s4] sm:$0xff]
          %v1395 = vld [vmem:[%s4 + $0x8] sm:$0xff]
          %v1396 = vld [vmem:[%s4 + $0x10] sm:$0xff]
          %v1397 = vld [vmem:[%s4 + $0x18] sm:$0xff]
          %v1398 = vpack.c.bf16 %v1393, %v1392
          %v1399 = vlaneseq
          %v1400 = vshrl.u32 %v1399, 7
          %v1401 = vsub.s32 2, %v1400
          %v1402 = vrot.slane %v654, %v1401
          %v1403 = vlaneseq
          %v1404 = vshrl.u32 %v1403, 7
          %v1405 = vsub.s32 2, %v1404
          %v1406 = vrot.slane %v655, %v1405
          %v1411 = vunpack.c.l.b16 %v1394
          %v1412 = vunpack.c.h.b16 %v1394
          %v1413 = vunpack.c.l.b16 %v1395
          %v1414 = vunpack.c.h.b16 %v1395
          %v1415 = vunpack.c.l.b16 %v1396
          %v1416 = vunpack.c.h.b16 %v1396
          %v1417 = vunpack.c.l.b16 %v1397
          %v1418 = vunpack.c.h.b16 %v1397
          %v1419 = vpack.c.b16 %v1413, %v1411
          %v1420 = vpack.c.b16 %v1414, %v1412
          %v1421 = vpack.c.b16 %v1417, %v1415
          %v1422 = vpack.c.b16 %v1418, %v1416
          %vm1427 = vcmask 261120
          %v1429 = vsel %vm1427, %v1398, 0
          %1431 = vmatprep.subr.bf16.mxu0 %v1420
          %1432 = vmatpush1.bf16.msra.mxu0 %v1419
          %1433 = vmatprep.subr.bf16.mxu0 %v1422
          %1434 = vmatpush1.bf16.msra.mxu0 %v1421
          %1435 = vmatprep.subr.bf16.mxu0 0
          %1436 = vmatpush1.bf16.msra.mxu0 0
          %1437 = vmatprep.subr.bf16.mxu0 0
          %1438 = vmatpush1.bf16.msra.mxu0 0
          %1439 = vmatprep.subr.bf16.mxu0 0
          %1440 = vmatpush1.bf16.msra.mxu0 0
          %1441 = vmatprep.subr.bf16.mxu0 0
          %1442 = vmatpush1.bf16.msra.mxu0 0
          %1443 = vmatprep.subr.bf16.mxu0 0
          %1444 = vmatpush1.bf16.msra.mxu0 0
          %1445 = vmatprep.subr.bf16.mxu0 0
          %1446 = vmatpush1.bf16.msra.mxu0 0
          %1447 = vmatprep.subr.bf16.mxu0 0
          %1448 = vmatpush1.bf16.msra.mxu0 0
          %1449 = vmatprep.subr.bf16.mxu0 0
          %1450 = vmatpush1.bf16.msra.mxu0 0
          %1451 = vmatprep.subr.bf16.mxu0 0
          %1452 = vmatpush1.bf16.msra.mxu0 0
          %1453 = vmatprep.subr.bf16.mxu0 0
          %1454 = vmatpush1.bf16.msra.mxu0 0
          %1455 = vmatprep.subr.bf16.mxu0 0
          %1456 = vmatpush1.bf16.msra.mxu0 0
          %1457 = vmatprep.subr.bf16.mxu0 0
          %1458 = vmatpush1.bf16.msra.mxu0 0
          %1459 = vmatprep.subr.bf16.mxu0 0
          %1460 = vmatpush1.bf16.msra.mxu0 0
          %1461 = vmatprep.subr.bf16.mxu0 0
          %1462 = vmatpush1.bf16.msra.mxu0 0
          %1463 = vmatprep.mubr.bf16.mxu0 0
          %1464 = vmatmul.mubr.bf16.gmra.mrb[0].mxu0 %v1429
          %v1465 = vpop.f32.mrb[0].mxu0
          %v1466 = vadd.f32 %v1402, %v1465
          %v1467 = vpop.f32.mrb[0].mxu0
          %v1468 = vadd.f32 %v1406, %v1467
          %v1469 = vpop.f32.mrb[0].mxu0
          %v1470 = vadd.f32 %v1402, %v1469
          %v1471 = vpop.f32.mrb[0].mxu0
          %v1472 = vadd.f32 %v1406, %v1471
          %1473 = vdwg.mxu0
          %v1474 = vmul.f32 %v1466, 0.5
          %v1475 = vmul.f32 %v1468, 0.5
          %v1476 = vmul.f32 %v1470, 0.5
          %v1477 = vmul.f32 %v1472, 0.5
          %v1478 = vmul.f32 %v1466, 0.70710677
          %v1479 = vmul.f32 %v1468, 0.70710677
          %v1480 = vmul.f32 %v1470, 0.70710677
          %v1481 = vmul.f32 %v1472, 0.70710677
          %v1482 = verf.f32.pop %v1478
          %v1483 = verf.f32.pop %v1479
          %v1484 = verf.f32.pop %v1480
          %v1485 = verf.f32.pop %v1481
          %v1486 = vadd.f32 %v1482, 1.0
          %v1487 = vadd.f32 %v1483, 1.0
          %v1488 = vadd.f32 %v1484, 1.0
          %v1489 = vadd.f32 %v1485, 1.0
          %v1490 = vmul.f32 %v1474, %v1486
          %v1491 = vmul.f32 %v1475, %v1487
          %v1492 = vmul.f32 %v1476, %v1488
          %v1493 = vmul.f32 %v1477, %v1489
          %v1494 = vadd.f32 %v1490, %v1491
          %1495 = vadd.xlane.f32.xlu0 %v1494
          %v1496 = vpop.xlane.xlu0 %1495
          %v1497 = vadd.f32 %v1492, %v1493
          %1498 = vadd.xlane.f32.xlu0 %v1497
          %v1499 = vpop.xlane.xlu0 %1498
          %v1500 = vmul.f32 %v1496, %v1064
          %v1501 = vmul.f32 %v1499, %v1064
          %v1502 = vsub.f32 %v1490, %v1500
          %v1503 = vsub.f32 %v1491, %v1500
          %v1504 = vsub.f32 %v1492, %v1501
          %v1505 = vsub.f32 %v1493, %v1501
          %v1506 = vmul.f32 %v1502, %v1502
          %v1507 = vmul.f32 %v1503, %v1503
          %v1508 = vmul.f32 %v1504, %v1504
          %v1509 = vmul.f32 %v1505, %v1505
          %v1510 = vadd.f32 %v1506, %v1507
          %1511 = vadd.xlane.f32.xlu0 %v1510
          %v1512 = vpop.xlane.xlu0 %1511
          %v1513 = vadd.f32 %v1508, %v1509
          %1514 = vadd.xlane.f32.xlu0 %v1513
          %v1515 = vpop.xlane.xlu0 %1514
          %v1516 = vmul.f32 %v1512, %v1064
          %v1517 = vmul.f32 %v1515, %v1064
          %v1518 = vadd.f32 %v1516, 1e-05
          %v1519 = vadd.f32 %v1517, 1e-05
          %v1520 = vrsqrt.pop %v1518
          %v1521 = vrsqrt.pop %v1519
          %v1522 = vmul.f32 %v1502, %v1520
          %v1523 = vmul.f32 %v1503, %v1520
          %v1524 = vmul.f32 %v1504, %v1521
          %v1525 = vmul.f32 %v1505, %v1521
          %v1526 = vlaneseq
          %v1527 = vshrl.u32 %v1526, 7
          %v1528 = vsub.s32 3, %v1527
          %v1529 = vrot.slane %v654, %v1528
          %v1530 = vlaneseq
          %v1531 = vshrl.u32 %v1530, 7
          %v1532 = vsub.s32 3, %v1531
          %v1533 = vrot.slane %v655, %v1532
          %v1534 = vmul.f32 %v1522, %v1529
          %v1535 = vmul.f32 %v1523, %v1533
          %v1536 = vmul.f32 %v1524, %v1529
          %v1537 = vmul.f32 %v1525, %v1533
          %v1538 = vlaneseq
          %v1539 = vshrl.u32 %v1538, 7
          %v1540 = vsub.s32 4, %v1539
          %v1541 = vrot.slane %v654, %v1540
          %v1542 = vlaneseq
          %v1543 = vshrl.u32 %v1542, 7
          %v1544 = vsub.s32 4, %v1543
          %v1545 = vrot.slane %v655, %v1544
          %v1546 = vadd.f32 %v1534, %v1541
          %v1547 = vadd.f32 %v1535, %v1545
          %v1548 = vadd.f32 %v1536, %v1541
          %v1549 = vadd.f32 %v1537, %v1545
          %1550 = vst [vmem:[#allocation2] sm:$0xff] %v1546
          %1551 = vst [vmem:[#allocation2 + $0x8] sm:$0xff] %v1547
          %1552 = vst [vmem:[#allocation2 + $0x10] sm:$0xff] %v1548
          %1553 = vst [vmem:[#allocation2 + $0x18] sm:$0xff] %v1549
        $region104: #{denoise_forward.1} parent=71 // pred_fallthru
          _
        %v1554 = vld [vmem:[%s564] sm:$0xff]
        %v1555 = vld [vmem:[#allocation2] sm:$0xff]
        %v1556 = vld [vmem:[#allocation2 + $0x8] sm:$0xff]
        %v1557 = vld [vmem:[#allocation2 + $0x10] sm:$0xff]
        %v1558 = vld [vmem:[#allocation2 + $0x18] sm:$0xff]
        %v1559 = vld [vmem:[%s546] sm:$0xff]
        %v1560 = vld [vmem:[%s546 + $0x8] sm:$0xff]
        %v1561 = vld [vmem:[%s546 + $0x10] sm:$0xff]
        %v1562 = vld [vmem:[%s546 + $0x18] sm:$0xff]
        %v1563 = vld [vmem:[%s546 + $0x20] sm:$0xff]
        %v1564 = vld [vmem:[%s546 + $0x28] sm:$0xff]
        %v1565 = vld [vmem:[%s546 + $0x30] sm:$0xff]
        %v1566 = vld [vmem:[%s546 + $0x38] sm:$0xff]
        %v1567 = vld [vmem:[%s546 + $0x40] sm:$0xff]
        %v1568 = vld [vmem:[%s546 + $0x48] sm:$0xff]
        %v1569 = vld [vmem:[%s546 + $0x50] sm:$0xff]
        %v1570 = vld [vmem:[%s546 + $0x58] sm:$0xff]
        %v1571 = vld [vmem:[%s546 + $0x60] sm:$0xff]
        %v1572 = vld [vmem:[%s546 + $0x68] sm:$0xff]
        %v1573 = vld [vmem:[%s546 + $0x70] sm:$0xff]
        %v1574 = vld [vmem:[%s546 + $0x78] sm:$0xff]
        %v1575 = vld [vmem:[%s546 + $0x80] sm:$0xff]
        %v1576 = vld [vmem:[%s546 + $0x88] sm:$0xff]
        %v1577 = vld [vmem:[%s546 + $0x90] sm:$0xff]
        %v1578 = vld [vmem:[%s546 + $0x98] sm:$0xff]
        %v1579 = vld [vmem:[%s546 + $0xa0] sm:$0xff]
        %v1580 = vld [vmem:[%s546 + $0xa8] sm:$0xff]
        %v1581 = vld [vmem:[%s546 + $0xb0] sm:$0xff]
        %v1582 = vld [vmem:[%s546 + $0xb8] sm:$0xff]
        %v1583 = vld [vmem:[%s546 + $0xc0] sm:$0xff]
        %v1584 = vld [vmem:[%s546 + $0xc8] sm:$0xff]
        %v1585 = vld [vmem:[%s546 + $0xd0] sm:$0xff]
        %v1586 = vld [vmem:[%s546 + $0xd8] sm:$0xff]
        %v1587 = vld [vmem:[%s546 + $0xe0] sm:$0xff]
        %v1588 = vld [vmem:[%s546 + $0xe8] sm:$0xff]
        %v1589 = vld [vmem:[%s546 + $0xf0] sm:$0xff]
        %v1590 = vld [vmem:[%s546 + $0xf8] sm:$0xff]
        %v1591 = vpack.c.bf16 %v1557, %v1555
        %v1592 = vpack.c.bf16 %v1558, %v1556
        %v1594 = vlaneseq
        %v1595 = vshrl.u32 %v1594, 7
        %v1596 = vsub.s32 0, %v1595
        %v1597 = vrot.slane %v1554, %v1596
        %v1598 = vlaneseq
        %v1599 = vshrl.u32 %v1598, 7
        %v1600 = vsub.s32 4, %v1599
        %v1601 = vrot.slane %v1554, %v1600
        %v1604 = vlaneseq
        %v1605 = vshrl.u32 %v1604, 7
        %v1606 = vsub.s32 0, %v1605
        %v1607 = vrot.slane %v1597, %v1606
        %v1608 = vlaneseq
        %v1609 = vshrl.u32 %v1608, 7
        %v1610 = vsub.s32 0, %v1609
        %v1611 = vrot.slane %v1601, %v1610
        %v1644 = vunpack.c.l.b16 %v1559
        %v1645 = vunpack.c.h.b16 %v1559
        %v1646 = vunpack.c.l.b16 %v1560
        %v1647 = vunpack.c.h.b16 %v1560
        %v1648 = vunpack.c.l.b16 %v1561
        %v1649 = vunpack.c.h.b16 %v1561
        %v1650 = vunpack.c.l.b16 %v1562
        %v1651 = vunpack.c.h.b16 %v1562
        %v1652 = vunpack.c.l.b16 %v1563
        %v1653 = vunpack.c.h.b16 %v1563
        %v1654 = vunpack.c.l.b16 %v1564
        %v1655 = vunpack.c.h.b16 %v1564
        %v1656 = vunpack.c.l.b16 %v1565
        %v1657 = vunpack.c.h.b16 %v1565
        %v1658 = vunpack.c.l.b16 %v1566
        %v1659 = vunpack.c.h.b16 %v1566
        %v1660 = vunpack.c.l.b16 %v1567
        %v1661 = vunpack.c.h.b16 %v1567
        %v1662 = vunpack.c.l.b16 %v1568
        %v1663 = vunpack.c.h.b16 %v1568
        %v1664 = vunpack.c.l.b16 %v1569
        %v1665 = vunpack.c.h.b16 %v1569
        %v1666 = vunpack.c.l.b16 %v1570
        %v1667 = vunpack.c.h.b16 %v1570
        %v1668 = vunpack.c.l.b16 %v1571
        %v1669 = vunpack.c.h.b16 %v1571
        %v1670 = vunpack.c.l.b16 %v1572
        %v1671 = vunpack.c.h.b16 %v1572
        %v1672 = vunpack.c.l.b16 %v1573
        %v1673 = vunpack.c.h.b16 %v1573
        %v1674 = vunpack.c.l.b16 %v1574
        %v1675 = vunpack.c.h.b16 %v1574
        %v1676 = vunpack.c.l.b16 %v1575
        %v1677 = vunpack.c.h.b16 %v1575
        %v1678 = vunpack.c.l.b16 %v1576
        %v1679 = vunpack.c.h.b16 %v1576
        %v1680 = vunpack.c.l.b16 %v1577
        %v1681 = vunpack.c.h.b16 %v1577
        %v1682 = vunpack.c.l.b16 %v1578
        %v1683 = vunpack.c.h.b16 %v1578
        %v1684 = vunpack.c.l.b16 %v1579
        %v1685 = vunpack.c.h.b16 %v1579
        %v1686 = vunpack.c.l.b16 %v1580
        %v1687 = vunpack.c.h.b16 %v1580
        %v1688 = vunpack.c.l.b16 %v1581
        %v1689 = vunpack.c.h.b16 %v1581
        %v1690 = vunpack.c.l.b16 %v1582
        %v1691 = vunpack.c.h.b16 %v1582
        %v1692 = vunpack.c.l.b16 %v1583
        %v1693 = vunpack.c.h.b16 %v1583
        %v1694 = vunpack.c.l.b16 %v1584
        %v1695 = vunpack.c.h.b16 %v1584
        %v1696 = vunpack.c.l.b16 %v1585
        %v1697 = vunpack.c.h.b16 %v1585
        %v1698 = vunpack.c.l.b16 %v1586
        %v1699 = vunpack.c.h.b16 %v1586
        %v1700 = vunpack.c.l.b16 %v1587
        %v1701 = vunpack.c.h.b16 %v1587
        %v1702 = vunpack.c.l.b16 %v1588
        %v1703 = vunpack.c.h.b16 %v1588
        %v1704 = vunpack.c.l.b16 %v1589
        %v1705 = vunpack.c.h.b16 %v1589
        %v1706 = vunpack.c.l.b16 %v1590
        %v1707 = vunpack.c.h.b16 %v1590
        %v1708 = vpack.c.b16 %v1646, %v1644
        %v1709 = vpack.c.b16 %v1647, %v1645
        %v1710 = vpack.c.b16 %v1650, %v1648
        %v1711 = vpack.c.b16 %v1651, %v1649
        %v1712 = vpack.c.b16 %v1654, %v1652
        %v1713 = vpack.c.b16 %v1655, %v1653
        %v1714 = vpack.c.b16 %v1658, %v1656
        %v1715 = vpack.c.b16 %v1659, %v1657
        %v1716 = vpack.c.b16 %v1662, %v1660
        %v1717 = vpack.c.b16 %v1663, %v1661
        %v1718 = vpack.c.b16 %v1666, %v1664
        %v1719 = vpack.c.b16 %v1667, %v1665
        %v1720 = vpack.c.b16 %v1670, %v1668
        %v1721 = vpack.c.b16 %v1671, %v1669
        %v1722 = vpack.c.b16 %v1674, %v1672
        %v1723 = vpack.c.b16 %v1675, %v1673
        %v1724 = vpack.c.b16 %v1678, %v1676
        %v1725 = vpack.c.b16 %v1679, %v1677
        %v1726 = vpack.c.b16 %v1682, %v1680
        %v1727 = vpack.c.b16 %v1683, %v1681
        %v1728 = vpack.c.b16 %v1686, %v1684
        %v1729 = vpack.c.b16 %v1687, %v1685
        %v1730 = vpack.c.b16 %v1690, %v1688
        %v1731 = vpack.c.b16 %v1691, %v1689
        %v1732 = vpack.c.b16 %v1694, %v1692
        %v1733 = vpack.c.b16 %v1695, %v1693
        %v1734 = vpack.c.b16 %v1698, %v1696
        %v1735 = vpack.c.b16 %v1699, %v1697
        %v1736 = vpack.c.b16 %v1702, %v1700
        %v1737 = vpack.c.b16 %v1703, %v1701
        %v1738 = vpack.c.b16 %v1706, %v1704
        %v1739 = vpack.c.b16 %v1707, %v1705
        %1772 = vmatprep.subr.bf16.mxu0 %v1709
        %1773 = vmatpush1.bf16.msra.mxu0 %v1708
        %1774 = vmatprep.subr.bf16.mxu0 %v1711
        %1775 = vmatpush1.bf16.msra.mxu0 %v1710
        %1776 = vmatprep.subr.bf16.mxu0 %v1713
        %1777 = vmatpush1.bf16.msra.mxu0 %v1712
        %1778 = vmatprep.subr.bf16.mxu0 %v1715
        %1779 = vmatpush1.bf16.msra.mxu0 %v1714
        %1780 = vmatprep.subr.bf16.mxu0 %v1717
        %1781 = vmatpush1.bf16.msra.mxu0 %v1716
        %1782 = vmatprep.subr.bf16.mxu0 %v1719
        %1783 = vmatpush1.bf16.msra.mxu0 %v1718
        %1784 = vmatprep.subr.bf16.mxu0 %v1721
        %1785 = vmatpush1.bf16.msra.mxu0 %v1720
        %1786 = vmatprep.subr.bf16.mxu0 %v1723
        %1787 = vmatpush1.bf16.msra.mxu0 %v1722
        %1788 = vmatprep.subr.bf16.mxu0 %v1725
        %1789 = vmatpush1.bf16.msra.mxu0 %v1724
        %1790 = vmatprep.subr.bf16.mxu0 %v1727
        %1791 = vmatpush1.bf16.msra.mxu0 %v1726
        %1792 = vmatprep.subr.bf16.mxu0 %v1729
        %1793 = vmatpush1.bf16.msra.mxu0 %v1728
        %1794 = vmatprep.subr.bf16.mxu0 %v1731
        %1795 = vmatpush1.bf16.msra.mxu0 %v1730
        %1796 = vmatprep.subr.bf16.mxu0 %v1733
        %1797 = vmatpush1.bf16.msra.mxu0 %v1732
        %1798 = vmatprep.subr.bf16.mxu0 %v1735
        %1799 = vmatpush1.bf16.msra.mxu0 %v1734
        %1800 = vmatprep.subr.bf16.mxu0 %v1737
        %1801 = vmatpush1.bf16.msra.mxu0 %v1736
        %1802 = vmatprep.subr.bf16.mxu0 %v1739
        %1803 = vmatpush1.bf16.msra.mxu0 %v1738
        %1804 = vmatprep.mubr.bf16.mxu0 %v1592
        %1805 = vmatmul.mubr.bf16.gmra.mrb[0].mxu0 %v1591
        %v1806 = vpop.f32.mrb[0].mxu0
        %v1807 = vadd.f32 %v1607, %v1806
        %v1808 = vpop.f32.mrb[0].mxu0
        %v1809 = vadd.f32 %v1611, %v1808
        %v1810 = vpop.f32.mrb[0].mxu0
        %v1811 = vadd.f32 %v1607, %v1810
        %v1812 = vpop.f32.mrb[0].mxu0
        %v1813 = vadd.f32 %v1611, %v1812
        %1814 = vdwg.mxu0
        %v1815 = vmul.f32 %v1807, 0.5
        %v1816 = vmul.f32 %v1809, 0.5
        %v1817 = vmul.f32 %v1811, 0.5
        %v1818 = vmul.f32 %v1813, 0.5
        %v1819 = vmul.f32 %v1807, 0.70710677
        %v1820 = vmul.f32 %v1809, 0.70710677
        %v1821 = vmul.f32 %v1811, 0.70710677
        %v1822 = vmul.f32 %v1813, 0.70710677
        %v1823 = verf.f32.pop %v1819
        %v1824 = verf.f32.pop %v1820
        %v1825 = verf.f32.pop %v1821
        %v1826 = verf.f32.pop %v1822
        %v1827 = vadd.f32 %v1823, 1.0
        %v1828 = vadd.f32 %v1824, 1.0
        %v1829 = vadd.f32 %v1825, 1.0
        %v1830 = vadd.f32 %v1826, 1.0
        %v1831 = vmul.f32 %v1815, %v1827
        %v1832 = vmul.f32 %v1816, %v1828
        %v1833 = vmul.f32 %v1817, %v1829
        %v1834 = vmul.f32 %v1818, %v1830
        %v1835 = vadd.f32 %v1831, %v1832
        %1836 = vadd.xlane.f32.xlu0 %v1835
        %v1837 = vpop.xlane.xlu0 %1836
        %v1838 = vadd.f32 %v1833, %v1834
        %1839 = vadd.xlane.f32.xlu0 %v1838
        %v1840 = vpop.xlane.xlu0 %1839
        %v1841 = vrcp.pop 256.0
        %v1842 = vmul.f32 %v1837, %v1841
        %v1843 = vmul.f32 %v1840, %v1841
        %v1844 = vsub.f32 %v1831, %v1842
        %v1845 = vsub.f32 %v1832, %v1842
        %v1846 = vsub.f32 %v1833, %v1843
        %v1847 = vsub.f32 %v1834, %v1843
        %v1848 = vmul.f32 %v1844, %v1844
        %v1849 = vmul.f32 %v1845, %v1845
        %v1850 = vmul.f32 %v1846, %v1846
        %v1851 = vmul.f32 %v1847, %v1847
        %v1852 = vadd.f32 %v1848, %v1849
        %1853 = vadd.xlane.f32.xlu0 %v1852
        %v1854 = vpop.xlane.xlu0 %1853
        %v1855 = vadd.f32 %v1850, %v1851
        %1856 = vadd.xlane.f32.xlu0 %v1855
        %v1857 = vpop.xlane.xlu0 %1856
        %v1858 = vmul.f32 %v1854, %v1841
        %v1859 = vmul.f32 %v1857, %v1841
        %v1860 = vadd.f32 %v1858, 1e-05
        %v1861 = vadd.f32 %v1859, 1e-05
        %v1862 = vrsqrt.pop %v1860
        %v1863 = vrsqrt.pop %v1861
        %v1864 = vmul.f32 %v1844, %v1862
        %v1865 = vmul.f32 %v1845, %v1862
        %v1866 = vmul.f32 %v1846, %v1863
        %v1867 = vmul.f32 %v1847, %v1863
        %v1868 = vld [vmem:[%s555] sm:$0xff]
        %v1869 = vld [vmem:[%s555 + $0x8] sm:$0xff]
        %v1870 = vld [vmem:[%s555 + $0x10] sm:$0xff]
        %v1871 = vld [vmem:[%s555 + $0x18] sm:$0xff]
        %v1872 = vld [vmem:[%s555 + $0x20] sm:$0xff]
        %v1873 = vld [vmem:[%s555 + $0x28] sm:$0xff]
        %v1874 = vld [vmem:[%s555 + $0x30] sm:$0xff]
        %v1875 = vld [vmem:[%s555 + $0x38] sm:$0xff]
        %v1876 = vld [vmem:[%s555 + $0x40] sm:$0xff]
        %v1877 = vld [vmem:[%s555 + $0x48] sm:$0xff]
        %v1878 = vld [vmem:[%s555 + $0x50] sm:$0xff]
        %v1879 = vld [vmem:[%s555 + $0x58] sm:$0xff]
        %v1880 = vld [vmem:[%s555 + $0x60] sm:$0xff]
        %v1881 = vld [vmem:[%s555 + $0x68] sm:$0xff]
        %v1882 = vld [vmem:[%s555 + $0x70] sm:$0xff]
        %v1883 = vld [vmem:[%s555 + $0x78] sm:$0xff]
        %v1884 = vld [vmem:[%s555 + $0x80] sm:$0xff]
        %v1885 = vld [vmem:[%s555 + $0x88] sm:$0xff]
        %v1886 = vld [vmem:[%s555 + $0x90] sm:$0xff]
        %v1887 = vld [vmem:[%s555 + $0x98] sm:$0xff]
        %v1888 = vld [vmem:[%s555 + $0xa0] sm:$0xff]
        %v1889 = vld [vmem:[%s555 + $0xa8] sm:$0xff]
        %v1890 = vld [vmem:[%s555 + $0xb0] sm:$0xff]
        %v1891 = vld [vmem:[%s555 + $0xb8] sm:$0xff]
        %v1892 = vld [vmem:[%s555 + $0xc0] sm:$0xff]
        %v1893 = vld [vmem:[%s555 + $0xc8] sm:$0xff]
        %v1894 = vld [vmem:[%s555 + $0xd0] sm:$0xff]
        %v1895 = vld [vmem:[%s555 + $0xd8] sm:$0xff]
        %v1896 = vld [vmem:[%s555 + $0xe0] sm:$0xff]
        %v1897 = vld [vmem:[%s555 + $0xe8] sm:$0xff]
        %v1898 = vld [vmem:[%s555 + $0xf0] sm:$0xff]
        %v1899 = vld [vmem:[%s555 + $0xf8] sm:$0xff]
        %v1900 = vpack.c.bf16 %v1866, %v1864
        %v1901 = vpack.c.bf16 %v1867, %v1865
        %v1902 = vlaneseq
        %v1903 = vshrl.u32 %v1902, 7
        %v1904 = vsub.s32 1, %v1903
        %v1905 = vrot.slane %v1554, %v1904
        %v1906 = vlaneseq
        %v1907 = vshrl.u32 %v1906, 7
        %v1908 = vsub.s32 5, %v1907
        %v1909 = vrot.slane %v1554, %v1908
        %v1912 = vlaneseq
        %v1913 = vshrl.u32 %v1912, 7
        %v1914 = vsub.s32 1, %v1913
        %v1915 = vrot.slane %v1905, %v1914
        %v1916 = vlaneseq
        %v1917 = vshrl.u32 %v1916, 7
        %v1918 = vsub.s32 1, %v1917
        %v1919 = vrot.slane %v1909, %v1918
        %v1952 = vunpack.c.l.b16 %v1868
        %v1953 = vunpack.c.h.b16 %v1868
        %v1954 = vunpack.c.l.b16 %v1869
        %v1955 = vunpack.c.h.b16 %v1869
        %v1956 = vunpack.c.l.b16 %v1870
        %v1957 = vunpack.c.h.b16 %v1870
        %v1958 = vunpack.c.l.b16 %v1871
        %v1959 = vunpack.c.h.b16 %v1871
        %v1960 = vunpack.c.l.b16 %v1872
        %v1961 = vunpack.c.h.b16 %v1872
        %v1962 = vunpack.c.l.b16 %v1873
        %v1963 = vunpack.c.h.b16 %v1873
        %v1964 = vunpack.c.l.b16 %v1874
        %v1965 = vunpack.c.h.b16 %v1874
        %v1966 = vunpack.c.l.b16 %v1875
        %v1967 = vunpack.c.h.b16 %v1875
        %v1968 = vunpack.c.l.b16 %v1876
        %v1969 = vunpack.c.h.b16 %v1876
        %v1970 = vunpack.c.l.b16 %v1877
        %v1971 = vunpack.c.h.b16 %v1877
        %v1972 = vunpack.c.l.b16 %v1878
        %v1973 = vunpack.c.h.b16 %v1878
        %v1974 = vunpack.c.l.b16 %v1879
        %v1975 = vunpack.c.h.b16 %v1879
        %v1976 = vunpack.c.l.b16 %v1880
        %v1977 = vunpack.c.h.b16 %v1880
        %v1978 = vunpack.c.l.b16 %v1881
        %v1979 = vunpack.c.h.b16 %v1881
        %v1980 = vunpack.c.l.b16 %v1882
        %v1981 = vunpack.c.h.b16 %v1882
        %v1982 = vunpack.c.l.b16 %v1883
        %v1983 = vunpack.c.h.b16 %v1883
        %v1984 = vunpack.c.l.b16 %v1884
        %v1985 = vunpack.c.h.b16 %v1884
        %v1986 = vunpack.c.l.b16 %v1885
        %v1987 = vunpack.c.h.b16 %v1885
        %v1988 = vunpack.c.l.b16 %v1886
        %v1989 = vunpack.c.h.b16 %v1886
        %v1990 = vunpack.c.l.b16 %v1887
        %v1991 = vunpack.c.h.b16 %v1887
        %v1992 = vunpack.c.l.b16 %v1888
        %v1993 = vunpack.c.h.b16 %v1888
        %v1994 = vunpack.c.l.b16 %v1889
        %v1995 = vunpack.c.h.b16 %v1889
        %v1996 = vunpack.c.l.b16 %v1890
        %v1997 = vunpack.c.h.b16 %v1890
        %v1998 = vunpack.c.l.b16 %v1891
        %v1999 = vunpack.c.h.b16 %v1891
        %v2000 = vunpack.c.l.b16 %v1892
        %v2001 = vunpack.c.h.b16 %v1892
        %v2002 = vunpack.c.l.b16 %v1893
        %v2003 = vunpack.c.h.b16 %v1893
        %v2004 = vunpack.c.l.b16 %v1894
        %v2005 = vunpack.c.h.b16 %v1894
        %v2006 = vunpack.c.l.b16 %v1895
        %v2007 = vunpack.c.h.b16 %v1895
        %v2008 = vunpack.c.l.b16 %v1896
        %v2009 = vunpack.c.h.b16 %v1896
        %v2010 = vunpack.c.l.b16 %v1897
        %v2011 = vunpack.c.h.b16 %v1897
        %v2012 = vunpack.c.l.b16 %v1898
        %v2013 = vunpack.c.h.b16 %v1898
        %v2014 = vunpack.c.l.b16 %v1899
        %v2015 = vunpack.c.h.b16 %v1899
        %v2016 = vpack.c.b16 %v1954, %v1952
        %v2017 = vpack.c.b16 %v1955, %v1953
        %v2018 = vpack.c.b16 %v1958, %v1956
        %v2019 = vpack.c.b16 %v1959, %v1957
        %v2020 = vpack.c.b16 %v1962, %v1960
        %v2021 = vpack.c.b16 %v1963, %v1961
        %v2022 = vpack.c.b16 %v1966, %v1964
        %v2023 = vpack.c.b16 %v1967, %v1965
        %v2024 = vpack.c.b16 %v1970, %v1968
        %v2025 = vpack.c.b16 %v1971, %v1969
        %v2026 = vpack.c.b16 %v1974, %v1972
        %v2027 = vpack.c.b16 %v1975, %v1973
        %v2028 = vpack.c.b16 %v1978, %v1976
        %v2029 = vpack.c.b16 %v1979, %v1977
        %v2030 = vpack.c.b16 %v1982, %v1980
        %v2031 = vpack.c.b16 %v1983, %v1981
        %v2032 = vpack.c.b16 %v1986, %v1984
        %v2033 = vpack.c.b16 %v1987, %v1985
        %v2034 = vpack.c.b16 %v1990, %v1988
        %v2035 = vpack.c.b16 %v1991, %v1989
        %v2036 = vpack.c.b16 %v1994, %v1992
        %v2037 = vpack.c.b16 %v1995, %v1993
        %v2038 = vpack.c.b16 %v1998, %v1996
        %v2039 = vpack.c.b16 %v1999, %v1997
        %v2040 = vpack.c.b16 %v2002, %v2000
        %v2041 = vpack.c.b16 %v2003, %v2001
        %v2042 = vpack.c.b16 %v2006, %v2004
        %v2043 = vpack.c.b16 %v2007, %v2005
        %v2044 = vpack.c.b16 %v2010, %v2008
        %v2045 = vpack.c.b16 %v2011, %v2009
        %v2046 = vpack.c.b16 %v2014, %v2012
        %v2047 = vpack.c.b16 %v2015, %v2013
        %2080 = vmatprep.subr.bf16.mxu0 %v2017
        %2081 = vmatpush1.bf16.msra.mxu0 %v2016
        %2082 = vmatprep.subr.bf16.mxu0 %v2019
        %2083 = vmatpush1.bf16.msra.mxu0 %v2018
        %2084 = vmatprep.subr.bf16.mxu0 %v2021
        %2085 = vmatpush1.bf16.msra.mxu0 %v2020
        %2086 = vmatprep.subr.bf16.mxu0 %v2023
        %2087 = vmatpush1.bf16.msra.mxu0 %v2022
        %2088 = vmatprep.subr.bf16.mxu0 %v2025
        %2089 = vmatpush1.bf16.msra.mxu0 %v2024
        %2090 = vmatprep.subr.bf16.mxu0 %v2027
        %2091 = vmatpush1.bf16.msra.mxu0 %v2026
        %2092 = vmatprep.subr.bf16.mxu0 %v2029
        %2093 = vmatpush1.bf16.msra.mxu0 %v2028
        %2094 = vmatprep.subr.bf16.mxu0 %v2031
        %2095 = vmatpush1.bf16.msra.mxu0 %v2030
        %2096 = vmatprep.subr.bf16.mxu0 %v2033
        %2097 = vmatpush1.bf16.msra.mxu0 %v2032
        %2098 = vmatprep.subr.bf16.mxu0 %v2035
        %2099 = vmatpush1.bf16.msra.mxu0 %v2034
        %2100 = vmatprep.subr.bf16.mxu0 %v2037
        %2101 = vmatpush1.bf16.msra.mxu0 %v2036
        %2102 = vmatprep.subr.bf16.mxu0 %v2039
        %2103 = vmatpush1.bf16.msra.mxu0 %v2038
        %2104 = vmatprep.subr.bf16.mxu0 %v2041
        %2105 = vmatpush1.bf16.msra.mxu0 %v2040
        %2106 = vmatprep.subr.bf16.mxu0 %v2043
        %2107 = vmatpush1.bf16.msra.mxu0 %v2042
        %2108 = vmatprep.subr.bf16.mxu0 %v2045
        %2109 = vmatpush1.bf16.msra.mxu0 %v2044
        %2110 = vmatprep.subr.bf16.mxu0 %v2047
        %2111 = vmatpush1.bf16.msra.mxu0 %v2046
        %2112 = vmatprep.mubr.bf16.mxu0 %v1901
        %2113 = vmatmul.mubr.bf16.gmra.mrb[0].mxu0 %v1900
        %v2114 = vpop.f32.mrb[0].mxu0
        %v2115 = vadd.f32 %v1915, %v2114
        %v2116 = vpop.f32.mrb[0].mxu0
        %v2117 = vadd.f32 %v1919, %v2116
        %v2118 = vpop.f32.mrb[0].mxu0
        %v2119 = vadd.f32 %v1915, %v2118
        %v2120 = vpop.f32.mrb[0].mxu0
        %v2121 = vadd.f32 %v1919, %v2120
        %2122 = vdwg.mxu0
        %v2123 = vmul.f32 %v2115, 0.5
        %v2124 = vmul.f32 %v2117, 0.5
        %v2125 = vmul.f32 %v2119, 0.5
        %v2126 = vmul.f32 %v2121, 0.5
        %v2127 = vmul.f32 %v2115, 0.70710677
        %v2128 = vmul.f32 %v2117, 0.70710677
        %v2129 = vmul.f32 %v2119, 0.70710677
        %v2130 = vmul.f32 %v2121, 0.70710677
        %v2131 = verf.f32.pop %v2127
        %v2132 = verf.f32.pop %v2128
        %v2133 = verf.f32.pop %v2129
        %v2134 = verf.f32.pop %v2130
        %v2135 = vadd.f32 %v2131, 1.0
        %v2136 = vadd.f32 %v2132, 1.0
        %v2137 = vadd.f32 %v2133, 1.0
        %v2138 = vadd.f32 %v2134, 1.0
        %v2139 = vmul.f32 %v2123, %v2135
        %v2140 = vmul.f32 %v2124, %v2136
        %v2141 = vmul.f32 %v2125, %v2137
        %v2142 = vmul.f32 %v2126, %v2138
        %v2143 = vadd.f32 %v2139, %v2140
        %2144 = vadd.xlane.f32.xlu0 %v2143
        %v2145 = vpop.xlane.xlu0 %2144
        %v2146 = vadd.f32 %v2141, %v2142
        %2147 = vadd.xlane.f32.xlu0 %v2146
        %v2148 = vpop.xlane.xlu0 %2147
        %v2149 = vmul.f32 %v2145, %v1841
        %v2150 = vmul.f32 %v2148, %v1841
        %v2151 = vsub.f32 %v2139, %v2149
        %v2152 = vsub.f32 %v2140, %v2149
        %v2153 = vsub.f32 %v2141, %v2150
        %v2154 = vsub.f32 %v2142, %v2150
        %v2155 = vmul.f32 %v2151, %v2151
        %v2156 = vmul.f32 %v2152, %v2152
        %v2157 = vmul.f32 %v2153, %v2153
        %v2158 = vmul.f32 %v2154, %v2154
        %v2159 = vadd.f32 %v2155, %v2156
        %2160 = vadd.xlane.f32.xlu0 %v2159
        %v2161 = vpop.xlane.xlu0 %2160
        %v2162 = vadd.f32 %v2157, %v2158
        %2163 = vadd.xlane.f32.xlu0 %v2162
        %v2164 = vpop.xlane.xlu0 %2163
        %v2165 = vmul.f32 %v2161, %v1841
        %v2166 = vmul.f32 %v2164, %v1841
        %v2167 = vadd.f32 %v2165, 1e-05
        %v2168 = vadd.f32 %v2166, 1e-05
        %v2169 = vrsqrt.pop %v2167
        %v2170 = vrsqrt.pop %v2168
        %v2171 = vmul.f32 %v2151, %v2169
        %v2172 = vmul.f32 %v2152, %v2169
        %v2173 = vmul.f32 %v2153, %v2170
        %v2174 = vmul.f32 %v2154, %v2170
        %v2175 = vlaneseq
        %v2176 = vshrl.u32 %v2175, 7
        %v2177 = vsub.s32 2, %v2176
        %v2178 = vrot.slane %v1554, %v2177
        %v2179 = vlaneseq
        %v2180 = vshrl.u32 %v2179, 7
        %v2181 = vsub.s32 6, %v2180
        %v2182 = vrot.slane %v1554, %v2181
        %v2185 = vlaneseq
        %v2186 = vshrl.u32 %v2185, 7
        %v2187 = vsub.s32 2, %v2186
        %v2188 = vrot.slane %v2178, %v2187
        %v2189 = vlaneseq
        %v2190 = vshrl.u32 %v2189, 7
        %v2191 = vsub.s32 2, %v2190
        %v2192 = vrot.slane %v2182, %v2191
        %v2193 = vmul.f32 %v2171, %v2188
        %v2194 = vmul.f32 %v2172, %v2192
        %v2195 = vmul.f32 %v2173, %v2188
        %v2196 = vmul.f32 %v2174, %v2192
        %v2197 = vlaneseq
        %v2198 = vshrl.u32 %v2197, 7
        %v2199 = vsub.s32 3, %v2198
        %v2200 = vrot.slane %v1554, %v2199
        %v2201 = vlaneseq
        %v2202 = vshrl.u32 %v2201, 7
        %v2203 = vsub.s32 7, %v2202
        %v2204 = vrot.slane %v1554, %v2203
        %v2207 = vlaneseq
        %v2208 = vshrl.u32 %v2207, 7
        %v2209 = vsub.s32 3, %v2208
        %v2210 = vrot.slane %v2200, %v2209
        %v2211 = vlaneseq
        %v2212 = vshrl.u32 %v2211, 7
        %v2213 = vsub.s32 3, %v2212
        %v2214 = vrot.slane %v2204, %v2213
        %v2215 = vadd.f32 %v2193, %v2210
        %v2216 = vadd.f32 %v2194, %v2214
        %v2217 = vadd.f32 %v2195, %v2210
        %v2218 = vadd.f32 %v2196, %v2214
        %v2219 = vadd.f32 %v1555, %v2215
        %v2220 = vadd.f32 %v1556, %v2216
        %v2221 = vadd.f32 %v1557, %v2217
        %v2222 = vadd.f32 %v1558, %v2218
        %2223 = vst [vmem:[#allocation2] sm:$0xff] %v2219
        %2224 = vst [vmem:[#allocation2 + $0x8] sm:$0xff] %v2220
        %2225 = vst [vmem:[#allocation2 + $0x10] sm:$0xff] %v2221
        %2226 = vst [vmem:[#allocation2 + $0x18] sm:$0xff] %v2222
        %p2227 = scmp.eq.s32.totalorder %s37, 3
        // Predicated region
        $region105: #{denoise_forward.1} parent=71 // pred_check
          %p2228 = pneg %p2227
        $region106: #{denoise_forward.1} parent=71 // pred_check_branch
          %2230 = sbr.rel (%p2228) target = $region108
        $region107: #{denoise_forward.1} parent=71 // pred_region
          %v2231 = vld [vmem:[#allocation8] sm:$0x3f]
          %v2232 = vld [vmem:[#allocation8 + $0x8] sm:$0x3f]
          %v2233 = vld [vmem:[%s12] sm:$0x3]
          %v2234 = vld [vmem:[#allocation2] sm:$0xff]
          %v2235 = vld [vmem:[#allocation2 + $0x8] sm:$0xff]
          %v2236 = vld [vmem:[#allocation2 + $0x10] sm:$0xff]
          %v2237 = vld [vmem:[#allocation2 + $0x18] sm:$0xff]
          %s2238 = scalar_lea.vmem [#allocation6], 256
          %v2239 = vld [vmem:[%s2238] sm:$0xff]
          %v2240 = vld [vmem:[%s2238 + $0x8] sm:$0xff]
          %v2241 = vld [vmem:[%s2238 + $0x10] sm:$0xff]
          %v2242 = vld [vmem:[%s2238 + $0x18] sm:$0xff]
          %v2243 = vld [vmem:[%s2238 + $0x20] sm:$0xff]
          %v2244 = vld [vmem:[%s2238 + $0x28] sm:$0xff]
          %v2245 = vld [vmem:[%s2238 + $0x30] sm:$0xff]
          %v2246 = vld [vmem:[%s2238 + $0x38] sm:$0xff]
          %v2247 = vld [vmem:[%s2238 + $0x40] sm:$0xff]
          %v2248 = vld [vmem:[%s2238 + $0x48] sm:$0xff]
          %v2249 = vld [vmem:[%s2238 + $0x50] sm:$0xff]
          %v2250 = vld [vmem:[%s2238 + $0x58] sm:$0xff]
          %v2251 = vld [vmem:[%s2238 + $0x60] sm:$0xff]
          %v2252 = vld [vmem:[%s2238 + $0x68] sm:$0xff]
          %v2253 = vld [vmem:[%s2238 + $0x70] sm:$0xff]
          %v2254 = vld [vmem:[%s2238 + $0x78] sm:$0xff]
          %v2255 = vld [vmem:[%s2238 + $0x80] sm:$0xff]
          %v2256 = vld [vmem:[%s2238 + $0x88] sm:$0xff]
          %v2257 = vld [vmem:[%s2238 + $0x90] sm:$0xff]
          %v2258 = vld [vmem:[%s2238 + $0x98] sm:$0xff]
          %v2259 = vld [vmem:[%s2238 + $0xa0] sm:$0xff]
          %v2260 = vld [vmem:[%s2238 + $0xa8] sm:$0xff]
          %v2261 = vld [vmem:[%s2238 + $0xb0] sm:$0xff]
          %v2262 = vld [vmem:[%s2238 + $0xb8] sm:$0xff]
          %v2263 = vld [vmem:[%s2238 + $0xc0] sm:$0xff]
          %v2264 = vld [vmem:[%s2238 + $0xc8] sm:$0xff]
          %v2265 = vld [vmem:[%s2238 + $0xd0] sm:$0xff]
          %v2266 = vld [vmem:[%s2238 + $0xd8] sm:$0xff]
          %v2267 = vld [vmem:[%s2238 + $0xe0] sm:$0xff]
          %v2268 = vld [vmem:[%s2238 + $0xe8] sm:$0xff]
          %v2269 = vld [vmem:[%s2238 + $0xf0] sm:$0xff]
          %v2270 = vld [vmem:[%s2238 + $0xf8] sm:$0xff]
          %v2271 = vpack.c.bf16 %v2236, %v2234
          %v2272 = vpack.c.bf16 %v2237, %v2235
          %v2273 = vld [vmem:[#allocation3] sm:$0xff]
          %v2274 = vld [vmem:[#allocation3 + $0x8] sm:$0xff]
          %v2275 = vld [vmem:[#allocation3 + $0x10] sm:$0xff]
          %v2276 = vld [vmem:[#allocation3 + $0x18] sm:$0xff]
          %s2277 = scalar_lea.vmem [#allocation6], 512
          %v2278 = vld [vmem:[%s2277] sm:$0xff]
          %v2279 = vld [vmem:[%s2277 + $0x8] sm:$0xff]
          %v2280 = vld [vmem:[%s2277 + $0x10] sm:$0xff]
          %v2281 = vld [vmem:[%s2277 + $0x18] sm:$0xff]
          %v2282 = vld [vmem:[%s2277 + $0x20] sm:$0xff]
          %v2283 = vld [vmem:[%s2277 + $0x28] sm:$0xff]
          %v2284 = vld [vmem:[%s2277 + $0x30] sm:$0xff]
          %v2285 = vld [vmem:[%s2277 + $0x38] sm:$0xff]
          %v2286 = vld [vmem:[%s2277 + $0x40] sm:$0xff]
          %v2287 = vld [vmem:[%s2277 + $0x48] sm:$0xff]
          %v2288 = vld [vmem:[%s2277 + $0x50] sm:$0xff]
          %v2289 = vld [vmem:[%s2277 + $0x58] sm:$0xff]
          %v2290 = vld [vmem:[%s2277 + $0x60] sm:$0xff]
          %v2291 = vld [vmem:[%s2277 + $0x68] sm:$0xff]
          %v2292 = vld [vmem:[%s2277 + $0x70] sm:$0xff]
          %v2293 = vld [vmem:[%s2277 + $0x78] sm:$0xff]
          %v2294 = vld [vmem:[%s2277 + $0x80] sm:$0xff]
          %v2295 = vld [vmem:[%s2277 + $0x88] sm:$0xff]
          %v2296 = vld [vmem:[%s2277 + $0x90] sm:$0xff]
          %v2297 = vld [vmem:[%s2277 + $0x98] sm:$0xff]
          %v2298 = vld [vmem:[%s2277 + $0xa0] sm:$0xff]
          %v2299 = vld [vmem:[%s2277 + $0xa8] sm:$0xff]
          %v2300 = vld [vmem:[%s2277 + $0xb0] sm:$0xff]
          %v2301 = vld [vmem:[%s2277 + $0xb8] sm:$0xff]
          %v2302 = vld [vmem:[%s2277 + $0xc0] sm:$0xff]
          %v2303 = vld [vmem:[%s2277 + $0xc8] sm:$0xff]
          %v2304 = vld [vmem:[%s2277 + $0xd0] sm:$0xff]
          %v2305 = vld [vmem:[%s2277 + $0xd8] sm:$0xff]
          %v2306 = vld [vmem:[%s2277 + $0xe0] sm:$0xff]
          %v2307 = vld [vmem:[%s2277 + $0xe8] sm:$0xff]
          %v2308 = vld [vmem:[%s2277 + $0xf0] sm:$0xff]
          %v2309 = vld [vmem:[%s2277 + $0xf8] sm:$0xff]
          %v2310 = vpack.c.bf16 %v2275, %v2273
          %v2311 = vpack.c.bf16 %v2276, %v2274
          %v2344 = vunpack.c.l.b16 %v2278
          %v2345 = vunpack.c.h.b16 %v2278
          %v2346 = vunpack.c.l.b16 %v2279
          %v2347 = vunpack.c.h.b16 %v2279
          %v2348 = vunpack.c.l.b16 %v2280
          %v2349 = vunpack.c.h.b16 %v2280
          %v2350 = vunpack.c.l.b16 %v2281
          %v2351 = vunpack.c.h.b16 %v2281
          %v2352 = vunpack.c.l.b16 %v2282
          %v2353 = vunpack.c.h.b16 %v2282
          %v2354 = vunpack.c.l.b16 %v2283
          %v2355 = vunpack.c.h.b16 %v2283
          %v2356 = vunpack.c.l.b16 %v2284
          %v2357 = vunpack.c.h.b16 %v2284
          %v2358 = vunpack.c.l.b16 %v2285
          %v2359 = vunpack.c.h.b16 %v2285
          %v2360 = vunpack.c.l.b16 %v2286
          %v2361 = vunpack.c.h.b16 %v2286
          %v2362 = vunpack.c.l.b16 %v2287
          %v2363 = vunpack.c.h.b16 %v2287
          %v2364 = vunpack.c.l.b16 %v2288
          %v2365 = vunpack.c.h.b16 %v2288
          %v2366 = vunpack.c.l.b16 %v2289
          %v2367 = vunpack.c.h.b16 %v2289
          %v2368 = vunpack.c.l.b16 %v2290
          %v2369 = vunpack.c.h.b16 %v2290
          %v2370 = vunpack.c.l.b16 %v2291
          %v2371 = vunpack.c.h.b16 %v2291
          %v2372 = vunpack.c.l.b16 %v2292
          %v2373 = vunpack.c.h.b16 %v2292
          %v2374 = vunpack.c.l.b16 %v2293
          %v2375 = vunpack.c.h.b16 %v2293
          %v2376 = vunpack.c.l.b16 %v2294
          %v2377 = vunpack.c.h.b16 %v2294
          %v2378 = vunpack.c.l.b16 %v2295
          %v2379 = vunpack.c.h.b16 %v2295
          %v2380 = vunpack.c.l.b16 %v2296
          %v2381 = vunpack.c.h.b16 %v2296
          %v2382 = vunpack.c.l.b16 %v2297
          %v2383 = vunpack.c.h.b16 %v2297
          %v2384 = vunpack.c.l.b16 %v2298
          %v2385 = vunpack.c.h.b16 %v2298
          %v2386 = vunpack.c.l.b16 %v2299
          %v2387 = vunpack.c.h.b16 %v2299
          %v2388 = vunpack.c.l.b16 %v2300
          %v2389 = vunpack.c.h.b16 %v2300
          %v2390 = vunpack.c.l.b16 %v2301
          %v2391 = vunpack.c.h.b16 %v2301
          %v2392 = vunpack.c.l.b16 %v2302
          %v2393 = vunpack.c.h.b16 %v2302
          %v2394 = vunpack.c.l.b16 %v2303
          %v2395 = vunpack.c.h.b16 %v2303
          %v2396 = vunpack.c.l.b16 %v2304
          %v2397 = vunpack.c.h.b16 %v2304
          %v2398 = vunpack.c.l.b16 %v2305
          %v2399 = vunpack.c.h.b16 %v2305
          %v2400 = vunpack.c.l.b16 %v2306
          %v2401 = vunpack.c.h.b16 %v2306
          %v2402 = vunpack.c.l.b16 %v2307
          %v2403 = vunpack.c.h.b16 %v2307
          %v2404 = vunpack.c.l.b16 %v2308
          %v2405 = vunpack.c.h.b16 %v2308
          %v2406 = vunpack.c.l.b16 %v2309
          %v2407 = vunpack.c.h.b16 %v2309
          %v2408 = vpack.c.b16 %v2346, %v2344
          %v2409 = vpack.c.b16 %v2347, %v2345
          %v2410 = vpack.c.b16 %v2350, %v2348
          %v2411 = vpack.c.b16 %v2351, %v2349
          %v2412 = vpack.c.b16 %v2354, %v2352
          %v2413 = vpack.c.b16 %v2355, %v2353
          %v2414 = vpack.c.b16 %v2358, %v2356
          %v2415 = vpack.c.b16 %v2359, %v2357
          %v2416 = vpack.c.b16 %v2362, %v2360
          %v2417 = vpack.c.b16 %v2363, %v2361
          %v2418 = vpack.c.b16 %v2366, %v2364
          %v2419 = vpack.c.b16 %v2367, %v2365
          %v2420 = vpack.c.b16 %v2370, %v2368
          %v2421 = vpack.c.b16 %v2371, %v2369
          %v2422 = vpack.c.b16 %v2374, %v2372
          %v2423 = vpack.c.b16 %v2375, %v2373
          %v2424 = vpack.c.b16 %v2378, %v2376
          %v2425 = vpack.c.b16 %v2379, %v2377
          %v2426 = vpack.c.b16 %v2382, %v2380
          %v2427 = vpack.c.b16 %v2383, %v2381
          %v2428 = vpack.c.b16 %v2386, %v2384
          %v2429 = vpack.c.b16 %v2387, %v2385
          %v2430 = vpack.c.b16 %v2390, %v2388
          %v2431 = vpack.c.b16 %v2391, %v2389
          %v2432 = vpack.c.b16 %v2394, %v2392
          %v2433 = vpack.c.b16 %v2395, %v2393
          %v2434 = vpack.c.b16 %v2398, %v2396
          %v2435 = vpack.c.b16 %v2399, %v2397
          %v2436 = vpack.c.b16 %v2402, %v2400
          %v2437 = vpack.c.b16 %v2403, %v2401
          %v2438 = vpack.c.b16 %v2406, %v2404
          %v2439 = vpack.c.b16 %v2407, %v2405
          %2472 = vmatprep.subr.bf16.mxu0 %v2409
          %2473 = vmatpush1.bf16.msra.mxu0 %v2408
          %2474 = vmatprep.subr.bf16.mxu0 %v2411
          %2475 = vmatpush1.bf16.msra.mxu0 %v2410
          %2476 = vmatprep.subr.bf16.mxu0 %v2413
          %2477 = vmatpush1.bf16.msra.mxu0 %v2412
          %2478 = vmatprep.subr.bf16.mxu0 %v2415
          %2479 = vmatpush1.bf16.msra.mxu0 %v2414
          %2480 = vmatprep.subr.bf16.mxu0 %v2417
          %2481 = vmatpush1.bf16.msra.mxu0 %v2416
          %2482 = vmatprep.subr.bf16.mxu0 %v2419
          %2483 = vmatpush1.bf16.msra.mxu0 %v2418
          %2484 = vmatprep.subr.bf16.mxu0 %v2421
          %2485 = vmatpush1.bf16.msra.mxu0 %v2420
          %2486 = vmatprep.subr.bf16.mxu0 %v2423
          %2487 = vmatpush1.bf16.msra.mxu0 %v2422
          %2488 = vmatprep.subr.bf16.mxu0 %v2425
          %2489 = vmatpush1.bf16.msra.mxu0 %v2424
          %2490 = vmatprep.subr.bf16.mxu0 %v2427
          %2491 = vmatpush1.bf16.msra.mxu0 %v2426
          %2492 = vmatprep.subr.bf16.mxu0 %v2429
          %2493 = vmatpush1.bf16.msra.mxu0 %v2428
          %2494 = vmatprep.subr.bf16.mxu0 %v2431
          %2495 = vmatpush1.bf16.msra.mxu0 %v2430
          %2496 = vmatprep.subr.bf16.mxu0 %v2433
          %2497 = vmatpush1.bf16.msra.mxu0 %v2432
          %2498 = vmatprep.subr.bf16.mxu0 %v2435
          %2499 = vmatpush1.bf16.msra.mxu0 %v2434
          %2500 = vmatprep.subr.bf16.mxu0 %v2437
          %2501 = vmatpush1.bf16.msra.mxu0 %v2436
          %2502 = vmatprep.subr.bf16.mxu0 %v2439
          %2503 = vmatpush1.bf16.msra.mxu0 %v2438
          %2504 = vmatprep.mubr.bf16.mxu0 %v2311
          %2505 = vmatmul.mubr.bf16.gmra.mrb[0].mxu0 %v2310
          %v2506 = vpop.f32.mrb[0].mxu0
          %v2507 = vadd.f32 0.0, %v2506
          %v2508 = vpop.f32.mrb[0].mxu0
          %v2509 = vadd.f32 0.0, %v2508
          %v2510 = vpop.f32.mrb[0].mxu0
          %v2511 = vadd.f32 0.0, %v2510
          %v2512 = vpop.f32.mrb[0].mxu0
          %v2513 = vadd.f32 0.0, %v2512
          %2514 = vdwg.mxu0
          %v2547 = vunpack.c.l.b16 %v2239
          %v2548 = vunpack.c.h.b16 %v2239
          %v2549 = vunpack.c.l.b16 %v2240
          %v2550 = vunpack.c.h.b16 %v2240
          %v2551 = vunpack.c.l.b16 %v2241
          %v2552 = vunpack.c.h.b16 %v2241
          %v2553 = vunpack.c.l.b16 %v2242
          %v2554 = vunpack.c.h.b16 %v2242
          %v2555 = vunpack.c.l.b16 %v2243
          %v2556 = vunpack.c.h.b16 %v2243
          %v2557 = vunpack.c.l.b16 %v2244
          %v2558 = vunpack.c.h.b16 %v2244
          %v2559 = vunpack.c.l.b16 %v2245
          %v2560 = vunpack.c.h.b16 %v2245
          %v2561 = vunpack.c.l.b16 %v2246
          %v2562 = vunpack.c.h.b16 %v2246
          %v2563 = vunpack.c.l.b16 %v2247
          %v2564 = vunpack.c.h.b16 %v2247
          %v2565 = vunpack.c.l.b16 %v2248
          %v2566 = vunpack.c.h.b16 %v2248
          %v2567 = vunpack.c.l.b16 %v2249
          %v2568 = vunpack.c.h.b16 %v2249
          %v2569 = vunpack.c.l.b16 %v2250
          %v2570 = vunpack.c.h.b16 %v2250
          %v2571 = vunpack.c.l.b16 %v2251
          %v2572 = vunpack.c.h.b16 %v2251
          %v2573 = vunpack.c.l.b16 %v2252
          %v2574 = vunpack.c.h.b16 %v2252
          %v2575 = vunpack.c.l.b16 %v2253
          %v2576 = vunpack.c.h.b16 %v2253
          %v2577 = vunpack.c.l.b16 %v2254
          %v2578 = vunpack.c.h.b16 %v2254
          %v2579 = vunpack.c.l.b16 %v2255
          %v2580 = vunpack.c.h.b16 %v2255
          %v2581 = vunpack.c.l.b16 %v2256
          %v2582 = vunpack.c.h.b16 %v2256
          %v2583 = vunpack.c.l.b16 %v2257
          %v2584 = vunpack.c.h.b16 %v2257
          %v2585 = vunpack.c.l.b16 %v2258
          %v2586 = vunpack.c.h.b16 %v2258
          %v2587 = vunpack.c.l.b16 %v2259
          %v2588 = vunpack.c.h.b16 %v2259
          %v2589 = vunpack.c.l.b16 %v2260
          %v2590 = vunpack.c.h.b16 %v2260
          %v2591 = vunpack.c.l.b16 %v2261
          %v2592 = vunpack.c.h.b16 %v2261
          %v2593 = vunpack.c.l.b16 %v2262
          %v2594 = vunpack.c.h.b16 %v2262
          %v2595 = vunpack.c.l.b16 %v2263
          %v2596 = vunpack.c.h.b16 %v2263
          %v2597 = vunpack.c.l.b16 %v2264
          %v2598 = vunpack.c.h.b16 %v2264
          %v2599 = vunpack.c.l.b16 %v2265
          %v2600 = vunpack.c.h.b16 %v2265
          %v2601 = vunpack.c.l.b16 %v2266
          %v2602 = vunpack.c.h.b16 %v2266
          %v2603 = vunpack.c.l.b16 %v2267
          %v2604 = vunpack.c.h.b16 %v2267
          %v2605 = vunpack.c.l.b16 %v2268
          %v2606 = vunpack.c.h.b16 %v2268
          %v2607 = vunpack.c.l.b16 %v2269
          %v2608 = vunpack.c.h.b16 %v2269
          %v2609 = vunpack.c.l.b16 %v2270
          %v2610 = vunpack.c.h.b16 %v2270
          %v2611 = vpack.c.b16 %v2549, %v2547
          %v2612 = vpack.c.b16 %v2550, %v2548
          %v2613 = vpack.c.b16 %v2553, %v2551
          %v2614 = vpack.c.b16 %v2554, %v2552
          %v2615 = vpack.c.b16 %v2557, %v2555
          %v2616 = vpack.c.b16 %v2558, %v2556
          %v2617 = vpack.c.b16 %v2561, %v2559
          %v2618 = vpack.c.b16 %v2562, %v2560
          %v2619 = vpack.c.b16 %v2565, %v2563
          %v2620 = vpack.c.b16 %v2566, %v2564
          %v2621 = vpack.c.b16 %v2569, %v2567
          %v2622 = vpack.c.b16 %v2570, %v2568
          %v2623 = vpack.c.b16 %v2573, %v2571
          %v2624 = vpack.c.b16 %v2574, %v2572
          %v2625 = vpack.c.b16 %v2577, %v2575
          %v2626 = vpack.c.b16 %v2578, %v2576
          %v2627 = vpack.c.b16 %v2581, %v2579
          %v2628 = vpack.c.b16 %v2582, %v2580
          %v2629 = vpack.c.b16 %v2585, %v2583
          %v2630 = vpack.c.b16 %v2586, %v2584
          %v2631 = vpack.c.b16 %v2589, %v2587
          %v2632 = vpack.c.b16 %v2590, %v2588
          %v2633 = vpack.c.b16 %v2593, %v2591
          %v2634 = vpack.c.b16 %v2594, %v2592
          %v2635 = vpack.c.b16 %v2597, %v2595
          %v2636 = vpack.c.b16 %v2598, %v2596
          %v2637 = vpack.c.b16 %v2601, %v2599
          %v2638 = vpack.c.b16 %v2602, %v2600
          %v2639 = vpack.c.b16 %v2605, %v2603
          %v2640 = vpack.c.b16 %v2606, %v2604
          %v2641 = vpack.c.b16 %v2609, %v2607
          %v2642 = vpack.c.b16 %v2610, %v2608
          %2675 = vmatprep.subr.bf16.mxu0 %v2612
          %2676 = vmatpush1.bf16.msra.mxu0 %v2611
          %2677 = vmatprep.subr.bf16.mxu0 %v2614
          %2678 = vmatpush1.bf16.msra.mxu0 %v2613
          %2679 = vmatprep.subr.bf16.mxu0 %v2616
          %2680 = vmatpush1.bf16.msra.mxu0 %v2615
          %2681 = vmatprep.subr.bf16.mxu0 %v2618
          %2682 = vmatpush1.bf16.msra.mxu0 %v2617
          %2683 = vmatprep.subr.bf16.mxu0 %v2620
          %2684 = vmatpush1.bf16.msra.mxu0 %v2619
          %2685 = vmatprep.subr.bf16.mxu0 %v2622
          %2686 = vmatpush1.bf16.msra.mxu0 %v2621
          %2687 = vmatprep.subr.bf16.mxu0 %v2624
          %2688 = vmatpush1.bf16.msra.mxu0 %v2623
          %2689 = vmatprep.subr.bf16.mxu0 %v2626
          %2690 = vmatpush1.bf16.msra.mxu0 %v2625
          %2691 = vmatprep.subr.bf16.mxu0 %v2628
          %2692 = vmatpush1.bf16.msra.mxu0 %v2627
          %2693 = vmatprep.subr.bf16.mxu0 %v2630
          %2694 = vmatpush1.bf16.msra.mxu0 %v2629
          %2695 = vmatprep.subr.bf16.mxu0 %v2632
          %2696 = vmatpush1.bf16.msra.mxu0 %v2631
          %2697 = vmatprep.subr.bf16.mxu0 %v2634
          %2698 = vmatpush1.bf16.msra.mxu0 %v2633
          %2699 = vmatprep.subr.bf16.mxu0 %v2636
          %2700 = vmatpush1.bf16.msra.mxu0 %v2635
          %2701 = vmatprep.subr.bf16.mxu0 %v2638
          %2702 = vmatpush1.bf16.msra.mxu0 %v2637
          %2703 = vmatprep.subr.bf16.mxu0 %v2640
          %2704 = vmatpush1.bf16.msra.mxu0 %v2639
          %2705 = vmatprep.subr.bf16.mxu0 %v2642
          %2706 = vmatpush1.bf16.msra.mxu0 %v2641
          %2707 = vmatprep.mubr.bf16.mxu0 %v2272
          %2708 = vmatmul.mubr.bf16.gmra.mrb[0].mxu0 %v2271
          %v2709 = vpop.f32.mrb[0].mxu0
          %v2710 = vadd.f32 %v2507, %v2709
          %v2711 = vpop.f32.mrb[0].mxu0
          %v2712 = vadd.f32 %v2509, %v2711
          %v2713 = vpop.f32.mrb[0].mxu0
          %v2714 = vadd.f32 %v2511, %v2713
          %v2715 = vpop.f32.mrb[0].mxu0
          %v2716 = vadd.f32 %v2513, %v2715
          %2717 = vdwg.mxu0
          %v2718 = vlaneseq
          %v2719 = vshrl.u32 %v2718, 7
          %v2720 = vsub.s32 5, %v2719
          %v2721 = vrot.slane %v2231, %v2720
          %v2722 = vlaneseq
          %v2723 = vshrl.u32 %v2722, 7
          %v2724 = vsub.s32 5, %v2723
          %v2725 = vrot.slane %v2232, %v2724
          %v2726 = vadd.f32 %v2710, %v2721
          %v2727 = vadd.f32 %v2712, %v2725
          %v2728 = vadd.f32 %v2714, %v2721
          %v2729 = vadd.f32 %v2716, %v2725
          %v2730 = vmul.f32 %v2726, 0.5
          %v2731 = vmul.f32 %v2727, 0.5
          %v2732 = vmul.f32 %v2728, 0.5
          %v2733 = vmul.f32 %v2729, 0.5
          %v2734 = vmul.f32 %v2726, 0.70710677
          %v2735 = vmul.f32 %v2727, 0.70710677
          %v2736 = vmul.f32 %v2728, 0.70710677
          %v2737 = vmul.f32 %v2729, 0.70710677
          %v2738 = verf.f32.pop %v2734
          %v2739 = verf.f32.pop %v2735
          %v2740 = verf.f32.pop %v2736
          %v2741 = verf.f32.pop %v2737
          %v2742 = vadd.f32 %v2738, 1.0
          %v2743 = vadd.f32 %v2739, 1.0
          %v2744 = vadd.f32 %v2740, 1.0
          %v2745 = vadd.f32 %v2741, 1.0
          %v2746 = vmul.f32 %v2730, %v2742
          %v2747 = vmul.f32 %v2731, %v2743
          %v2748 = vmul.f32 %v2732, %v2744
          %v2749 = vmul.f32 %v2733, %v2745
          %v2750 = vadd.f32 %v2746, %v2747
          %2751 = vadd.xlane.f32.xlu0 %v2750
          %v2752 = vpop.xlane.xlu0 %2751
          %v2753 = vadd.f32 %v2748, %v2749
          %2754 = vadd.xlane.f32.xlu0 %v2753
          %v2755 = vpop.xlane.xlu0 %2754
          %v2756 = vmul.f32 %v2752, %v1841
          %v2757 = vmul.f32 %v2755, %v1841
          %v2758 = vsub.f32 %v2746, %v2756
          %v2759 = vsub.f32 %v2747, %v2756
          %v2760 = vsub.f32 %v2748, %v2757
          %v2761 = vsub.f32 %v2749, %v2757
          %v2762 = vmul.f32 %v2758, %v2758
          %v2763 = vmul.f32 %v2759, %v2759
          %v2764 = vmul.f32 %v2760, %v2760
          %v2765 = vmul.f32 %v2761, %v2761
          %v2766 = vadd.f32 %v2762, %v2763
          %2767 = vadd.xlane.f32.xlu0 %v2766
          %v2768 = vpop.xlane.xlu0 %2767
          %v2769 = vadd.f32 %v2764, %v2765
          %2770 = vadd.xlane.f32.xlu0 %v2769
          %v2771 = vpop.xlane.xlu0 %2770
          %v2772 = vmul.f32 %v2768, %v1841
          %v2773 = vmul.f32 %v2771, %v1841
          %v2774 = vadd.f32 %v2772, 1e-05
          %v2775 = vadd.f32 %v2773, 1e-05
          %v2776 = vrsqrt.pop %v2774
          %v2777 = vrsqrt.pop %v2775
          %v2778 = vmul.f32 %v2758, %v2776
          %v2779 = vmul.f32 %v2759, %v2776
          %v2780 = vmul.f32 %v2760, %v2777
          %v2781 = vmul.f32 %v2761, %v2777
          %v2782 = vld [vmem:[#allocation14] sm:$0xf]
          %v2783 = vld [vmem:[#allocation14 + $0x4] sm:$0xf]
          %v2784 = vld [vmem:[#allocation14 + $0x8] sm:$0xf]
          %v2785 = vld [vmem:[#allocation14 + $0xc] sm:$0xf]
          %v2786 = vld [vmem:[#allocation14 + $0x10] sm:$0xf]
          %v2787 = vld [vmem:[#allocation14 + $0x14] sm:$0xf]
          %v2788 = vld [vmem:[#allocation14 + $0x18] sm:$0xf]
          %v2789 = vld [vmem:[#allocation14 + $0x1c] sm:$0xf]
          %v2790 = vld [vmem:[#allocation14 + $0x20] sm:$0xf]
          %v2791 = vld [vmem:[#allocation14 + $0x24] sm:$0xf]
          %v2792 = vld [vmem:[#allocation14 + $0x28] sm:$0xf]
          %v2793 = vld [vmem:[#allocation14 + $0x2c] sm:$0xf]
          %v2794 = vld [vmem:[#allocation14 + $0x30] sm:$0xf]
          %v2795 = vld [vmem:[#allocation14 + $0x34] sm:$0xf]
          %v2796 = vld [vmem:[#allocation14 + $0x38] sm:$0xf]
          %v2797 = vld [vmem:[#allocation14 + $0x3c] sm:$0xf]
          %v2798 = vld [vmem:[#allocation14 + $0x40] sm:$0xf]
          %v2799 = vld [vmem:[#allocation14 + $0x44] sm:$0xf]
          %v2800 = vld [vmem:[#allocation14 + $0x48] sm:$0xf]
          %v2801 = vld [vmem:[#allocation14 + $0x4c] sm:$0xf]
          %v2802 = vld [vmem:[#allocation14 + $0x50] sm:$0xf]
          %v2803 = vld [vmem:[#allocation14 + $0x54] sm:$0xf]
          %v2804 = vld [vmem:[#allocation14 + $0x58] sm:$0xf]
          %v2805 = vld [vmem:[#allocation14 + $0x5c] sm:$0xf]
          %v2806 = vld [vmem:[#allocation14 + $0x60] sm:$0xf]
          %v2807 = vld [vmem:[#allocation14 + $0x64] sm:$0xf]
          %v2808 = vld [vmem:[#allocation14 + $0x68] sm:$0xf]
          %v2809 = vld [vmem:[#allocation14 + $0x6c] sm:$0xf]
          %v2810 = vld [vmem:[#allocation14 + $0x70] sm:$0xf]
          %v2811 = vld [vmem:[#allocation14 + $0x74] sm:$0xf]
          %v2812 = vld [vmem:[#allocation14 + $0x78] sm:$0xf]
          %v2813 = vld [vmem:[#allocation14 + $0x7c] sm:$0xf]
          %v2814 = vpack.c.bf16 %v2780, %v2778
          %v2815 = vpack.c.bf16 %v2781, %v2779
          %v2816 = vlaneseq
          %v2817 = vshrl.u32 %v2816, 7
          %v2818 = vsub.s32 0, %v2817
          %v2819 = vrot.slane %v2233, %v2818
          %v2852 = vunpack.c.l.b16 %v2782
          %v2853 = vunpack.c.l.b16 %v2783
          %v2854 = vunpack.c.l.b16 %v2784
          %v2855 = vunpack.c.l.b16 %v2785
          %v2856 = vunpack.c.l.b16 %v2786
          %v2857 = vunpack.c.l.b16 %v2787
          %v2858 = vunpack.c.l.b16 %v2788
          %v2859 = vunpack.c.l.b16 %v2789
          %v2860 = vunpack.c.l.b16 %v2790
          %v2861 = vunpack.c.l.b16 %v2791
          %v2862 = vunpack.c.l.b16 %v2792
          %v2863 = vunpack.c.l.b16 %v2793
          %v2864 = vunpack.c.l.b16 %v2794
          %v2865 = vunpack.c.l.b16 %v2795
          %v2866 = vunpack.c.l.b16 %v2796
          %v2867 = vunpack.c.l.b16 %v2797
          %v2868 = vunpack.c.l.b16 %v2798
          %v2869 = vunpack.c.l.b16 %v2799
          %v2870 = vunpack.c.l.b16 %v2800
          %v2871 = vunpack.c.l.b16 %v2801
          %v2872 = vunpack.c.l.b16 %v2802
          %v2873 = vunpack.c.l.b16 %v2803
          %v2874 = vunpack.c.l.b16 %v2804
          %v2875 = vunpack.c.l.b16 %v2805
          %v2876 = vunpack.c.l.b16 %v2806
          %v2877 = vunpack.c.l.b16 %v2807
          %v2878 = vunpack.c.l.b16 %v2808
          %v2879 = vunpack.c.l.b16 %v2809
          %v2880 = vunpack.c.l.b16 %v2810
          %v2881 = vunpack.c.l.b16 %v2811
          %v2882 = vunpack.c.l.b16 %v2812
          %v2883 = vunpack.c.l.b16 %v2813
          %v2884 = vpack.c.b16 %v2853, %v2852
          %v2885 = vpack.c.b16 %v2855, %v2854
          %v2886 = vpack.c.b16 %v2857, %v2856
          %v2887 = vpack.c.b16 %v2859, %v2858
          %v2888 = vpack.c.b16 %v2861, %v2860
          %v2889 = vpack.c.b16 %v2863, %v2862
          %v2890 = vpack.c.b16 %v2865, %v2864
          %v2891 = vpack.c.b16 %v2867, %v2866
          %v2892 = vpack.c.b16 %v2869, %v2868
          %v2893 = vpack.c.b16 %v2871, %v2870
          %v2894 = vpack.c.b16 %v2873, %v2872
          %v2895 = vpack.c.b16 %v2875, %v2874
          %v2896 = vpack.c.b16 %v2877, %v2876
          %v2897 = vpack.c.b16 %v2879, %v2878
          %v2898 = vpack.c.b16 %v2881, %v2880
          %v2899 = vpack.c.b16 %v2883, %v2882
          %2916 = vmatprep.subr.bf16.mxu0 0
          %2917 = vmatpush1.bf16.msra.mxu0 %v2884
          %2918 = vmatprep.subr.bf16.mxu0 0
          %2919 = vmatpush1.bf16.msra.mxu0 %v2885
          %2920 = vmatprep.subr.bf16.mxu0 0
          %2921 = vmatpush1.bf16.msra.mxu0 %v2886
          %2922 = vmatprep.subr.bf16.mxu0 0
          %2923 = vmatpush1.bf16.msra.mxu0 %v2887
          %2924 = vmatprep.subr.bf16.mxu0 0
          %2925 = vmatpush1.bf16.msra.mxu0 %v2888
          %2926 = vmatprep.subr.bf16.mxu0 0
          %2927 = vmatpush1.bf16.msra.mxu0 %v2889
          %2928 = vmatprep.subr.bf16.mxu0 0
          %2929 = vmatpush1.bf16.msra.mxu0 %v2890
          %2930 = vmatprep.subr.bf16.mxu0 0
          %2931 = vmatpush1.bf16.msra.mxu0 %v2891
          %2932 = vmatprep.subr.bf16.mxu0 0
          %2933 = vmatpush1.bf16.msra.mxu0 %v2892
          %2934 = vmatprep.subr.bf16.mxu0 0
          %2935 = vmatpush1.bf16.msra.mxu0 %v2893
          %2936 = vmatprep.subr.bf16.mxu0 0
          %2937 = vmatpush1.bf16.msra.mxu0 %v2894
          %2938 = vmatprep.subr.bf16.mxu0 0
          %2939 = vmatpush1.bf16.msra.mxu0 %v2895
          %2940 = vmatprep.subr.bf16.mxu0 0
          %2941 = vmatpush1.bf16.msra.mxu0 %v2896
          %2942 = vmatprep.subr.bf16.mxu0 0
          %2943 = vmatpush1.bf16.msra.mxu0 %v2897
          %2944 = vmatprep.subr.bf16.mxu0 0
          %2945 = vmatpush1.bf16.msra.mxu0 %v2898
          %2946 = vmatprep.subr.bf16.mxu0 0
          %2947 = vmatpush1.bf16.msra.mxu0 %v2899
          %2948 = vmatprep.mubr.bf16.mxu0 %v2815
          %2949 = vmatmul.mubr.bf16.gmra.mrb[0].mxu0 %v2814
          %v2950 = vpop.f32.mrb[0].mxu0
          %v2951 = vadd.f32 %v2819, %v2950
          %v2952 = vpop.f32.mrb[0].mxu0
          %v2953 = vpop.f32.mrb[0].mxu0
          %v2954 = vadd.f32 %v2819, %v2953
          %v2955 = vpop.f32.mrb[0].mxu0
          %2956 = vdwg.mxu0
          %v2957 = vmul.f32 %v2951, 0.5
          %v2958 = vmul.f32 %v2954, 0.5
          %v2959 = vmul.f32 %v2951, 0.70710677
          %v2960 = vmul.f32 %v2954, 0.70710677
          %v2961 = verf.f32.pop %v2959
          %v2962 = verf.f32.pop %v2960
          %v2963 = vadd.f32 %v2961, 1.0
          %v2964 = vadd.f32 %v2962, 1.0
          %v2965 = vmul.f32 %v2957, %v2963
          %v2966 = vmul.f32 %v2958, %v2964
          %2967 = vadd.xlane.f32.xlu0 %v2965
          %v2968 = vpop.xlane.xlu0 %2967
          %2969 = vadd.xlane.f32.xlu0 %v2966
          %v2970 = vpop.xlane.xlu0 %2969
          %v2971 = vrcp.pop 128.0
          %v2972 = vmul.f32 %v2968, %v2971
          %v2973 = vmul.f32 %v2970, %v2971
          %v2974 = vsub.f32 %v2965, %v2972
          %v2975 = vsub.f32 %v2966, %v2973
          %v2976 = vmul.f32 %v2974, %v2974
          %v2977 = vmul.f32 %v2975, %v2975
          %2978 = vadd.xlane.f32.xlu0 %v2976
          %v2979 = vpop.xlane.xlu0 %2978
          %2980 = vadd.xlane.f32.xlu0 %v2977
          %v2981 = vpop.xlane.xlu0 %2980
          %v2982 = vmul.f32 %v2979, %v2971
          %v2983 = vmul.f32 %v2981, %v2971
          %v2984 = vadd.f32 %v2982, 1e-05
          %v2985 = vadd.f32 %v2983, 1e-05
          %v2986 = vrsqrt.pop %v2984
          %v2987 = vrsqrt.pop %v2985
          %v2988 = vmul.f32 %v2974, %v2986
          %v2989 = vmul.f32 %v2975, %v2987
          %v2990 = vld [vmem:[%s11] sm:$0xf]
          %v2991 = vld [vmem:[%s11 + $0x4] sm:$0xf]
          %v2992 = vld [vmem:[%s11 + $0x8] sm:$0xf]
          %v2993 = vld [vmem:[%s11 + $0xc] sm:$0xf]
          %v2994 = vld [vmem:[%s11 + $0x10] sm:$0xf]
          %v2995 = vld [vmem:[%s11 + $0x14] sm:$0xf]
          %v2996 = vld [vmem:[%s11 + $0x18] sm:$0xf]
          %v2997 = vld [vmem:[%s11 + $0x1c] sm:$0xf]
          %v2998 = vld [vmem:[%s11 + $0x20] sm:$0xf]
          %v2999 = vld [vmem:[%s11 + $0x24] sm:$0xf]
          %v3000 = vld [vmem:[%s11 + $0x28] sm:$0xf]
          %v3001 = vld [vmem:[%s11 + $0x2c] sm:$0xf]
          %v3002 = vld [vmem:[%s11 + $0x30] sm:$0xf]
          %v3003 = vld [vmem:[%s11 + $0x34] sm:$0xf]
          %v3004 = vld [vmem:[%s11 + $0x38] sm:$0xf]
          %v3005 = vld [vmem:[%s11 + $0x3c] sm:$0xf]
          %v3006 = vpack.c.bf16 %v2989, %v2988
          %v3007 = vlaneseq
          %v3008 = vshrl.u32 %v3007, 7
          %v3009 = vsub.s32 1, %v3008
          %v3010 = vrot.slane %v2233, %v3009
          %v3027 = vunpack.c.l.b16 %v2990
          %v3028 = vunpack.c.l.b16 %v2991
          %v3029 = vunpack.c.l.b16 %v2992
          %v3030 = vunpack.c.l.b16 %v2993
          %v3031 = vunpack.c.l.b16 %v2994
          %v3032 = vunpack.c.l.b16 %v2995
          %v3033 = vunpack.c.l.b16 %v2996
          %v3034 = vunpack.c.l.b16 %v2997
          %v3035 = vunpack.c.l.b16 %v2998
          %v3036 = vunpack.c.l.b16 %v2999
          %v3037 = vunpack.c.l.b16 %v3000
          %v3038 = vunpack.c.l.b16 %v3001
          %v3039 = vunpack.c.l.b16 %v3002
          %v3040 = vunpack.c.l.b16 %v3003
          %v3041 = vunpack.c.l.b16 %v3004
          %v3042 = vunpack.c.l.b16 %v3005
          %v3043 = vpack.c.b16 %v3028, %v3027
          %v3044 = vpack.c.b16 %v3030, %v3029
          %v3045 = vpack.c.b16 %v3032, %v3031
          %v3046 = vpack.c.b16 %v3034, %v3033
          %v3047 = vpack.c.b16 %v3036, %v3035
          %v3048 = vpack.c.b16 %v3038, %v3037
          %v3049 = vpack.c.b16 %v3040, %v3039
          %v3050 = vpack.c.b16 %v3042, %v3041
          %3059 = vmatprep.subr.bf16.mxu0 0
          %3060 = vmatpush1.bf16.msra.mxu0 %v3043
          %3061 = vmatprep.subr.bf16.mxu0 0
          %3062 = vmatpush1.bf16.msra.mxu0 %v3044
          %3063 = vmatprep.subr.bf16.mxu0 0
          %3064 = vmatpush1.bf16.msra.mxu0 %v3045
          %3065 = vmatprep.subr.bf16.mxu0 0
          %3066 = vmatpush1.bf16.msra.mxu0 %v3046
          %3067 = vmatprep.subr.bf16.mxu0 0
          %3068 = vmatpush1.bf16.msra.mxu0 %v3047
          %3069 = vmatprep.subr.bf16.mxu0 0
          %3070 = vmatpush1.bf16.msra.mxu0 %v3048
          %3071 = vmatprep.subr.bf16.mxu0 0
          %3072 = vmatpush1.bf16.msra.mxu0 %v3049
          %3073 = vmatprep.subr.bf16.mxu0 0
          %3074 = vmatpush1.bf16.msra.mxu0 %v3050
          %3075 = vmatprep.subr.bf16.mxu0 0
          %3076 = vmatpush1.bf16.msra.mxu0 0
          %3077 = vmatprep.subr.bf16.mxu0 0
          %3078 = vmatpush1.bf16.msra.mxu0 0
          %3079 = vmatprep.subr.bf16.mxu0 0
          %3080 = vmatpush1.bf16.msra.mxu0 0
          %3081 = vmatprep.subr.bf16.mxu0 0
          %3082 = vmatpush1.bf16.msra.mxu0 0
          %3083 = vmatprep.subr.bf16.mxu0 0
          %3084 = vmatpush1.bf16.msra.mxu0 0
          %3085 = vmatprep.subr.bf16.mxu0 0
          %3086 = vmatpush1.bf16.msra.mxu0 0
          %3087 = vmatprep.subr.bf16.mxu0 0
          %3088 = vmatpush1.bf16.msra.mxu0 0
          %3089 = vmatprep.subr.bf16.mxu0 0
          %3090 = vmatpush1.bf16.msra.mxu0 0
          %3091 = vmatprep.mubr.bf16.mxu0 0
          %3092 = vmatmul.mubr.bf16.gmra.mrb[0].mxu0 %v3006
          %v3093 = vpop.f32.mrb[0].mxu0
          %v3094 = vadd.f32 %v3010, %v3093
          %v3095 = vpop.f32.mrb[0].mxu0
          %v3096 = vpop.f32.mrb[0].mxu0
          %v3097 = vadd.f32 %v3010, %v3096
          %v3098 = vpop.f32.mrb[0].mxu0
          %3099 = vdwg.mxu0
          %3100 = vst [vmem:[%s647] sm:$0xff] %v3094
          %3101 = vst [vmem:[%s647 + $0x8] sm:$0xff] %v3097
        $region108: #{denoise_forward.1} parent=71 // pred_fallthru
          _
        %s3102 = smul.u32 2, %s36
        %p3103 = scmp.lt.s32.totalorder %s3102, 1
        %s3104 = scalar_select %p3103, %s3102, 1
        %s3105 = smul.addr %s3104, 8
        %s3106 = scalar_lea.vmem %s13, %s3105
        // Predicated region
        $region109: #{denoise_forward.1} parent=71 // pred_check
          %p3107 = pneg %p360
        $region110: #{denoise_forward.1} parent=71 // pred_check_branch
          %3109 = sbr.rel (%p3107) target = $region112
        $region111: #{denoise_forward.1} parent=71 // pred_region
          %s3110 = smul.u32 2, %s36
        $region112: #{denoise_forward.1} parent=71 // pred_fallthru
          _
        // Predicated region
        $region113: #{denoise_forward.1} parent=71 // pred_check
          %p3111 = pneg %p360
        $region114: #{denoise_forward.1} parent=71 // pred_check_branch
          %3113 = sbr.rel (%p3111) target = $region116
        $region115: #{denoise_forward.1} parent=71 // pred_region
          %s3114 = smul.u32 2, %s36
          %p3115 = scmp.lt.s32.totalorder %s3114, 1
          %s3116 = scalar_select %p3115, %s3114, 1
          %s3117 = smul.addr %s3116, 8
          %s3118 = scalar_lea.vmem %s13, %s3117
        $region116: #{denoise_forward.1} parent=71 // pred_fallthru
          _
      $region72: #{denoise_forward.1} parent=5 // pred_fallthru
        _
      %p3119 = scmp.le.s32.totalorder 2, %s27
      // Predicated region
      $region117: #{denoise_forward.1} parent=5 // pred_check
        %p3120 = pneg %p3119
      $region118: #{denoise_forward.1} parent=5 // pred_check_branch
        %3122 = sbr.rel (%p3120) target = $region120
      $region119: #{denoise_forward.1} parent=5 // pred_region
        %s3123 = ssub.s32 %s27, 2
      $region120: #{denoise_forward.1} parent=5 // pred_fallthru
        _
    $region6: #{denoise_forward.1} parent=1 // loop_footer
      %s31 = sadd.s32 1, %s27
    $region7: #{denoise_forward.1} parent=1 // loop_footer_branch
      %26 = sbr.rel target = $region3
    $region8: #{denoise_forward.1} parent=1 // loop_exit
      _
    %3124 = vsyncpa [#allocation5], 1
    %s3125 = scalar_lea.sflag [#allocation5], 1
    %3126 = vsyncpa %s3125, 1
    %3127 = vsyncpa [#allocation7], 1
    %3128 = vsyncpa [#allocation10], 1
    %s3129 = scalar_lea.sflag [#allocation10], 1
    %3130 = vsyncpa %s3129, 1
    %3131 = vsyncpa [#allocation13], 1
    %s3132 = scalar_lea.sflag [#allocation13], 1
    %3133 = vsyncpa %s3132, 1

</llo_original>
